<compile_context>
chip_gen: v5e
topology: v5e:2x2
jax: 0.10.0
libtpu: 0.0.40
codegen_flags: <defaults>
</compile_context>

<pallas_src>
import jax
import jax.numpy as jnp
from jax.experimental import pallas as pl
from jax.experimental.pallas import tpu as pltpu


_NEG_BIG = -1e9  # bias value masking padded item columns out of log_softmax


def _round_up(n, m):
    return ((n + m - 1) // m) * m


def multivae_kernel(x_ref, w1_ref, b1_ref,
                    w2mu_ref, w2lv_ref, b2mu_ref, b2lv_ref,
                    w3_ref, b3_ref, w4_ref, b4_ref,
                    logits_ref, mu_ref, logvar_ref):
    """One batch tile of the MultiVAE forward (eval mode).

    x and weights arrive in bf16 (MXU inputs); accumulation and all
    elementwise math are f32. Feature dims are pre-padded to multiples of 128
    (lane-dense loads / stores).
    """
    wdt = w1_ref.dtype
    x = x_ref[...]                                            # (BT, Mp) bf16

    # ---- encoder: Linear(M,H) -> Tanh -> Linear(H, 2D) (w2 pre-split) ----
    h1 = jnp.dot(x, w1_ref[...],
                 preferred_element_type=jnp.float32) + b1_ref[...]
    h1 = jnp.tanh(h1)                                         # (BT, Hp) f32
    h1c = h1.astype(wdt)
    mu = jnp.dot(h1c, w2mu_ref[...],
                 preferred_element_type=jnp.float32) + b2mu_ref[...]
    logvar = jnp.dot(h1c, w2lv_ref[...],
                     preferred_element_type=jnp.float32) + b2lv_ref[...]
    mu_ref[...] = mu                                          # lane-dense stores
    logvar_ref[...] = logvar

    # ---- sample (eval mode): z = mu ----
    z = mu.astype(wdt)

    # ---- decoder: Linear(D,H) -> Tanh -> Linear(H,M) ----
    h3 = jnp.tanh(jnp.dot(z, w3_ref[...],
                          preferred_element_type=jnp.float32) + b3_ref[...])
    logits = jnp.dot(h3.astype(wdt), w4_ref[...],
                     preferred_element_type=jnp.float32) + b4_ref[...]

    # ---- stable log_softmax along items (padded cols carry -1e9 -> exp==0) ----
    m = jnp.max(logits, axis=1, keepdims=True)
    shifted = logits - m
    lse = jnp.log(jnp.sum(jnp.exp(shifted), axis=1, keepdims=True))
    logits_ref[...] = shifted - lse


def multivae_forward(x, params, *, batch_tile=128, weights_dtype=jnp.bfloat16):
    """Fused MultiVAE eval forward. Returns (logits, mu, logvar, None, None, None)."""
    w1, b1, w2, b2, w3, b3, w4, b4 = params   # (in,out) weights, (1,out) biases, f32
    B, M = x.shape
    H = w1.shape[1]
    D = w2.shape[1] // 2

    # Pad batch to the grid tile and every feature axis to a multiple of 128
    # so matmul tiles and output stores are lane-dense.
    Bp = _round_up(max(B, 1), batch_tile)
    Mp = _round_up(M, 128)
    Hp = _round_up(H, 128)
    Dp = _round_up(D, 128)

    def pad2(a, rows, cols, fill=0.0):
        return jnp.pad(a, ((0, rows - a.shape[0]), (0, cols - a.shape[1])),
                       constant_values=fill)

    # x in bf16 (matches the reference numerics; halves the input tile DMA).
    x_p = pad2(x, Bp, Mp).astype(weights_dtype)
    w1_p = pad2(w1, Mp, Hp).astype(weights_dtype)
    b1_p = pad2(b1, 1, Hp)
    w2mu_p = pad2(w2[:, :D], Hp, Dp).astype(weights_dtype)
    w2lv_p = pad2(w2[:, D:], Hp, Dp).astype(weights_dtype)
    b2mu_p = pad2(b2[:, :D], 1, Dp)
    b2lv_p = pad2(b2[:, D:], 1, Dp)
    w3_p = pad2(w3, Dp, Hp).astype(weights_dtype)
    b3_p = pad2(b3, 1, Hp)
    w4_p = pad2(w4, Hp, Mp).astype(weights_dtype)
    b4_p = pad2(b4, 1, Mp, fill=_NEG_BIG)   # padded items excluded from softmax

    grid = (Bp // batch_tile,)

    def batch_spec(cols):
        return pl.BlockSpec((batch_tile, cols), lambda i: (i, 0))

    def whole(a):
        # Full array as one block; constant index -> stays resident across the
        # batch grid (no re-DMA of weights per tile).
        return pl.BlockSpec(a.shape, lambda i: (0, 0))

    weight_args = (w1_p, b1_p, w2mu_p, w2lv_p, b2mu_p, b2lv_p,
                   w3_p, b3_p, w4_p, b4_p)

    # Advisory cost estimate for XLA's scheduler.
    flops = 2 * Bp * (Mp * Hp + 2 * Hp * Dp + Dp * Hp + Hp * Mp)
    transcendentals = Bp * (2 * Hp + Mp)
    out_bytes = 4 * Bp * (Mp + 2 * Dp)
    bytes_accessed = x_p.nbytes + sum(a.nbytes for a in weight_args) + out_bytes
    cost = pl.CostEstimate(flops=flops, transcendentals=transcendentals,
                           bytes_accessed=bytes_accessed)

    # Explicit scoped-VMEM budget (defaults are 16/32 MiB, well below physical).
    weight_bytes = sum(a.nbytes for a in weight_args)
    tile_io_bytes = (x_p.dtype.itemsize * batch_tile * Mp          # x tile (bf16)
                     + 4 * batch_tile * (Mp + 2 * Dp))             # f32 output tiles
    vmem_limit = int(min(64 * 1024 * 1024,
                         max(16 * 1024 * 1024,
                             2 * (weight_bytes + 2 * tile_io_bytes))))

    logits_p, mu_p, logvar_p = pl.pallas_call(
        multivae_kernel,
        out_shape=(
            jax.ShapeDtypeStruct((Bp, Mp), jnp.float32),
            jax.ShapeDtypeStruct((Bp, Dp), jnp.float32),
            jax.ShapeDtypeStruct((Bp, Dp), jnp.float32),
        ),
        grid=grid,
        in_specs=[
            batch_spec(Mp),                 # x
            whole(w1_p), whole(b1_p),
            whole(w2mu_p), whole(w2lv_p), whole(b2mu_p), whole(b2lv_p),
            whole(w3_p), whole(b3_p),
            whole(w4_p), whole(b4_p),
        ],
        out_specs=(
            batch_spec(Mp),                 # logits
            batch_spec(Dp),                 # mu
            batch_spec(Dp),                 # logvar
        ),
        compiler_params=pltpu.CompilerParams(
            dimension_semantics=("parallel",),   # batch tiles -> both TCs on v7x
            vmem_limit_bytes=vmem_limit,
        ),
        cost_estimate=cost,
    )(x_p, *weight_args)

    logits = logits_p[:B, :M]
    mu = mu_p[:B, :D]
    logvar = logvar_p[:B, :D]
    return logits, mu, logvar, None, None, None


def init_params(key, M, D):
    """Deterministic nn.Linear-style init (uniform +-1/sqrt(fan_in)).

    Weights are stored pre-transposed as (in_features, out_features);
    biases as (1, out_features). All f32; the wrapper casts weights to bf16.
    """
    H = 3 * D
    shapes = [  # (in, out) for each Linear
        (M, H),        # encoder[0]
        (H, 2 * D),    # encoder[2]
        (D, H),        # decoder[0]
        (H, M),        # decoder[2]
    ]
    params = []
    for (fan_in, fan_out) in shapes:
        key, kw, kb = jax.random.split(key, 3)
        bound = 1.0 / jnp.sqrt(fan_in)
        w = jax.random.uniform(kw, (fan_in, fan_out), jnp.float32, -bound, bound)
        b = jax.random.uniform(kb, (1, fan_out), jnp.float32, -bound, bound)
        params.extend([w, b])
    return tuple(params)


def reference_forward(x, params, weights_dtype=jnp.bfloat16):
    """Pure-JAX reference with the same bf16-weight / f32-accumulate numerics."""
    w1, b1, w2, b2, w3, b3, w4, b4 = params
    D = w2.shape[1] // 2
    c = lambda a: a.astype(weights_dtype)
    f32 = jnp.float32
    h1 = jnp.tanh(jnp.dot(c(x), c(w1), preferred_element_type=f32) + b1)
    mu = jnp.dot(c(h1), c(w2[:, :D]), preferred_element_type=f32) + b2[:, :D]
    logvar = jnp.dot(c(h1), c(w2[:, D:]), preferred_element_type=f32) + b2[:, D:]
    z = mu
    h3 = jnp.tanh(jnp.dot(c(z), c(w3), preferred_element_type=f32) + b3)
    logits = jnp.dot(c(h3), c(w4), preferred_element_type=f32) + b4
    return jax.nn.log_softmax(logits, axis=1), mu, logvar


if __name__ == "__main__":
    # Small but non-trivial shapes: B=200 (pads to 2 batch tiles of 128),
    # M=500 items (pads to 512), latent D=48 (pads to 128), hidden H=144.
    B, M, D = 200, 500, 48
    key = jax.random.PRNGKey(0)
    key, kx = jax.random.split(key)
    # MultiVAE inputs are non-negative interaction indicators (exact in bf16).
    x = (jax.random.uniform(kx, (B, M), jnp.float32) > 0.7).astype(jnp.float32)
    A = None  # unused by the forward path (returned Nones in PyTorch)

    params = init_params(key, M, D)

    logits, mu, logvar, _, _, _ = multivae_forward(x, params)
    jax.block_until_ready((logits, mu, logvar))

    # sanity check vs pure-JAX reference (same mixed-precision recipe)
    ref_logits, ref_mu, ref_logvar = reference_forward(x, params)
    assert logits.shape == (B, M) and mu.shape == (B, D) and logvar.shape == (B, D)
    assert jnp.allclose(mu, ref_mu, atol=1e-3, rtol=1e-3)
    assert jnp.allclose(logvar, ref_logvar, atol=1e-3, rtol=1e-3)
    assert jnp.allclose(logits, ref_logits, atol=1e-3, rtol=1e-3)

    print("KERNEL_OK")
</pallas_src>

<mosaic_0001>
module attributes {stable_mosaic.version = 11 : i64} {
  func.func @multivae_kernel(%arg0: i32, %arg1: memref<128x512xbf16, #tpu.memory_space<vmem>>, %arg2: memref<512x256xbf16, #tpu.memory_space<vmem>>, %arg3: memref<1x256xf32, #tpu.memory_space<vmem>>, %arg4: memref<256x128xbf16, #tpu.memory_space<vmem>>, %arg5: memref<256x128xbf16, #tpu.memory_space<vmem>>, %arg6: memref<1x128xf32, #tpu.memory_space<vmem>>, %arg7: memref<1x128xf32, #tpu.memory_space<vmem>>, %arg8: memref<128x256xbf16, #tpu.memory_space<vmem>>, %arg9: memref<1x256xf32, #tpu.memory_space<vmem>>, %arg10: memref<256x512xbf16, #tpu.memory_space<vmem>>, %arg11: memref<1x512xf32, #tpu.memory_space<vmem>>, %arg12: memref<128x512xf32, #tpu.memory_space<vmem>>, %arg13: memref<128x128xf32, #tpu.memory_space<vmem>>, %arg14: memref<128x128xf32, #tpu.memory_space<vmem>>) attributes {dimension_semantics = [#tpu.dimension_semantics<parallel>], iteration_bounds = array<i64: 2>, scalar_prefetch = 0 : i64, scratch_operands = 0 : i64, tpu.core_type = #tpu.core_type<tc>, window_params = [{transform_indices = @transform_0, window_bounds = array<i64: 128, 512>}, {pipeline_mode = #tpu.pipeline_mode<synchronous>, transform_indices = @transform_1, window_bounds = array<i64: 512, 256>}, {pipeline_mode = #tpu.pipeline_mode<synchronous>, transform_indices = @transform_2, window_bounds = array<i64: 1, 256>}, {pipeline_mode = #tpu.pipeline_mode<synchronous>, transform_indices = @transform_3, window_bounds = array<i64: 256, 128>}, {pipeline_mode = #tpu.pipeline_mode<synchronous>, transform_indices = @transform_4, window_bounds = array<i64: 256, 128>}, {pipeline_mode = #tpu.pipeline_mode<synchronous>, transform_indices = @transform_5, window_bounds = array<i64: 1, 128>}, {pipeline_mode = #tpu.pipeline_mode<synchronous>, transform_indices = @transform_6, window_bounds = array<i64: 1, 128>}, {pipeline_mode = #tpu.pipeline_mode<synchronous>, transform_indices = @transform_7, window_bounds = array<i64: 128, 256>}, {pipeline_mode = #tpu.pipeline_mode<synchronous>, transform_indices = @transform_8, window_bounds = array<i64: 1, 256>}, {pipeline_mode = #tpu.pipeline_mode<synchronous>, transform_indices = @transform_9, window_bounds = array<i64: 256, 512>}, {pipeline_mode = #tpu.pipeline_mode<synchronous>, transform_indices = @transform_10, window_bounds = array<i64: 1, 512>}, {transform_indices = @transform_11, window_bounds = array<i64: 128, 512>}, {transform_indices = @transform_12, window_bounds = array<i64: 128, 128>}, {transform_indices = @transform_13, window_bounds = array<i64: 128, 128>}]} {
    %c0 = arith.constant 0 : index
    %c0_0 = arith.constant 0 : index
    %0 = vector.load %arg1[%c0, %c0_0] : memref<128x512xbf16, #tpu.memory_space<vmem>>, vector<128x512xbf16>
    %c0_1 = arith.constant 0 : index
    %c0_2 = arith.constant 0 : index
    %1 = vector.load %arg2[%c0_1, %c0_2] : memref<512x256xbf16, #tpu.memory_space<vmem>>, vector<512x256xbf16>
    %cst = arith.constant dense<0.000000e+00> : vector<128x256xf32>
    %2 = tpu.matmul %0, %1, %cst {dimension_numbers = #tpu.dot_dimension_numbers<[1], [0], [0], [1], [0, 0, 1, 1], [], []>} : vector<128x512xbf16>, vector<512x256xbf16>, vector<128x256xf32> -> vector<128x256xf32>
    %c0_3 = arith.constant 0 : index
    %c0_4 = arith.constant 0 : index
    %3 = vector.load %arg3[%c0_3, %c0_4] : memref<1x256xf32, #tpu.memory_space<vmem>>, vector<1x256xf32>
    %4 = vector.broadcast %3 : vector<1x256xf32> to vector<128x256xf32>
    %5 = arith.addf %2, %4 : vector<128x256xf32>
    %6 = math.tanh %5 : vector<128x256xf32>
    %7 = arith.truncf %6 : vector<128x256xf32> to vector<128x256xbf16>
    %c0_5 = arith.constant 0 : index
    %c0_6 = arith.constant 0 : index
    %8 = vector.load %arg4[%c0_5, %c0_6] : memref<256x128xbf16, #tpu.memory_space<vmem>>, vector<256x128xbf16>
    %cst_7 = arith.constant dense<0.000000e+00> : vector<128x128xf32>
    %9 = tpu.matmul %7, %8, %cst_7 {dimension_numbers = #tpu.dot_dimension_numbers<[1], [0], [0], [1], [0, 0, 1, 1], [], []>} : vector<128x256xbf16>, vector<256x128xbf16>, vector<128x128xf32> -> vector<128x128xf32>
    %c0_8 = arith.constant 0 : index
    %c0_9 = arith.constant 0 : index
    %10 = vector.load %arg6[%c0_8, %c0_9] : memref<1x128xf32, #tpu.memory_space<vmem>>, vector<1x128xf32>
    %11 = vector.broadcast %10 : vector<1x128xf32> to vector<128x128xf32>
    %12 = arith.addf %9, %11 : vector<128x128xf32>
    %c0_10 = arith.constant 0 : index
    %c0_11 = arith.constant 0 : index
    %13 = vector.load %arg5[%c0_10, %c0_11] : memref<256x128xbf16, #tpu.memory_space<vmem>>, vector<256x128xbf16>
    %cst_12 = arith.constant dense<0.000000e+00> : vector<128x128xf32>
    %14 = tpu.matmul %7, %13, %cst_12 {dimension_numbers = #tpu.dot_dimension_numbers<[1], [0], [0], [1], [0, 0, 1, 1], [], []>} : vector<128x256xbf16>, vector<256x128xbf16>, vector<128x128xf32> -> vector<128x128xf32>
    %c0_13 = arith.constant 0 : index
    %c0_14 = arith.constant 0 : index
    %15 = vector.load %arg7[%c0_13, %c0_14] : memref<1x128xf32, #tpu.memory_space<vmem>>, vector<1x128xf32>
    %16 = vector.broadcast %15 : vector<1x128xf32> to vector<128x128xf32>
    %17 = arith.addf %14, %16 : vector<128x128xf32>
    %c0_15 = arith.constant 0 : index
    %c0_16 = arith.constant 0 : index
    %18 = vector.load %arg13[%c0_15, %c0_16] : memref<128x128xf32, #tpu.memory_space<vmem>>, vector<128x128xf32>
    tpu.vector_store %arg13[%c0_15, %c0_16], %12 {strides = array<i32>} : memref<128x128xf32, #tpu.memory_space<vmem>>, vector<128x128xf32>,
    %c0_17 = arith.constant 0 : index
    %c0_18 = arith.constant 0 : index
    %19 = vector.load %arg14[%c0_17, %c0_18] : memref<128x128xf32, #tpu.memory_space<vmem>>, vector<128x128xf32>
    tpu.vector_store %arg14[%c0_17, %c0_18], %17 {strides = array<i32>} : memref<128x128xf32, #tpu.memory_space<vmem>>, vector<128x128xf32>,
    %20 = arith.truncf %12 : vector<128x128xf32> to vector<128x128xbf16>
    %c0_19 = arith.constant 0 : index
    %c0_20 = arith.constant 0 : index
    %21 = vector.load %arg8[%c0_19, %c0_20] : memref<128x256xbf16, #tpu.memory_space<vmem>>, vector<128x256xbf16>
    %cst_21 = arith.constant dense<0.000000e+00> : vector<128x256xf32>
    %22 = tpu.matmul %20, %21, %cst_21 {dimension_numbers = #tpu.dot_dimension_numbers<[1], [0], [0], [1], [0, 0, 1, 1], [], []>} : vector<128x128xbf16>, vector<128x256xbf16>, vector<128x256xf32> -> vector<128x256xf32>
    %c0_22 = arith.constant 0 : index
    %c0_23 = arith.constant 0 : index
    %23 = vector.load %arg9[%c0_22, %c0_23] : memref<1x256xf32, #tpu.memory_space<vmem>>, vector<1x256xf32>
    %24 = vector.broadcast %23 : vector<1x256xf32> to vector<128x256xf32>
    %25 = arith.addf %22, %24 : vector<128x256xf32>
    %26 = math.tanh %25 : vector<128x256xf32>
    %27 = arith.truncf %26 : vector<128x256xf32> to vector<128x256xbf16>
    %c0_24 = arith.constant 0 : index
    %c0_25 = arith.constant 0 : index
    %28 = vector.load %arg10[%c0_24, %c0_25] : memref<256x512xbf16, #tpu.memory_space<vmem>>, vector<256x512xbf16>
    %cst_26 = arith.constant dense<0.000000e+00> : vector<128x512xf32>
    %29 = tpu.matmul %27, %28, %cst_26 {dimension_numbers = #tpu.dot_dimension_numbers<[1], [0], [0], [1], [0, 0, 1, 1], [], []>} : vector<128x256xbf16>, vector<256x512xbf16>, vector<128x512xf32> -> vector<128x512xf32>
    %c0_27 = arith.constant 0 : index
    %c0_28 = arith.constant 0 : index
    %30 = vector.load %arg11[%c0_27, %c0_28] : memref<1x512xf32, #tpu.memory_space<vmem>>, vector<1x512xf32>
    %31 = vector.broadcast %30 : vector<1x512xf32> to vector<128x512xf32>
    %32 = arith.addf %29, %31 : vector<128x512xf32>
    %cst_29 = arith.constant dense<0xFF800000> : vector<128xf32>
    %33 = vector.multi_reduction <maximumf>, %32, %cst_29 [1] : vector<128x512xf32> to vector<128xf32>
    %34 = vector.shape_cast %33 : vector<128xf32> to vector<128x1xf32>
    %35 = vector.broadcast %34 : vector<128x1xf32> to vector<128x512xf32>
    %36 = arith.subf %32, %35 : vector<128x512xf32>
    %37 = math.exp %36 : vector<128x512xf32>
    %cst_30 = arith.constant dense<0.000000e+00> : vector<128xf32>
    %38 = vector.multi_reduction <add>, %37, %cst_30 [1] : vector<128x512xf32> to vector<128xf32>
    %39 = vector.shape_cast %38 : vector<128xf32> to vector<128x1xf32>
    %40 = math.log %39 : vector<128x1xf32>
    %41 = vector.broadcast %40 : vector<128x1xf32> to vector<128x512xf32>
    %42 = arith.subf %36, %41 : vector<128x512xf32>
    %c0_31 = arith.constant 0 : index
    %c0_32 = arith.constant 0 : index
    %43 = vector.load %arg12[%c0_31, %c0_32] : memref<128x512xf32, #tpu.memory_space<vmem>>, vector<128x512xf32>
    tpu.vector_store %arg12[%c0_31, %c0_32], %42 {strides = array<i32>} : memref<128x512xf32, #tpu.memory_space<vmem>>, vector<128x512xf32>,
    return
  }
  func.func @transform_0(%arg0: i32) -> (i32, i32) {
    %c0_i32 = arith.constant 0 : i32
    %c0_i32_0 = arith.constant 0 : i32
    return %arg0, %c0_i32 : i32, i32
  }
  func.func @transform_1(%arg0: i32) -> (i32, i32) {
    %c0_i32 = arith.constant 0 : i32
    %c0_i32_0 = arith.constant 0 : i32
    %c0_i32_1 = arith.constant 0 : i32
    return %c0_i32, %c0_i32_0 : i32, i32
  }
  func.func @transform_2(%arg0: i32) -> (i32, i32) {
    %c0_i32 = arith.constant 0 : i32
    %c0_i32_0 = arith.constant 0 : i32
    %c0_i32_1 = arith.constant 0 : i32
    return %c0_i32, %c0_i32_0 : i32, i32
  }
  func.func @transform_3(%arg0: i32) -> (i32, i32) {
    %c0_i32 = arith.constant 0 : i32
    %c0_i32_0 = arith.constant 0 : i32
    %c0_i32_1 = arith.constant 0 : i32
    return %c0_i32, %c0_i32_0 : i32, i32
  }
  func.func @transform_4(%arg0: i32) -> (i32, i32) {
    %c0_i32 = arith.constant 0 : i32
    %c0_i32_0 = arith.constant 0 : i32
    %c0_i32_1 = arith.constant 0 : i32
    return %c0_i32, %c0_i32_0 : i32, i32
  }
  func.func @transform_5(%arg0: i32) -> (i32, i32) {
    %c0_i32 = arith.constant 0 : i32
    %c0_i32_0 = arith.constant 0 : i32
    %c0_i32_1 = arith.constant 0 : i32
    return %c0_i32, %c0_i32_0 : i32, i32
  }
  func.func @transform_6(%arg0: i32) -> (i32, i32) {
    %c0_i32 = arith.constant 0 : i32
    %c0_i32_0 = arith.constant 0 : i32
    %c0_i32_1 = arith.constant 0 : i32
    return %c0_i32, %c0_i32_0 : i32, i32
  }
  func.func @transform_7(%arg0: i32) -> (i32, i32) {
    %c0_i32 = arith.constant 0 : i32
    %c0_i32_0 = arith.constant 0 : i32
    %c0_i32_1 = arith.constant 0 : i32
    return %c0_i32, %c0_i32_0 : i32, i32
  }
  func.func @transform_8(%arg0: i32) -> (i32, i32) {
    %c0_i32 = arith.constant 0 : i32
    %c0_i32_0 = arith.constant 0 : i32
    %c0_i32_1 = arith.constant 0 : i32
    return %c0_i32, %c0_i32_0 : i32, i32
  }
  func.func @transform_9(%arg0: i32) -> (i32, i32) {
    %c0_i32 = arith.constant 0 : i32
    %c0_i32_0 = arith.constant 0 : i32
    %c0_i32_1 = arith.constant 0 : i32
    return %c0_i32, %c0_i32_0 : i32, i32
  }
  func.func @transform_10(%arg0: i32) -> (i32, i32) {
    %c0_i32 = arith.constant 0 : i32
    %c0_i32_0 = arith.constant 0 : i32
    %c0_i32_1 = arith.constant 0 : i32
    return %c0_i32, %c0_i32_0 : i32, i32
  }
  func.func @transform_11(%arg0: i32) -> (i32, i32) {
    %c0_i32 = arith.constant 0 : i32
    %c0_i32_0 = arith.constant 0 : i32
    return %arg0, %c0_i32 : i32, i32
  }
  func.func @transform_12(%arg0: i32) -> (i32, i32) {
    %c0_i32 = arith.constant 0 : i32
    %c0_i32_0 = arith.constant 0 : i32
    return %arg0, %c0_i32 : i32, i32
  }
  func.func @transform_13(%arg0: i32) -> (i32, i32) {
    %c0_i32 = arith.constant 0 : i32
    %c0_i32_0 = arith.constant 0 : i32
    return %arg0, %c0_i32 : i32, i32
  }
}

</mosaic_0001>

<llo_original>
// kernel: tpu_custom_call.1
$region0: #{tpu_custom_call.1}
  #allocation0 [shape = 'u32[]', space=smem, size = 0x4, offset = 0x4, fixed_abs, tag = 'smem constant byte address 0x4 - core index']
  #allocation1 [shape = 'u32[72,128]{1,0:T(1,128)}', space=vmem, size = 0x9000, scoped, tag = 'internal scratch']
  %s0 = inlined_call_operand.hbm [shape: bf16[256,512], index: 0, kind: input, shape index: {}]
  %s1 = inlined_call_operand.hbm [shape: bf16[512,256], index: 1, kind: input, shape index: {}]
  %s2 = inlined_call_operand.hbm [shape: f32[1,256], index: 2, kind: input, shape index: {}]
  %s3 = inlined_call_operand.hbm [shape: bf16[256,128], index: 3, kind: input, shape index: {}]
  %s4 = inlined_call_operand.hbm [shape: bf16[256,128], index: 4, kind: input, shape index: {}]
  %s5 = inlined_call_operand.vmem [shape: f32[1,128], index: 5, kind: input, shape index: {}]
  %s6 = inlined_call_operand.hbm [shape: f32[1,128], index: 6, kind: input, shape index: {}]
  %s7 = inlined_call_operand.hbm [shape: bf16[128,256], index: 7, kind: input, shape index: {}]
  %s8 = inlined_call_operand.vmem [shape: f32[1,256], index: 8, kind: input, shape index: {}]
  %s9 = inlined_call_operand.hbm [shape: bf16[256,512], index: 9, kind: input, shape index: {}]
  %s10 = inlined_call_operand.vmem [shape: f32[1,512], index: 10, kind: input, shape index: {}]
  %s11 = inlined_call_operand.hbm [shape: f32[256,512], index: 11, kind: output, shape index: {0}]
  %s12 = inlined_call_operand.hbm [shape: f32[256,128], index: 12, kind: output, shape index: {1}]
  %s13 = inlined_call_operand.hbm [shape: f32[256,128], index: 13, kind: output, shape index: {2}]
  %14 = xla_tuple %s11, %s12, %s13
  %s15 = sld [smem:[#allocation0]]
  $region125: #{tpu_custom_call.1} parent=0
    _
  %s17 = ssub.s32 1, %s15
  %s18 = scalar_select 0, %s17, %s15
  $region1: #{tpu_custom_call.1} parent=0
    #allocation2 [shape = 'u8[262144]{0}', space=vmem, size = 0x40000, scoped, tag = 'input window, operand 0']
    #allocation3 [shape = 's32[2]{0}', space=sflag, size = 0x8, scoped, tag = 'scoped memory for tpu_custom_call.1']
    #allocation4 [shape = 's32[2]{0}', space=sflag, size = 0x8, scoped, tag = 'scoped memory for tpu_custom_call.1']
    #allocation5 [shape = 'u8[262144]{0}', space=vmem, size = 0x40000, scoped, tag = 'input window, operand 1, single buffered']
    #allocation6 [shape = 's32[1]{0}', space=sflag, size = 0x4, scoped, tag = 'scoped memory for tpu_custom_call.1']
    #allocation7 [shape = 'u8[1024]{0}', space=vmem, size = 0x400, scoped, tag = 'input window, operand 2, single buffered']
    #allocation8 [shape = 'u8[65536]{0}', space=vmem, size = 0x10000, scoped, tag = 'input window, operand 3, single buffered']
    #allocation9 [shape = 's32[1]{0}', space=sflag, size = 0x4, scoped, tag = 'scoped memory for tpu_custom_call.1']
    #allocation10 [shape = 'u8[65536]{0}', space=vmem, size = 0x10000, scoped, tag = 'input window, operand 4, single buffered']
    #allocation11 [shape = 'u8[512]{0}', space=vmem, size = 0x400, scoped, tag = 'input window, operand 6, single buffered']
    #allocation12 [shape = 's32[1]{0}', space=sflag, size = 0x4, scoped, tag = 'scoped memory for tpu_custom_call.1']
    #allocation13 [shape = 'u8[65536]{0}', space=vmem, size = 0x10000, scoped, tag = 'input window, operand 7, single buffered']
    #allocation14 [shape = 'u8[262144]{0}', space=vmem, size = 0x40000, scoped, tag = 'input window, operand 9, single buffered']
    #allocation15 [shape = 's32[1]{0}', space=sflag, size = 0x4, scoped, tag = 'scoped memory for tpu_custom_call.1']
    #allocation16 [shape = 'u8[524288]{0}', space=vmem, size = 0x80000, scoped, tag = 'output window, operand 0']
    #allocation17 [shape = 'u8[131072]{0}', space=vmem, size = 0x20000, scoped, tag = 'output window, operand 1']
    #allocation18 [shape = 's32[2]{0}', space=sflag, size = 0x8, scoped, tag = 'scoped memory for tpu_custom_call.1']
    #allocation19 [shape = 'u8[131072]{0}', space=vmem, size = 0x20000, scoped, tag = 'output window, operand 2']
    %19 = vsyncpa [#allocation3], 0
    %s20 = scalar_lea.sflag [#allocation3], 1
    %21 = vsyncpa %s20, 0
    %22 = vsyncpa [#allocation6], 0
    %23 = vsyncpa [#allocation9], 0
    %24 = vsyncpa [#allocation12], 0
    %25 = vsyncpa [#allocation15], 0
    %26 = vsyncpa [#allocation4], 0
    %s27 = scalar_lea.sflag [#allocation4], 1
    %28 = vsyncpa %s27, 0
    %29 = vsyncpa [#allocation18], 0
    %s30 = scalar_lea.sflag [#allocation18], 1
    %31 = vsyncpa %s30, 0
    loop: start=0, step=1, limit=4
    $region2: #{tpu_custom_call.1} parent=1 // loop_pre_header
      _
    $region3: #{tpu_custom_call.1} parent=1 // loop_header
      %s33 = sphi 0, %s37
      %p34 = scmp.ge.s32.totalorder %s33, 4
      %s43 = sphi 0, %s45
      %s46 = sphi 0, %s43
      %s47 = sphi 0, %s46
      %s63 = sphi 0, %s47
      %s67 = sphi 0, %s67
      %s69 = sphi 0, %s67
      %s70 = sphi 0, %s69
      %s84 = sphi 0, %s70
      %s88 = sphi 0, %s88
      %s90 = sphi 0, %s88
      %s91 = sphi 0, %s90
      %s105 = sphi 0, %s91
      %s109 = sphi 0, %s109
      %s111 = sphi 0, %s109
      %s112 = sphi 0, %s111
      %s126 = sphi 0, %s112
      %s130 = sphi 0, %s130
      %s132 = sphi 0, %s130
      %s133 = sphi 0, %s132
      %s147 = sphi 0, %s133
      %s151 = sphi 0, %s151
      %s153 = sphi 0, %s151
      %s154 = sphi 0, %s153
      %s168 = sphi 0, %s154
      %s172 = sphi 0, %s172
      %s174 = sphi 0, %s172
      %s175 = sphi 0, %s174
      %s189 = sphi 0, %s175
      %s193 = sphi 0, %s193
      %s195 = sphi 0, %s193
      %s196 = sphi 0, %s195
      %s210 = sphi 0, %s196
      %s214 = sphi 0, %s214
      %s216 = sphi 0, %s214
      %s217 = sphi 0, %s216
      %s231 = sphi 0, %s217
      %s235 = sphi 0, %s235
      %s237 = sphi 0, %s235
      %s238 = sphi 0, %s237
      %s252 = sphi 0, %s238
      %s256 = sphi 0, %s256
      %s258 = sphi 0, %s256
      %s259 = sphi 0, %s258
      %s273 = sphi 0, %s259
      %s279 = sphi 0, %s281
      %s282 = sphi 0, %s279
      %s283 = sphi 0, %s282
      %s299 = sphi 0, %s283
      %s305 = sphi 0, %s307
      %s308 = sphi 0, %s305
      %s309 = sphi 0, %s308
      %s325 = sphi 0, %s309
      %s331 = sphi 0, %s333
      %s334 = sphi 0, %s331
      %s335 = sphi 0, %s334
      %s351 = sphi 0, %s335
    $region4: #{tpu_custom_call.1} parent=1 // loop_header_branch
      %36 = sbr.rel (%p34) target = $region8
    $region5: #{tpu_custom_call.1} parent=1 // loop_body
      %s38 = ssub.s32 %s33, 1
      %s39 = ssub.s32 %s33, 2
      %s40 = sadd.s32 %s33, 1
      %s41 = ssub.s32 %s33, %s40
      %p42 = scmp.eq.s32.totalorder %s41, 0
      %s44 = sadd.s32 %s43, 1
      %s45 = scalar_select %p42, %s43, %s44
      %p48 = pneg %p42
      %p49 = scmp.eq.s32.totalorder %s33, 1
      %p50 = por %p48, %p49
      %p51 = scmp.ne.s32.totalorder %s43, %s46
      %p52 = scmp.eq.s32.totalorder %s33, 0
      %p53 = por %p51, %p52
      %p54 = scmp.ne.s32.totalorder %s43, %s46
      %p55 = scmp.eq.s32.totalorder %s38, 1
      %p56 = por %p54, %p55
      %p57 = scmp.ne.s32.totalorder %s46, %s47
      %p58 = scmp.eq.s32.totalorder %s38, 0
      %p59 = por %p57, %p58
      %p60 = scmp.ne.s32.totalorder %s46, %s47
      %p61 = scmp.eq.s32.totalorder %s39, 1
      %p62 = por %p60, %p61
      %p64 = scmp.ne.s32.totalorder %s47, %s63
      %p65 = scmp.eq.s32.totalorder %s39, 0
      %p66 = por %p64, %p65
      %s68 = sadd.s32 %s67, 1
      %p71 = scmp.eq.s32.totalorder %s33, 1
      %p72 = scmp.ne.s32.totalorder %s67, %s69
      %p73 = scmp.eq.s32.totalorder %s33, 0
      %p74 = por %p72, %p73
      %p75 = scmp.ne.s32.totalorder %s67, %s69
      %p76 = scmp.eq.s32.totalorder %s38, 1
      %p77 = por %p75, %p76
      %p78 = scmp.ne.s32.totalorder %s69, %s70
      %p79 = scmp.eq.s32.totalorder %s38, 0
      %p80 = por %p78, %p79
      %p81 = scmp.ne.s32.totalorder %s69, %s70
      %p82 = scmp.eq.s32.totalorder %s39, 1
      %p83 = por %p81, %p82
      %p85 = scmp.ne.s32.totalorder %s70, %s84
      %p86 = scmp.eq.s32.totalorder %s39, 0
      %p87 = por %p85, %p86
      %s89 = sadd.s32 %s88, 1
      %p92 = scmp.eq.s32.totalorder %s33, 1
      %p93 = scmp.ne.s32.totalorder %s88, %s90
      %p94 = scmp.eq.s32.totalorder %s33, 0
      %p95 = por %p93, %p94
      %p96 = scmp.ne.s32.totalorder %s88, %s90
      %p97 = scmp.eq.s32.totalorder %s38, 1
      %p98 = por %p96, %p97
      %p99 = scmp.ne.s32.totalorder %s90, %s91
      %p100 = scmp.eq.s32.totalorder %s38, 0
      %p101 = por %p99, %p100
      %p102 = scmp.ne.s32.totalorder %s90, %s91
      %p103 = scmp.eq.s32.totalorder %s39, 1
      %p104 = por %p102, %p103
      %p106 = scmp.ne.s32.totalorder %s91, %s105
      %p107 = scmp.eq.s32.totalorder %s39, 0
      %p108 = por %p106, %p107
      %s110 = sadd.s32 %s109, 1
      %p113 = scmp.eq.s32.totalorder %s33, 1
      %p114 = scmp.ne.s32.totalorder %s109, %s111
      %p115 = scmp.eq.s32.totalorder %s33, 0
      %p116 = por %p114, %p115
      %p117 = scmp.ne.s32.totalorder %s109, %s111
      %p118 = scmp.eq.s32.totalorder %s38, 1
      %p119 = por %p117, %p118
      %p120 = scmp.ne.s32.totalorder %s111, %s112
      %p121 = scmp.eq.s32.totalorder %s38, 0
      %p122 = por %p120, %p121
      %p123 = scmp.ne.s32.totalorder %s111, %s112
      %p124 = scmp.eq.s32.totalorder %s39, 1
      %p125 = por %p123, %p124
      %p127 = scmp.ne.s32.totalorder %s112, %s126
      %p128 = scmp.eq.s32.totalorder %s39, 0
      %p129 = por %p127, %p128
      %s131 = sadd.s32 %s130, 1
      %p134 = scmp.eq.s32.totalorder %s33, 1
      %p135 = scmp.ne.s32.totalorder %s130, %s132
      %p136 = scmp.eq.s32.totalorder %s33, 0
      %p137 = por %p135, %p136
      %p138 = scmp.ne.s32.totalorder %s130, %s132
      %p139 = scmp.eq.s32.totalorder %s38, 1
      %p140 = por %p138, %p139
      %p141 = scmp.ne.s32.totalorder %s132, %s133
      %p142 = scmp.eq.s32.totalorder %s38, 0
      %p143 = por %p141, %p142
      %p144 = scmp.ne.s32.totalorder %s132, %s133
      %p145 = scmp.eq.s32.totalorder %s39, 1
      %p146 = por %p144, %p145
      %p148 = scmp.ne.s32.totalorder %s133, %s147
      %p149 = scmp.eq.s32.totalorder %s39, 0
      %p150 = por %p148, %p149
      %s152 = sadd.s32 %s151, 1
      %p155 = scmp.eq.s32.totalorder %s33, 1
      %p156 = scmp.ne.s32.totalorder %s151, %s153
      %p157 = scmp.eq.s32.totalorder %s33, 0
      %p158 = por %p156, %p157
      %p159 = scmp.ne.s32.totalorder %s151, %s153
      %p160 = scmp.eq.s32.totalorder %s38, 1
      %p161 = por %p159, %p160
      %p162 = scmp.ne.s32.totalorder %s153, %s154
      %p163 = scmp.eq.s32.totalorder %s38, 0
      %p164 = por %p162, %p163
      %p165 = scmp.ne.s32.totalorder %s153, %s154
      %p166 = scmp.eq.s32.totalorder %s39, 1
      %p167 = por %p165, %p166
      %p169 = scmp.ne.s32.totalorder %s154, %s168
      %p170 = scmp.eq.s32.totalorder %s39, 0
      %p171 = por %p169, %p170
      %s173 = sadd.s32 %s172, 1
      %p176 = scmp.eq.s32.totalorder %s33, 1
      %p177 = scmp.ne.s32.totalorder %s172, %s174
      %p178 = scmp.eq.s32.totalorder %s33, 0
      %p179 = por %p177, %p178
      %p180 = scmp.ne.s32.totalorder %s172, %s174
      %p181 = scmp.eq.s32.totalorder %s38, 1
      %p182 = por %p180, %p181
      %p183 = scmp.ne.s32.totalorder %s174, %s175
      %p184 = scmp.eq.s32.totalorder %s38, 0
      %p185 = por %p183, %p184
      %p186 = scmp.ne.s32.totalorder %s174, %s175
      %p187 = scmp.eq.s32.totalorder %s39, 1
      %p188 = por %p186, %p187
      %p190 = scmp.ne.s32.totalorder %s175, %s189
      %p191 = scmp.eq.s32.totalorder %s39, 0
      %p192 = por %p190, %p191
      %s194 = sadd.s32 %s193, 1
      %p197 = scmp.eq.s32.totalorder %s33, 1
      %p198 = scmp.ne.s32.totalorder %s193, %s195
      %p199 = scmp.eq.s32.totalorder %s33, 0
      %p200 = por %p198, %p199
      %p201 = scmp.ne.s32.totalorder %s193, %s195
      %p202 = scmp.eq.s32.totalorder %s38, 1
      %p203 = por %p201, %p202
      %p204 = scmp.ne.s32.totalorder %s195, %s196
      %p205 = scmp.eq.s32.totalorder %s38, 0
      %p206 = por %p204, %p205
      %p207 = scmp.ne.s32.totalorder %s195, %s196
      %p208 = scmp.eq.s32.totalorder %s39, 1
      %p209 = por %p207, %p208
      %p211 = scmp.ne.s32.totalorder %s196, %s210
      %p212 = scmp.eq.s32.totalorder %s39, 0
      %p213 = por %p211, %p212
      %s215 = sadd.s32 %s214, 1
      %p218 = scmp.eq.s32.totalorder %s33, 1
      %p219 = scmp.ne.s32.totalorder %s214, %s216
      %p220 = scmp.eq.s32.totalorder %s33, 0
      %p221 = por %p219, %p220
      %p222 = scmp.ne.s32.totalorder %s214, %s216
      %p223 = scmp.eq.s32.totalorder %s38, 1
      %p224 = por %p222, %p223
      %p225 = scmp.ne.s32.totalorder %s216, %s217
      %p226 = scmp.eq.s32.totalorder %s38, 0
      %p227 = por %p225, %p226
      %p228 = scmp.ne.s32.totalorder %s216, %s217
      %p229 = scmp.eq.s32.totalorder %s39, 1
      %p230 = por %p228, %p229
      %p232 = scmp.ne.s32.totalorder %s217, %s231
      %p233 = scmp.eq.s32.totalorder %s39, 0
      %p234 = por %p232, %p233
      %s236 = sadd.s32 %s235, 1
      %p239 = scmp.eq.s32.totalorder %s33, 1
      %p240 = scmp.ne.s32.totalorder %s235, %s237
      %p241 = scmp.eq.s32.totalorder %s33, 0
      %p242 = por %p240, %p241
      %p243 = scmp.ne.s32.totalorder %s235, %s237
      %p244 = scmp.eq.s32.totalorder %s38, 1
      %p245 = por %p243, %p244
      %p246 = scmp.ne.s32.totalorder %s237, %s238
      %p247 = scmp.eq.s32.totalorder %s38, 0
      %p248 = por %p246, %p247
      %p249 = scmp.ne.s32.totalorder %s237, %s238
      %p250 = scmp.eq.s32.totalorder %s39, 1
      %p251 = por %p249, %p250
      %p253 = scmp.ne.s32.totalorder %s238, %s252
      %p254 = scmp.eq.s32.totalorder %s39, 0
      %p255 = por %p253, %p254
      %s257 = sadd.s32 %s256, 1
      %p260 = scmp.eq.s32.totalorder %s33, 1
      %p261 = scmp.ne.s32.totalorder %s256, %s258
      %p262 = scmp.eq.s32.totalorder %s33, 0
      %p263 = por %p261, %p262
      %p264 = scmp.ne.s32.totalorder %s256, %s258
      %p265 = scmp.eq.s32.totalorder %s38, 1
      %p266 = por %p264, %p265
      %p267 = scmp.ne.s32.totalorder %s258, %s259
      %p268 = scmp.eq.s32.totalorder %s38, 0
      %p269 = por %p267, %p268
      %p270 = scmp.ne.s32.totalorder %s258, %s259
      %p271 = scmp.eq.s32.totalorder %s39, 1
      %p272 = por %p270, %p271
      %p274 = scmp.ne.s32.totalorder %s259, %s273
      %p275 = scmp.eq.s32.totalorder %s39, 0
      %p276 = por %p274, %p275
      %s277 = ssub.s32 %s33, %s40
      %p278 = scmp.eq.s32.totalorder %s277, 0
      %s280 = sadd.s32 %s279, 1
      %s281 = scalar_select %p278, %s279, %s280
      %p284 = pneg %p278
      %p285 = scmp.eq.s32.totalorder %s33, 1
      %p286 = por %p284, %p285
      %p287 = scmp.ne.s32.totalorder %s279, %s282
      %p288 = scmp.eq.s32.totalorder %s33, 0
      %p289 = por %p287, %p288
      %p290 = scmp.ne.s32.totalorder %s279, %s282
      %p291 = scmp.eq.s32.totalorder %s38, 1
      %p292 = por %p290, %p291
      %p293 = scmp.ne.s32.totalorder %s282, %s283
      %p294 = scmp.eq.s32.totalorder %s38, 0
      %p295 = por %p293, %p294
      %p296 = scmp.ne.s32.totalorder %s282, %s283
      %p297 = scmp.eq.s32.totalorder %s39, 1
      %p298 = por %p296, %p297
      %p300 = scmp.ne.s32.totalorder %s283, %s299
      %p301 = scmp.eq.s32.totalorder %s39, 0
      %p302 = por %p300, %p301
      %s303 = ssub.s32 %s33, %s40
      %p304 = scmp.eq.s32.totalorder %s303, 0
      %s306 = sadd.s32 %s305, 1
      %s307 = scalar_select %p304, %s305, %s306
      %p310 = pneg %p304
      %p311 = scmp.eq.s32.totalorder %s33, 1
      %p312 = por %p310, %p311
      %p313 = scmp.ne.s32.totalorder %s305, %s308
      %p314 = scmp.eq.s32.totalorder %s33, 0
      %p315 = por %p313, %p314
      %p316 = scmp.ne.s32.totalorder %s305, %s308
      %p317 = scmp.eq.s32.totalorder %s38, 1
      %p318 = por %p316, %p317
      %p319 = scmp.ne.s32.totalorder %s308, %s309
      %p320 = scmp.eq.s32.totalorder %s38, 0
      %p321 = por %p319, %p320
      %p322 = scmp.ne.s32.totalorder %s308, %s309
      %p323 = scmp.eq.s32.totalorder %s39, 1
      %p324 = por %p322, %p323
      %p326 = scmp.ne.s32.totalorder %s309, %s325
      %p327 = scmp.eq.s32.totalorder %s39, 0
      %p328 = por %p326, %p327
      %s329 = ssub.s32 %s33, %s40
      %p330 = scmp.eq.s32.totalorder %s329, 0
      %s332 = sadd.s32 %s331, 1
      %s333 = scalar_select %p330, %s331, %s332
      %p336 = pneg %p330
      %p337 = scmp.eq.s32.totalorder %s33, 1
      %p338 = por %p336, %p337
      %p339 = scmp.ne.s32.totalorder %s331, %s334
      %p340 = scmp.eq.s32.totalorder %s33, 0
      %p341 = por %p339, %p340
      %p342 = scmp.ne.s32.totalorder %s331, %s334
      %p343 = scmp.eq.s32.totalorder %s38, 1
      %p344 = por %p342, %p343
      %p345 = scmp.ne.s32.totalorder %s334, %s335
      %p346 = scmp.eq.s32.totalorder %s38, 0
      %p347 = por %p345, %p346
      %p348 = scmp.ne.s32.totalorder %s334, %s335
      %p349 = scmp.eq.s32.totalorder %s39, 1
      %p350 = por %p348, %p349
      %p352 = scmp.ne.s32.totalorder %s335, %s351
      %p353 = scmp.eq.s32.totalorder %s39, 0
      %p354 = por %p352, %p353
      %p355 = scmp.le.s32.totalorder 1, %s33
      %p356 = scmp.lt.s32.totalorder %s33, 3
      %p357 = pnand %p355, %p356
      %p358 = pneg %p357
      // Predicated region
      $region9: #{tpu_custom_call.1} parent=5 // pred_check
        _
      $region10: #{tpu_custom_call.1} parent=5 // pred_check_branch
        %360 = sbr.rel (%p357) target = $region12
      $region11: #{tpu_custom_call.1} parent=5 // pred_region
        %s361 = ssub.s32 %s33, 1
        // Predicated region
        $region13: #{tpu_custom_call.1} parent=11 // pred_check
          %p362 = pneg %p80
        $region14: #{tpu_custom_call.1} parent=11 // pred_check_branch
          %364 = sbr.rel (%p362) target = $region16
        $region15: #{tpu_custom_call.1} parent=11 // pred_region
          %366 = vsyncadd [#allocation6], 0
          %s367 = sshll.u32 %s1, 4
          %s368 = int_to_ptr.hbm [resolvable:$true] %s367
          %s369 = sshll.u32 [#allocation5], 4
          %s370 = int_to_ptr.vmem [resolvable:$true] %s369
          %375 = dma.hbm_to_vmem [thread:$0]  %s368, 8192, %s370, [#allocation6], 128, 128, 8
        $region16: #{tpu_custom_call.1} parent=11 // pred_fallthru
          _
        // Predicated region
        $region17: #{tpu_custom_call.1} parent=11 // pred_check
          %p376 = pneg %p101
        $region18: #{tpu_custom_call.1} parent=11 // pred_check_branch
          %378 = sbr.rel (%p376) target = $region20
        $region19: #{tpu_custom_call.1} parent=11 // pred_region
          %380 = vsyncadd [#allocation6], 0
          %s382 = sshll.u32 %s2, 4
          %s383 = int_to_ptr.hbm [resolvable:$true] %s382
          %s384 = sshll.u32 [#allocation7], 4
          %s385 = int_to_ptr.vmem [resolvable:$true] %s384
          %387 = dma.hbm_to_vmem [thread:$0]  %s383, 32, %s385, [#allocation6]
        $region20: #{tpu_custom_call.1} parent=11 // pred_fallthru
          _
        // Predicated region
        $region21: #{tpu_custom_call.1} parent=11 // pred_check
          %p388 = pneg %p122
        $region22: #{tpu_custom_call.1} parent=11 // pred_check_branch
          %390 = sbr.rel (%p388) target = $region24
        $region23: #{tpu_custom_call.1} parent=11 // pred_region
          %392 = vsyncadd [#allocation9], 0
          %s393 = sshll.u32 %s3, 4
          %s394 = int_to_ptr.hbm [resolvable:$true] %s393
          %s395 = sshll.u32 [#allocation8], 4
          %s396 = int_to_ptr.vmem [resolvable:$true] %s395
          %401 = dma.hbm_to_vmem [thread:$0]  %s394, 2048, %s396, [#allocation9], 64, 64, 4
        $region24: #{tpu_custom_call.1} parent=11 // pred_fallthru
          _
        // Predicated region
        $region25: #{tpu_custom_call.1} parent=11 // pred_check
          %p402 = pneg %p143
        $region26: #{tpu_custom_call.1} parent=11 // pred_check_branch
          %404 = sbr.rel (%p402) target = $region28
        $region27: #{tpu_custom_call.1} parent=11 // pred_region
          %406 = vsyncadd [#allocation9], 0
          %s407 = sshll.u32 %s4, 4
          %s408 = int_to_ptr.hbm [resolvable:$true] %s407
          %s409 = sshll.u32 [#allocation10], 4
          %s410 = int_to_ptr.vmem [resolvable:$true] %s409
          %415 = dma.hbm_to_vmem [thread:$0]  %s408, 2048, %s410, [#allocation9], 64, 64, 4
        $region28: #{tpu_custom_call.1} parent=11 // pred_fallthru
          _
        // Predicated region
        $region29: #{tpu_custom_call.1} parent=11 // pred_check
          %p416 = pneg %p164
        $region30: #{tpu_custom_call.1} parent=11 // pred_check_branch
          %418 = sbr.rel (%p416) target = $region32
        $region31: #{tpu_custom_call.1} parent=11 // pred_region
          _
        $region32: #{tpu_custom_call.1} parent=11 // pred_fallthru
          _
        // Predicated region
        $region33: #{tpu_custom_call.1} parent=11 // pred_check
          %p419 = pneg %p185
        $region34: #{tpu_custom_call.1} parent=11 // pred_check_branch
          %421 = sbr.rel (%p419) target = $region36
        $region35: #{tpu_custom_call.1} parent=11 // pred_region
          %423 = vsyncadd [#allocation12], 0
          %s425 = sshll.u32 %s6, 4
          %s426 = int_to_ptr.hbm [resolvable:$true] %s425
          %s427 = sshll.u32 [#allocation11], 4
          %s428 = int_to_ptr.vmem [resolvable:$true] %s427
          %430 = dma.hbm_to_vmem [thread:$0]  %s426, 16, %s428, [#allocation12]
        $region36: #{tpu_custom_call.1} parent=11 // pred_fallthru
          _
        // Predicated region
        $region37: #{tpu_custom_call.1} parent=11 // pred_check
          %p431 = pneg %p206
        $region38: #{tpu_custom_call.1} parent=11 // pred_check_branch
          %433 = sbr.rel (%p431) target = $region40
        $region39: #{tpu_custom_call.1} parent=11 // pred_region
          %435 = vsyncadd [#allocation12], 0
          %s436 = sshll.u32 %s7, 4
          %s437 = int_to_ptr.hbm [resolvable:$true] %s436
          %s438 = sshll.u32 [#allocation13], 4
          %s439 = int_to_ptr.vmem [resolvable:$true] %s438
          %444 = dma.hbm_to_vmem [thread:$0]  %s437, 2048, %s439, [#allocation12], 128, 128, 8
        $region40: #{tpu_custom_call.1} parent=11 // pred_fallthru
          _
        // Predicated region
        $region41: #{tpu_custom_call.1} parent=11 // pred_check
          %p445 = pneg %p227
        $region42: #{tpu_custom_call.1} parent=11 // pred_check_branch
          %447 = sbr.rel (%p445) target = $region44
        $region43: #{tpu_custom_call.1} parent=11 // pred_region
          _
        $region44: #{tpu_custom_call.1} parent=11 // pred_fallthru
          _
        // Predicated region
        $region45: #{tpu_custom_call.1} parent=11 // pred_check
          %p448 = pneg %p248
        $region46: #{tpu_custom_call.1} parent=11 // pred_check_branch
          %450 = sbr.rel (%p448) target = $region48
        $region47: #{tpu_custom_call.1} parent=11 // pred_region
          %452 = vsyncadd [#allocation15], 0
          %s453 = sshll.u32 %s9, 4
          %s454 = int_to_ptr.hbm [resolvable:$true] %s453
          %s455 = sshll.u32 [#allocation14], 4
          %s456 = int_to_ptr.vmem [resolvable:$true] %s455
          %461 = dma.hbm_to_vmem [thread:$0]  %s454, 8192, %s456, [#allocation15], 256, 256, 16
        $region48: #{tpu_custom_call.1} parent=11 // pred_fallthru
          _
        // Predicated region
        $region49: #{tpu_custom_call.1} parent=11 // pred_check
          %p462 = pneg %p269
        $region50: #{tpu_custom_call.1} parent=11 // pred_check_branch
          %464 = sbr.rel (%p462) target = $region52
        $region51: #{tpu_custom_call.1} parent=11 // pred_region
          _
        $region52: #{tpu_custom_call.1} parent=11 // pred_fallthru
          _
      $region12: #{tpu_custom_call.1} parent=5 // pred_fallthru
        _
      %p465 = scmp.lt.s32.totalorder %s33, 2
      // Predicated region
      $region53: #{tpu_custom_call.1} parent=5 // pred_check
        %p466 = pneg %p465
      $region54: #{tpu_custom_call.1} parent=5 // pred_check_branch
        %468 = sbr.rel (%p466) target = $region56
      $region55: #{tpu_custom_call.1} parent=5 // pred_region
        // Predicated region
        $region57: #{tpu_custom_call.1} parent=55 // pred_check
          %p469 = pneg %p53
        $region58: #{tpu_custom_call.1} parent=55 // pred_check_branch
          %471 = sbr.rel (%p469) target = $region60
        $region59: #{tpu_custom_call.1} parent=55 // pred_region
          %s472 = sand.u32 %s43, 1
          %s473 = scalar_lea.sflag [#allocation3], %s472
          %s474 = sand.u32 %s43, 1
          %s475 = smul.addr %s474, 256
          %s476 = scalar_lea.vmem [#allocation2], %s475
          %s477 = smul.u32 16, %s33
          %479 = vsyncadd %s473, 0
          %s480 = smul.addr %s477, 4
          %s481 = smul.addr %s480, 4
          %s482 = scalar_lea.hbm %s0, %s481
          %s483 = sshll.u32 %s482, 4
          %s484 = int_to_ptr.hbm [resolvable:$true] %s483
          %s485 = sshll.u32 %s476, 4
          %s486 = int_to_ptr.vmem [resolvable:$true] %s485
          %491 = dma.hbm_to_vmem [thread:$0]  %s484, 4096, %s486, %s473, 256, 256, 16
        $region60: #{tpu_custom_call.1} parent=55 // pred_fallthru
          _
      $region56: #{tpu_custom_call.1} parent=5 // pred_fallthru
        _
      %p492 = scmp.le.s32.totalorder 1, %s33
      %p493 = scmp.lt.s32.totalorder %s33, 3
      %p494 = pnand %p492, %p493
      %p495 = pneg %p494
      // Predicated region
      $region61: #{tpu_custom_call.1} parent=5 // pred_check
        _
      $region62: #{tpu_custom_call.1} parent=5 // pred_check_branch
        %497 = sbr.rel (%p494) target = $region64
      $region63: #{tpu_custom_call.1} parent=5 // pred_region
        %s498 = ssub.s32 %s33, 1
        %s499 = sand.u32 %s46, 1
        %s500 = scalar_lea.sflag [#allocation3], %s499
        %s501 = sand.u32 %s46, 1
        %s502 = smul.addr %s501, 256
        %s503 = scalar_lea.vmem [#allocation2], %s502
        // Predicated region
        $region65: #{tpu_custom_call.1} parent=63 // pred_check
          %p504 = pneg %p59
        $region66: #{tpu_custom_call.1} parent=63 // pred_check_branch
          %506 = sbr.rel (%p504) target = $region68
        $region67: #{tpu_custom_call.1} parent=63 // pred_region
          %508 = dma.done %s500, 4096
        $region68: #{tpu_custom_call.1} parent=63 // pred_fallthru
          _
        // Predicated region
        $region69: #{tpu_custom_call.1} parent=63 // pred_check
          %p509 = pneg %p80
        $region70: #{tpu_custom_call.1} parent=63 // pred_check_branch
          %511 = sbr.rel (%p509) target = $region72
        $region71: #{tpu_custom_call.1} parent=63 // pred_region
          %513 = dma.done [#allocation6], 8192
        $region72: #{tpu_custom_call.1} parent=63 // pred_fallthru
          _
        // Predicated region
        $region73: #{tpu_custom_call.1} parent=63 // pred_check
          %p514 = pneg %p101
        $region74: #{tpu_custom_call.1} parent=63 // pred_check_branch
          %516 = sbr.rel (%p514) target = $region76
        $region75: #{tpu_custom_call.1} parent=63 // pred_region
          %518 = dma.done [#allocation6], 32
        $region76: #{tpu_custom_call.1} parent=63 // pred_fallthru
          _
        // Predicated region
        $region77: #{tpu_custom_call.1} parent=63 // pred_check
          %p519 = pneg %p122
        $region78: #{tpu_custom_call.1} parent=63 // pred_check_branch
          %521 = sbr.rel (%p519) target = $region80
        $region79: #{tpu_custom_call.1} parent=63 // pred_region
          %523 = dma.done [#allocation9], 2048
        $region80: #{tpu_custom_call.1} parent=63 // pred_fallthru
          _
        // Predicated region
        $region81: #{tpu_custom_call.1} parent=63 // pred_check
          %p524 = pneg %p143
        $region82: #{tpu_custom_call.1} parent=63 // pred_check_branch
          %526 = sbr.rel (%p524) target = $region84
        $region83: #{tpu_custom_call.1} parent=63 // pred_region
          %528 = dma.done [#allocation9], 2048
        $region84: #{tpu_custom_call.1} parent=63 // pred_fallthru
          _
        // Predicated region
        $region85: #{tpu_custom_call.1} parent=63 // pred_check
          %p529 = pneg %p185
        $region86: #{tpu_custom_call.1} parent=63 // pred_check_branch
          %531 = sbr.rel (%p529) target = $region88
        $region87: #{tpu_custom_call.1} parent=63 // pred_region
          %533 = dma.done [#allocation12], 16
        $region88: #{tpu_custom_call.1} parent=63 // pred_fallthru
          _
        // Predicated region
        $region89: #{tpu_custom_call.1} parent=63 // pred_check
          %p534 = pneg %p206
        $region90: #{tpu_custom_call.1} parent=63 // pred_check_branch
          %536 = sbr.rel (%p534) target = $region92
        $region91: #{tpu_custom_call.1} parent=63 // pred_region
          %538 = dma.done [#allocation12], 2048
        $region92: #{tpu_custom_call.1} parent=63 // pred_fallthru
          _
        // Predicated region
        $region93: #{tpu_custom_call.1} parent=63 // pred_check
          %p539 = pneg %p248
        $region94: #{tpu_custom_call.1} parent=63 // pred_check_branch
          %541 = sbr.rel (%p539) target = $region96
        $region95: #{tpu_custom_call.1} parent=63 // pred_region
          %543 = dma.done [#allocation15], 8192
        $region96: #{tpu_custom_call.1} parent=63 // pred_fallthru
          _
        %s544 = sand.u32 %s46, 1
        %s545 = scalar_lea.sflag [#allocation3], %s544
        %s546 = sand.u32 %s46, 1
        %s547 = smul.addr %s546, 256
        %s548 = scalar_lea.vmem [#allocation2], %s547
        %p549 = pneg %p59
        %p550 = pneg %p56
        %p551 = pneg %p80
        %p552 = pneg %p77
        %p553 = pneg %p101
        %p554 = pneg %p98
        %p555 = pneg %p122
        %p556 = pneg %p119
        %p557 = pneg %p143
        %p558 = pneg %p140
        %p559 = pneg %p164
        %p560 = pneg %p161
        %p561 = pneg %p185
        %p562 = pneg %p182
        %p563 = pneg %p206
        %p564 = pneg %p203
        %p565 = pneg %p227
        %p566 = pneg %p224
        %p567 = pneg %p248
        %p568 = pneg %p245
        %p569 = pneg %p269
        %p570 = pneg %p266
        %p571 = pneg %p295
        %p572 = pneg %p292
        %s573 = sand.u32 %s282, 1
        %s574 = scalar_lea.sflag [#allocation4], %s573
        %s575 = sand.u32 %s282, 1
        %s576 = smul.addr %s575, 512
        %s577 = scalar_lea.vmem [#allocation16], %s576
        %p578 = pneg %p321
        %p579 = pneg %p318
        %s580 = sand.u32 %s38, 1
        %s581 = scalar_lea.sflag [#allocation18], %s580
        %s582 = sand.u32 %s308, 1
        %s583 = smul.addr %s582, 128
        %s584 = scalar_lea.vmem [#allocation17], %s583
        %p585 = pneg %p347
        %p586 = pneg %p344
        %s587 = sand.u32 %s38, 1
        %s588 = scalar_lea.sflag [#allocation18], %s587
        %s589 = sand.u32 %s334, 1
        %s590 = smul.addr %s589, 128
        %s591 = scalar_lea.vmem [#allocation19], %s590
        %s592 = smul.u32 16, %s38
        %s593 = smul.u32 16, %s38
        %s594 = smul.u32 16, %s38
        %s595 = smul.u32 16, %s38
        %v596 = vld [vmem:[%s503] sm:$0xff]
        %v597 = vld [vmem:[%s503 + $0x8] sm:$0xff]
        %v598 = vld [vmem:[%s503 + $0x10] sm:$0xff]
        %v599 = vld [vmem:[%s503 + $0x18] sm:$0xff]
        %v600 = vld [vmem:[%s503 + $0x20] sm:$0xff]
        %v601 = vld [vmem:[%s503 + $0x28] sm:$0xff]
        %v602 = vld [vmem:[%s503 + $0x30] sm:$0xff]
        %v603 = vld [vmem:[%s503 + $0x38] sm:$0xff]
        %v604 = vld [vmem:[%s503 + $0x40] sm:$0xff]
        %v605 = vld [vmem:[%s503 + $0x48] sm:$0xff]
        %v606 = vld [vmem:[%s503 + $0x50] sm:$0xff]
        %v607 = vld [vmem:[%s503 + $0x58] sm:$0xff]
        %v608 = vld [vmem:[%s503 + $0x60] sm:$0xff]
        %v609 = vld [vmem:[%s503 + $0x68] sm:$0xff]
        %v610 = vld [vmem:[%s503 + $0x70] sm:$0xff]
        %v611 = vld [vmem:[%s503 + $0x78] sm:$0xff]
        %v612 = vld [vmem:[%s503 + $0x80] sm:$0xff]
        %v613 = vld [vmem:[%s503 + $0x88] sm:$0xff]
        %v614 = vld [vmem:[%s503 + $0x90] sm:$0xff]
        %v615 = vld [vmem:[%s503 + $0x98] sm:$0xff]
        %v616 = vld [vmem:[%s503 + $0xa0] sm:$0xff]
        %v617 = vld [vmem:[%s503 + $0xa8] sm:$0xff]
        %v618 = vld [vmem:[%s503 + $0xb0] sm:$0xff]
        %v619 = vld [vmem:[%s503 + $0xb8] sm:$0xff]
        %v620 = vld [vmem:[%s503 + $0xc0] sm:$0xff]
        %v621 = vld [vmem:[%s503 + $0xc8] sm:$0xff]
        %v622 = vld [vmem:[%s503 + $0xd0] sm:$0xff]
        %v623 = vld [vmem:[%s503 + $0xd8] sm:$0xff]
        %v624 = vld [vmem:[%s503 + $0xe0] sm:$0xff]
        %v625 = vld [vmem:[%s503 + $0xe8] sm:$0xff]
        %v626 = vld [vmem:[%s503 + $0xf0] sm:$0xff]
        %v627 = vld [vmem:[%s503 + $0xf8] sm:$0xff]
        %v628 = vld [vmem:[#allocation5] sm:$0xff]
        %v629 = vld [vmem:[#allocation5 + $0x8] sm:$0xff]
        %v630 = vld [vmem:[#allocation5 + $0x10] sm:$0xff]
        %v631 = vld [vmem:[#allocation5 + $0x18] sm:$0xff]
        %v632 = vld [vmem:[#allocation5 + $0x20] sm:$0xff]
        %v633 = vld [vmem:[#allocation5 + $0x28] sm:$0xff]
        %v634 = vld [vmem:[#allocation5 + $0x30] sm:$0xff]
        %v635 = vld [vmem:[#allocation5 + $0x38] sm:$0xff]
        %v636 = vld [vmem:[#allocation5 + $0x40] sm:$0xff]
        %v637 = vld [vmem:[#allocation5 + $0x48] sm:$0xff]
        %v638 = vld [vmem:[#allocation5 + $0x50] sm:$0xff]
        %v639 = vld [vmem:[#allocation5 + $0x58] sm:$0xff]
        %v640 = vld [vmem:[#allocation5 + $0x60] sm:$0xff]
        %v641 = vld [vmem:[#allocation5 + $0x68] sm:$0xff]
        %v642 = vld [vmem:[#allocation5 + $0x70] sm:$0xff]
        %v643 = vld [vmem:[#allocation5 + $0x78] sm:$0xff]
        %v644 = vld [vmem:[#allocation5 + $0x80] sm:$0xff]
        %v645 = vld [vmem:[#allocation5 + $0x88] sm:$0xff]
        %v646 = vld [vmem:[#allocation5 + $0x90] sm:$0xff]
        %v647 = vld [vmem:[#allocation5 + $0x98] sm:$0xff]
        %v648 = vld [vmem:[#allocation5 + $0xa0] sm:$0xff]
        %v649 = vld [vmem:[#allocation5 + $0xa8] sm:$0xff]
        %v650 = vld [vmem:[#allocation5 + $0xb0] sm:$0xff]
        %v651 = vld [vmem:[#allocation5 + $0xb8] sm:$0xff]
        %v652 = vld [vmem:[#allocation5 + $0xc0] sm:$0xff]
        %v653 = vld [vmem:[#allocation5 + $0xc8] sm:$0xff]
        %v654 = vld [vmem:[#allocation5 + $0xd0] sm:$0xff]
        %v655 = vld [vmem:[#allocation5 + $0xd8] sm:$0xff]
        %v656 = vld [vmem:[#allocation5 + $0xe0] sm:$0xff]
        %v657 = vld [vmem:[#allocation5 + $0xe8] sm:$0xff]
        %v658 = vld [vmem:[#allocation5 + $0xf0] sm:$0xff]
        %v659 = vld [vmem:[#allocation5 + $0xf8] sm:$0xff]
        %v660 = vld [vmem:[#allocation5 + $0x100] sm:$0xff]
        %v661 = vld [vmem:[#allocation5 + $0x108] sm:$0xff]
        %v662 = vld [vmem:[#allocation5 + $0x110] sm:$0xff]
        %v663 = vld [vmem:[#allocation5 + $0x118] sm:$0xff]
        %v664 = vld [vmem:[#allocation5 + $0x120] sm:$0xff]
        %v665 = vld [vmem:[#allocation5 + $0x128] sm:$0xff]
        %v666 = vld [vmem:[#allocation5 + $0x130] sm:$0xff]
        %v667 = vld [vmem:[#allocation5 + $0x138] sm:$0xff]
        %v668 = vld [vmem:[#allocation5 + $0x140] sm:$0xff]
        %v669 = vld [vmem:[#allocation5 + $0x148] sm:$0xff]
        %v670 = vld [vmem:[#allocation5 + $0x150] sm:$0xff]
        %v671 = vld [vmem:[#allocation5 + $0x158] sm:$0xff]
        %v672 = vld [vmem:[#allocation5 + $0x160] sm:$0xff]
        %v673 = vld [vmem:[#allocation5 + $0x168] sm:$0xff]
        %v674 = vld [vmem:[#allocation5 + $0x170] sm:$0xff]
        %v675 = vld [vmem:[#allocation5 + $0x178] sm:$0xff]
        %v676 = vld [vmem:[#allocation5 + $0x180] sm:$0xff]
        %v677 = vld [vmem:[#allocation5 + $0x188] sm:$0xff]
        %v678 = vld [vmem:[#allocation5 + $0x190] sm:$0xff]
        %v679 = vld [vmem:[#allocation5 + $0x198] sm:$0xff]
        %v680 = vld [vmem:[#allocation5 + $0x1a0] sm:$0xff]
        %v681 = vld [vmem:[#allocation5 + $0x1a8] sm:$0xff]
        %v682 = vld [vmem:[#allocation5 + $0x1b0] sm:$0xff]
        %v683 = vld [vmem:[#allocation5 + $0x1b8] sm:$0xff]
        %v684 = vld [vmem:[#allocation5 + $0x1c0] sm:$0xff]
        %v685 = vld [vmem:[#allocation5 + $0x1c8] sm:$0xff]
        %v686 = vld [vmem:[#allocation5 + $0x1d0] sm:$0xff]
        %v687 = vld [vmem:[#allocation5 + $0x1d8] sm:$0xff]
        %v688 = vld [vmem:[#allocation5 + $0x1e0] sm:$0xff]
        %v689 = vld [vmem:[#allocation5 + $0x1e8] sm:$0xff]
        %v690 = vld [vmem:[#allocation5 + $0x1f0] sm:$0xff]
        %v691 = vld [vmem:[#allocation5 + $0x1f8] sm:$0xff]
        %v692 = vld [vmem:[#allocation7] sm:$0x3]
        %v694 = vperm.slane %v692, 0
        %v695 = vperm.slane %v692, 1
        %v730 = vunpack.c.l.b16 %v596
        %v731 = vunpack.c.h.b16 %v596
        %v732 = vunpack.c.l.b16 %v597
        %v733 = vunpack.c.h.b16 %v597
        %v734 = vunpack.c.l.b16 %v598
        %v735 = vunpack.c.h.b16 %v598
        %v736 = vunpack.c.l.b16 %v599
        %v737 = vunpack.c.h.b16 %v599
        %v738 = vunpack.c.l.b16 %v600
        %v739 = vunpack.c.h.b16 %v600
        %v740 = vunpack.c.l.b16 %v601
        %v741 = vunpack.c.h.b16 %v601
        %v742 = vunpack.c.l.b16 %v602
        %v743 = vunpack.c.h.b16 %v602
        %v744 = vunpack.c.l.b16 %v603
        %v745 = vunpack.c.h.b16 %v603
        %v746 = vunpack.c.l.b16 %v604
        %v747 = vunpack.c.h.b16 %v604
        %v748 = vunpack.c.l.b16 %v605
        %v749 = vunpack.c.h.b16 %v605
        %v750 = vunpack.c.l.b16 %v606
        %v751 = vunpack.c.h.b16 %v606
        %v752 = vunpack.c.l.b16 %v607
        %v753 = vunpack.c.h.b16 %v607
        %v754 = vunpack.c.l.b16 %v608
        %v755 = vunpack.c.h.b16 %v608
        %v756 = vunpack.c.l.b16 %v609
        %v757 = vunpack.c.h.b16 %v609
        %v758 = vunpack.c.l.b16 %v610
        %v759 = vunpack.c.h.b16 %v610
        %v760 = vunpack.c.l.b16 %v611
        %v761 = vunpack.c.h.b16 %v611
        %v762 = vunpack.c.l.b16 %v612
        %v763 = vunpack.c.h.b16 %v612
        %v764 = vunpack.c.l.b16 %v613
        %v765 = vunpack.c.h.b16 %v613
        %v766 = vunpack.c.l.b16 %v614
        %v767 = vunpack.c.h.b16 %v614
        %v768 = vunpack.c.l.b16 %v615
        %v769 = vunpack.c.h.b16 %v615
        %v770 = vunpack.c.l.b16 %v616
        %v771 = vunpack.c.h.b16 %v616
        %v772 = vunpack.c.l.b16 %v617
        %v773 = vunpack.c.h.b16 %v617
        %v774 = vunpack.c.l.b16 %v618
        %v775 = vunpack.c.h.b16 %v618
        %v776 = vunpack.c.l.b16 %v619
        %v777 = vunpack.c.h.b16 %v619
        %v778 = vunpack.c.l.b16 %v620
        %v779 = vunpack.c.h.b16 %v620
        %v780 = vunpack.c.l.b16 %v621
        %v781 = vunpack.c.h.b16 %v621
        %v782 = vunpack.c.l.b16 %v622
        %v783 = vunpack.c.h.b16 %v622
        %v784 = vunpack.c.l.b16 %v623
        %v785 = vunpack.c.h.b16 %v623
        %v786 = vunpack.c.l.b16 %v624
        %v787 = vunpack.c.h.b16 %v624
        %v788 = vunpack.c.l.b16 %v625
        %v789 = vunpack.c.h.b16 %v625
        %v790 = vunpack.c.l.b16 %v626
        %v791 = vunpack.c.h.b16 %v626
        %v792 = vunpack.c.l.b16 %v627
        %v793 = vunpack.c.h.b16 %v627
        %v794 = vpack.c.b16 %v734, %v730
        %v795 = vpack.c.b16 %v735, %v731
        %v796 = vpack.c.b16 %v736, %v732
        %v797 = vpack.c.b16 %v737, %v733
        %v798 = vpack.c.b16 %v742, %v738
        %v799 = vpack.c.b16 %v743, %v739
        %v800 = vpack.c.b16 %v744, %v740
        %v801 = vpack.c.b16 %v745, %v741
        %v802 = vpack.c.b16 %v750, %v746
        %v803 = vpack.c.b16 %v751, %v747
        %v804 = vpack.c.b16 %v752, %v748
        %v805 = vpack.c.b16 %v753, %v749
        %v806 = vpack.c.b16 %v758, %v754
        %v807 = vpack.c.b16 %v759, %v755
        %v808 = vpack.c.b16 %v760, %v756
        %v809 = vpack.c.b16 %v761, %v757
        %v810 = vpack.c.b16 %v766, %v762
        %v811 = vpack.c.b16 %v767, %v763
        %v812 = vpack.c.b16 %v768, %v764
        %v813 = vpack.c.b16 %v769, %v765
        %v814 = vpack.c.b16 %v774, %v770
        %v815 = vpack.c.b16 %v775, %v771
        %v816 = vpack.c.b16 %v776, %v772
        %v817 = vpack.c.b16 %v777, %v773
        %v818 = vpack.c.b16 %v782, %v778
        %v819 = vpack.c.b16 %v783, %v779
        %v820 = vpack.c.b16 %v784, %v780
        %v821 = vpack.c.b16 %v785, %v781
        %v822 = vpack.c.b16 %v790, %v786
        %v823 = vpack.c.b16 %v791, %v787
        %v824 = vpack.c.b16 %v792, %v788
        %v825 = vpack.c.b16 %v793, %v789
        %v922 = vunpack.c.l.b16 %v628
        %v923 = vunpack.c.h.b16 %v628
        %v924 = vunpack.c.l.b16 %v629
        %v925 = vunpack.c.h.b16 %v629
        %v926 = vunpack.c.l.b16 %v630
        %v927 = vunpack.c.h.b16 %v630
        %v928 = vunpack.c.l.b16 %v631
        %v929 = vunpack.c.h.b16 %v631
        %v930 = vunpack.c.l.b16 %v632
        %v931 = vunpack.c.h.b16 %v632
        %v932 = vunpack.c.l.b16 %v633
        %v933 = vunpack.c.h.b16 %v633
        %v934 = vunpack.c.l.b16 %v634
        %v935 = vunpack.c.h.b16 %v634
        %v936 = vunpack.c.l.b16 %v635
        %v937 = vunpack.c.h.b16 %v635
        %v938 = vunpack.c.l.b16 %v636
        %v939 = vunpack.c.h.b16 %v636
        %v940 = vunpack.c.l.b16 %v637
        %v941 = vunpack.c.h.b16 %v637
        %v942 = vunpack.c.l.b16 %v638
        %v943 = vunpack.c.h.b16 %v638
        %v944 = vunpack.c.l.b16 %v639
        %v945 = vunpack.c.h.b16 %v639
        %v946 = vunpack.c.l.b16 %v640
        %v947 = vunpack.c.h.b16 %v640
        %v948 = vunpack.c.l.b16 %v641
        %v949 = vunpack.c.h.b16 %v641
        %v950 = vunpack.c.l.b16 %v642
        %v951 = vunpack.c.h.b16 %v642
        %v952 = vunpack.c.l.b16 %v643
        %v953 = vunpack.c.h.b16 %v643
        %v954 = vunpack.c.l.b16 %v644
        %v955 = vunpack.c.h.b16 %v644
        %v956 = vunpack.c.l.b16 %v645
        %v957 = vunpack.c.h.b16 %v645
        %v958 = vunpack.c.l.b16 %v646
        %v959 = vunpack.c.h.b16 %v646
        %v960 = vunpack.c.l.b16 %v647
        %v961 = vunpack.c.h.b16 %v647
        %v962 = vunpack.c.l.b16 %v648
        %v963 = vunpack.c.h.b16 %v648
        %v964 = vunpack.c.l.b16 %v649
        %v965 = vunpack.c.h.b16 %v649
        %v966 = vunpack.c.l.b16 %v650
        %v967 = vunpack.c.h.b16 %v650
        %v968 = vunpack.c.l.b16 %v651
        %v969 = vunpack.c.h.b16 %v651
        %v970 = vunpack.c.l.b16 %v652
        %v971 = vunpack.c.h.b16 %v652
        %v972 = vunpack.c.l.b16 %v653
        %v973 = vunpack.c.h.b16 %v653
        %v974 = vunpack.c.l.b16 %v654
        %v975 = vunpack.c.h.b16 %v654
        %v976 = vunpack.c.l.b16 %v655
        %v977 = vunpack.c.h.b16 %v655
        %v978 = vunpack.c.l.b16 %v656
        %v979 = vunpack.c.h.b16 %v656
        %v980 = vunpack.c.l.b16 %v657
        %v981 = vunpack.c.h.b16 %v657
        %v982 = vunpack.c.l.b16 %v658
        %v983 = vunpack.c.h.b16 %v658
        %v984 = vunpack.c.l.b16 %v659
        %v985 = vunpack.c.h.b16 %v659
        %v986 = vunpack.c.l.b16 %v660
        %v987 = vunpack.c.h.b16 %v660
        %v988 = vunpack.c.l.b16 %v661
        %v989 = vunpack.c.h.b16 %v661
        %v990 = vunpack.c.l.b16 %v662
        %v991 = vunpack.c.h.b16 %v662
        %v992 = vunpack.c.l.b16 %v663
        %v993 = vunpack.c.h.b16 %v663
        %v994 = vunpack.c.l.b16 %v664
        %v995 = vunpack.c.h.b16 %v664
        %v996 = vunpack.c.l.b16 %v665
        %v997 = vunpack.c.h.b16 %v665
        %v998 = vunpack.c.l.b16 %v666
        %v999 = vunpack.c.h.b16 %v666
        %v1000 = vunpack.c.l.b16 %v667
        %v1001 = vunpack.c.h.b16 %v667
        %v1002 = vunpack.c.l.b16 %v668
        %v1003 = vunpack.c.h.b16 %v668
        %v1004 = vunpack.c.l.b16 %v669
        %v1005 = vunpack.c.h.b16 %v669
        %v1006 = vunpack.c.l.b16 %v670
        %v1007 = vunpack.c.h.b16 %v670
        %v1008 = vunpack.c.l.b16 %v671
        %v1009 = vunpack.c.h.b16 %v671
        %v1010 = vunpack.c.l.b16 %v672
        %v1011 = vunpack.c.h.b16 %v672
        %v1012 = vunpack.c.l.b16 %v673
        %v1013 = vunpack.c.h.b16 %v673
        %v1014 = vunpack.c.l.b16 %v674
        %v1015 = vunpack.c.h.b16 %v674
        %v1016 = vunpack.c.l.b16 %v675
        %v1017 = vunpack.c.h.b16 %v675
        %v1018 = vunpack.c.l.b16 %v676
        %v1019 = vunpack.c.h.b16 %v676
        %v1020 = vunpack.c.l.b16 %v677
        %v1021 = vunpack.c.h.b16 %v677
        %v1022 = vunpack.c.l.b16 %v678
        %v1023 = vunpack.c.h.b16 %v678
        %v1024 = vunpack.c.l.b16 %v679
        %v1025 = vunpack.c.h.b16 %v679
        %v1026 = vunpack.c.l.b16 %v680
        %v1027 = vunpack.c.h.b16 %v680
        %v1028 = vunpack.c.l.b16 %v681
        %v1029 = vunpack.c.h.b16 %v681
        %v1030 = vunpack.c.l.b16 %v682
        %v1031 = vunpack.c.h.b16 %v682
        %v1032 = vunpack.c.l.b16 %v683
        %v1033 = vunpack.c.h.b16 %v683
        %v1034 = vunpack.c.l.b16 %v684
        %v1035 = vunpack.c.h.b16 %v684
        %v1036 = vunpack.c.l.b16 %v685
        %v1037 = vunpack.c.h.b16 %v685
        %v1038 = vunpack.c.l.b16 %v686
        %v1039 = vunpack.c.h.b16 %v686
        %v1040 = vunpack.c.l.b16 %v687
        %v1041 = vunpack.c.h.b16 %v687
        %v1042 = vunpack.c.l.b16 %v688
        %v1043 = vunpack.c.h.b16 %v688
        %v1044 = vunpack.c.l.b16 %v689
        %v1045 = vunpack.c.h.b16 %v689
        %v1046 = vunpack.c.l.b16 %v690
        %v1047 = vunpack.c.h.b16 %v690
        %v1048 = vunpack.c.l.b16 %v691
        %v1049 = vunpack.c.h.b16 %v691
        %v1050 = vpack.c.b16 %v924, %v922
        %v1051 = vpack.c.b16 %v925, %v923
        %v1052 = vpack.c.b16 %v928, %v926
        %v1053 = vpack.c.b16 %v929, %v927
        %v1054 = vpack.c.b16 %v932, %v930
        %v1055 = vpack.c.b16 %v933, %v931
        %v1056 = vpack.c.b16 %v936, %v934
        %v1057 = vpack.c.b16 %v937, %v935
        %v1058 = vpack.c.b16 %v940, %v938
        %v1059 = vpack.c.b16 %v941, %v939
        %v1060 = vpack.c.b16 %v944, %v942
        %v1061 = vpack.c.b16 %v945, %v943
        %v1062 = vpack.c.b16 %v948, %v946
        %v1063 = vpack.c.b16 %v949, %v947
        %v1064 = vpack.c.b16 %v952, %v950
        %v1065 = vpack.c.b16 %v953, %v951
        %v1066 = vpack.c.b16 %v956, %v954
        %v1067 = vpack.c.b16 %v957, %v955
        %v1068 = vpack.c.b16 %v960, %v958
        %v1069 = vpack.c.b16 %v961, %v959
        %v1070 = vpack.c.b16 %v964, %v962
        %v1071 = vpack.c.b16 %v965, %v963
        %v1072 = vpack.c.b16 %v968, %v966
        %v1073 = vpack.c.b16 %v969, %v967
        %v1074 = vpack.c.b16 %v972, %v970
        %v1075 = vpack.c.b16 %v973, %v971
        %v1076 = vpack.c.b16 %v976, %v974
        %v1077 = vpack.c.b16 %v977, %v975
        %v1078 = vpack.c.b16 %v980, %v978
        %v1079 = vpack.c.b16 %v981, %v979
        %v1080 = vpack.c.b16 %v984, %v982
        %v1081 = vpack.c.b16 %v985, %v983
        %v1082 = vpack.c.b16 %v988, %v986
        %v1083 = vpack.c.b16 %v989, %v987
        %v1084 = vpack.c.b16 %v992, %v990
        %v1085 = vpack.c.b16 %v993, %v991
        %v1086 = vpack.c.b16 %v996, %v994
        %v1087 = vpack.c.b16 %v997, %v995
        %v1088 = vpack.c.b16 %v1000, %v998
        %v1089 = vpack.c.b16 %v1001, %v999
        %v1090 = vpack.c.b16 %v1004, %v1002
        %v1091 = vpack.c.b16 %v1005, %v1003
        %v1092 = vpack.c.b16 %v1008, %v1006
        %v1093 = vpack.c.b16 %v1009, %v1007
        %v1094 = vpack.c.b16 %v1012, %v1010
        %v1095 = vpack.c.b16 %v1013, %v1011
        %v1096 = vpack.c.b16 %v1016, %v1014
        %v1097 = vpack.c.b16 %v1017, %v1015
        %v1098 = vpack.c.b16 %v1020, %v1018
        %v1099 = vpack.c.b16 %v1021, %v1019
        %v1100 = vpack.c.b16 %v1024, %v1022
        %v1101 = vpack.c.b16 %v1025, %v1023
        %v1102 = vpack.c.b16 %v1028, %v1026
        %v1103 = vpack.c.b16 %v1029, %v1027
        %v1104 = vpack.c.b16 %v1032, %v1030
        %v1105 = vpack.c.b16 %v1033, %v1031
        %v1106 = vpack.c.b16 %v1036, %v1034
        %v1107 = vpack.c.b16 %v1037, %v1035
        %v1108 = vpack.c.b16 %v1040, %v1038
        %v1109 = vpack.c.b16 %v1041, %v1039
        %v1110 = vpack.c.b16 %v1044, %v1042
        %v1111 = vpack.c.b16 %v1045, %v1043
        %v1112 = vpack.c.b16 %v1048, %v1046
        %v1113 = vpack.c.b16 %v1049, %v1047
        %1178 = vmatpush.bf16.msra.mxu0 %v1064
        %1179 = vmatpush.bf16.msra.mxu0 %v1062
        %1180 = vmatpush.bf16.msra.mxu0 %v1060
        %1181 = vmatpush.bf16.msra.mxu0 %v1058
        %1182 = vmatpush.bf16.msra.mxu0 %v1056
        %1183 = vmatpush.bf16.msra.mxu0 %v1054
        %1184 = vmatpush.bf16.msra.mxu0 %v1052
        %1185 = vmatpush.bf16.msra.mxu0 %v1050
        %1186 = vmatmul.bf16.gmra.mxu0 %v794
        %v1187 = vpop.f32.mrf.mxu0
        %v1188 = vadd.f32 %v694, %v1187
        %v1189 = vpop.f32.mrf.mxu0
        %v1190 = vadd.f32 %v694, %v1189
        %1191 = vmatmul.bf16.gmra.mxu0 %v798
        %v1192 = vpop.f32.mrf.mxu0
        %v1193 = vadd.f32 %v694, %v1192
        %v1194 = vpop.f32.mrf.mxu0
        %v1195 = vadd.f32 %v694, %v1194
        %1196 = vmatmul.bf16.gmra.mxu0 %v802
        %v1197 = vpop.f32.mrf.mxu0
        %v1198 = vadd.f32 %v694, %v1197
        %v1199 = vpop.f32.mrf.mxu0
        %v1200 = vadd.f32 %v694, %v1199
        %1201 = vmatmul.bf16.gmra.mxu0 %v806
        %v1202 = vpop.f32.mrf.mxu0
        %v1203 = vadd.f32 %v694, %v1202
        %v1204 = vpop.f32.mrf.mxu0
        %v1205 = vadd.f32 %v694, %v1204
        %1206 = vmatmul.bf16.gmra.mxu0 %v810
        %v1207 = vpop.f32.mrf.mxu0
        %v1208 = vadd.f32 %v694, %v1207
        %v1209 = vpop.f32.mrf.mxu0
        %v1210 = vadd.f32 %v694, %v1209
        %1211 = vmatmul.bf16.gmra.mxu0 %v814
        %v1212 = vpop.f32.mrf.mxu0
        %v1213 = vadd.f32 %v694, %v1212
        %v1214 = vpop.f32.mrf.mxu0
        %v1215 = vadd.f32 %v694, %v1214
        %1216 = vmatmul.bf16.gmra.mxu0 %v818
        %v1217 = vpop.f32.mrf.mxu0
        %v1218 = vadd.f32 %v694, %v1217
        %v1219 = vpop.f32.mrf.mxu0
        %v1220 = vadd.f32 %v694, %v1219
        %1221 = vmatmul.bf16.gmra.mxu0 %v822
        %v1222 = vpop.f32.mrf.mxu0
        %v1223 = vadd.f32 %v694, %v1222
        %v1224 = vpop.f32.mrf.mxu0
        %v1225 = vadd.f32 %v694, %v1224
        %1226 = vdwg.mxu0
        %1227 = vmatpush.bf16.msra.mxu0 %v1080
        %1228 = vmatpush.bf16.msra.mxu0 %v1078
        %1229 = vmatpush.bf16.msra.mxu0 %v1076
        %1230 = vmatpush.bf16.msra.mxu0 %v1074
        %1231 = vmatpush.bf16.msra.mxu0 %v1072
        %1232 = vmatpush.bf16.msra.mxu0 %v1070
        %1233 = vmatpush.bf16.msra.mxu0 %v1068
        %1234 = vmatpush.bf16.msra.mxu0 %v1066
        %1235 = vmatmul.bf16.gmra.mxu0 %v795
        %v1236 = vpop.f32.mrf.mxu0
        %v1237 = vadd.f32 %v1188, %v1236
        %v1238 = vpop.f32.mrf.mxu0
        %v1239 = vadd.f32 %v1190, %v1238
        %1240 = vmatmul.bf16.gmra.mxu0 %v799
        %v1241 = vpop.f32.mrf.mxu0
        %v1242 = vadd.f32 %v1193, %v1241
        %v1243 = vpop.f32.mrf.mxu0
        %v1244 = vadd.f32 %v1195, %v1243
        %1245 = vmatmul.bf16.gmra.mxu0 %v803
        %v1246 = vpop.f32.mrf.mxu0
        %v1247 = vadd.f32 %v1198, %v1246
        %v1248 = vpop.f32.mrf.mxu0
        %v1249 = vadd.f32 %v1200, %v1248
        %1250 = vmatmul.bf16.gmra.mxu0 %v807
        %v1251 = vpop.f32.mrf.mxu0
        %v1252 = vadd.f32 %v1203, %v1251
        %v1253 = vpop.f32.mrf.mxu0
        %v1254 = vadd.f32 %v1205, %v1253
        %1255 = vmatmul.bf16.gmra.mxu0 %v811
        %v1256 = vpop.f32.mrf.mxu0
        %v1257 = vadd.f32 %v1208, %v1256
        %v1258 = vpop.f32.mrf.mxu0
        %v1259 = vadd.f32 %v1210, %v1258
        %1260 = vmatmul.bf16.gmra.mxu0 %v815
        %v1261 = vpop.f32.mrf.mxu0
        %v1262 = vadd.f32 %v1213, %v1261
        %v1263 = vpop.f32.mrf.mxu0
        %v1264 = vadd.f32 %v1215, %v1263
        %1265 = vmatmul.bf16.gmra.mxu0 %v819
        %v1266 = vpop.f32.mrf.mxu0
        %v1267 = vadd.f32 %v1218, %v1266
        %v1268 = vpop.f32.mrf.mxu0
        %v1269 = vadd.f32 %v1220, %v1268
        %1270 = vmatmul.bf16.gmra.mxu0 %v823
        %v1271 = vpop.f32.mrf.mxu0
        %v1272 = vadd.f32 %v1223, %v1271
        %v1273 = vpop.f32.mrf.mxu0
        %v1274 = vadd.f32 %v1225, %v1273
        %1275 = vdwg.mxu0
        %1276 = vmatpush.bf16.msra.mxu0 %v1096
        %1277 = vmatpush.bf16.msra.mxu0 %v1094
        %1278 = vmatpush.bf16.msra.mxu0 %v1092
        %1279 = vmatpush.bf16.msra.mxu0 %v1090
        %1280 = vmatpush.bf16.msra.mxu0 %v1088
        %1281 = vmatpush.bf16.msra.mxu0 %v1086
        %1282 = vmatpush.bf16.msra.mxu0 %v1084
        %1283 = vmatpush.bf16.msra.mxu0 %v1082
        %1284 = vmatmul.bf16.gmra.mxu0 %v796
        %v1285 = vpop.f32.mrf.mxu0
        %v1286 = vadd.f32 %v1237, %v1285
        %v1287 = vpop.f32.mrf.mxu0
        %v1288 = vadd.f32 %v1239, %v1287
        %1289 = vmatmul.bf16.gmra.mxu0 %v800
        %v1290 = vpop.f32.mrf.mxu0
        %v1291 = vadd.f32 %v1242, %v1290
        %v1292 = vpop.f32.mrf.mxu0
        %v1293 = vadd.f32 %v1244, %v1292
        %1294 = vmatmul.bf16.gmra.mxu0 %v804
        %v1295 = vpop.f32.mrf.mxu0
        %v1296 = vadd.f32 %v1247, %v1295
        %v1297 = vpop.f32.mrf.mxu0
        %v1298 = vadd.f32 %v1249, %v1297
        %1299 = vmatmul.bf16.gmra.mxu0 %v808
        %v1300 = vpop.f32.mrf.mxu0
        %v1301 = vadd.f32 %v1252, %v1300
        %v1302 = vpop.f32.mrf.mxu0
        %v1303 = vadd.f32 %v1254, %v1302
        %1304 = vmatmul.bf16.gmra.mxu0 %v812
        %v1305 = vpop.f32.mrf.mxu0
        %v1306 = vadd.f32 %v1257, %v1305
        %v1307 = vpop.f32.mrf.mxu0
        %v1308 = vadd.f32 %v1259, %v1307
        %1309 = vmatmul.bf16.gmra.mxu0 %v816
        %v1310 = vpop.f32.mrf.mxu0
        %v1311 = vadd.f32 %v1262, %v1310
        %v1312 = vpop.f32.mrf.mxu0
        %v1313 = vadd.f32 %v1264, %v1312
        %1314 = vmatmul.bf16.gmra.mxu0 %v820
        %v1315 = vpop.f32.mrf.mxu0
        %v1316 = vadd.f32 %v1267, %v1315
        %v1317 = vpop.f32.mrf.mxu0
        %v1318 = vadd.f32 %v1269, %v1317
        %1319 = vmatmul.bf16.gmra.mxu0 %v824
        %v1320 = vpop.f32.mrf.mxu0
        %v1321 = vadd.f32 %v1272, %v1320
        %v1322 = vpop.f32.mrf.mxu0
        %v1323 = vadd.f32 %v1274, %v1322
        %1324 = vdwg.mxu0
        %1325 = vmatpush.bf16.msra.mxu0 %v1112
        %1326 = vmatpush.bf16.msra.mxu0 %v1110
        %1327 = vmatpush.bf16.msra.mxu0 %v1108
        %1328 = vmatpush.bf16.msra.mxu0 %v1106
        %1329 = vmatpush.bf16.msra.mxu0 %v1104
        %1330 = vmatpush.bf16.msra.mxu0 %v1102
        %1331 = vmatpush.bf16.msra.mxu0 %v1100
        %1332 = vmatpush.bf16.msra.mxu0 %v1098
        %1333 = vmatmul.bf16.gmra.mxu0 %v797
        %v1334 = vpop.f32.mrf.mxu0
        %v1335 = vadd.f32 %v1286, %v1334
        %v1336 = vpop.f32.mrf.mxu0
        %v1337 = vadd.f32 %v1288, %v1336
        %1338 = vmatmul.bf16.gmra.mxu0 %v801
        %v1339 = vpop.f32.mrf.mxu0
        %v1340 = vadd.f32 %v1291, %v1339
        %v1341 = vpop.f32.mrf.mxu0
        %v1342 = vadd.f32 %v1293, %v1341
        %1343 = vmatmul.bf16.gmra.mxu0 %v805
        %v1344 = vpop.f32.mrf.mxu0
        %v1345 = vadd.f32 %v1296, %v1344
        %v1346 = vpop.f32.mrf.mxu0
        %v1347 = vadd.f32 %v1298, %v1346
        %1348 = vmatmul.bf16.gmra.mxu0 %v809
        %v1349 = vpop.f32.mrf.mxu0
        %v1350 = vadd.f32 %v1301, %v1349
        %v1351 = vpop.f32.mrf.mxu0
        %v1352 = vadd.f32 %v1303, %v1351
        %1353 = vmatmul.bf16.gmra.mxu0 %v813
        %v1354 = vpop.f32.mrf.mxu0
        %v1355 = vadd.f32 %v1306, %v1354
        %v1356 = vpop.f32.mrf.mxu0
        %v1357 = vadd.f32 %v1308, %v1356
        %1358 = vmatmul.bf16.gmra.mxu0 %v817
        %v1359 = vpop.f32.mrf.mxu0
        %v1360 = vadd.f32 %v1311, %v1359
        %v1361 = vpop.f32.mrf.mxu0
        %v1362 = vadd.f32 %v1313, %v1361
        %1363 = vmatmul.bf16.gmra.mxu0 %v821
        %v1364 = vpop.f32.mrf.mxu0
        %v1365 = vadd.f32 %v1316, %v1364
        %v1366 = vpop.f32.mrf.mxu0
        %v1367 = vadd.f32 %v1318, %v1366
        %1368 = vmatmul.bf16.gmra.mxu0 %v825
        %v1369 = vpop.f32.mrf.mxu0
        %v1370 = vadd.f32 %v1321, %v1369
        %v1371 = vpop.f32.mrf.mxu0
        %v1372 = vadd.f32 %v1323, %v1371
        %1373 = vdwg.mxu0
        %1374 = vmatpush.bf16.msra.mxu0 %v1065
        %1375 = vmatpush.bf16.msra.mxu0 %v1063
        %1376 = vmatpush.bf16.msra.mxu0 %v1061
        %1377 = vmatpush.bf16.msra.mxu0 %v1059
        %1378 = vmatpush.bf16.msra.mxu0 %v1057
        %1379 = vmatpush.bf16.msra.mxu0 %v1055
        %1380 = vmatpush.bf16.msra.mxu0 %v1053
        %1381 = vmatpush.bf16.msra.mxu0 %v1051
        %1382 = vmatmul.bf16.gmra.mxu0 %v794
        %v1383 = vpop.f32.mrf.mxu0
        %v1384 = vadd.f32 %v695, %v1383
        %v1385 = vpop.f32.mrf.mxu0
        %v1386 = vadd.f32 %v695, %v1385
        %1387 = vmatmul.bf16.gmra.mxu0 %v798
        %v1388 = vpop.f32.mrf.mxu0
        %v1389 = vadd.f32 %v695, %v1388
        %v1390 = vpop.f32.mrf.mxu0
        %v1391 = vadd.f32 %v695, %v1390
        %1392 = vmatmul.bf16.gmra.mxu0 %v802
        %v1393 = vpop.f32.mrf.mxu0
        %v1394 = vadd.f32 %v695, %v1393
        %v1395 = vpop.f32.mrf.mxu0
        %v1396 = vadd.f32 %v695, %v1395
        %1397 = vmatmul.bf16.gmra.mxu0 %v806
        %v1398 = vpop.f32.mrf.mxu0
        %v1399 = vadd.f32 %v695, %v1398
        %v1400 = vpop.f32.mrf.mxu0
        %v1401 = vadd.f32 %v695, %v1400
        %1402 = vmatmul.bf16.gmra.mxu0 %v810
        %v1403 = vpop.f32.mrf.mxu0
        %v1404 = vadd.f32 %v695, %v1403
        %v1405 = vpop.f32.mrf.mxu0
        %v1406 = vadd.f32 %v695, %v1405
        %1407 = vmatmul.bf16.gmra.mxu0 %v814
        %v1408 = vpop.f32.mrf.mxu0
        %v1409 = vadd.f32 %v695, %v1408
        %v1410 = vpop.f32.mrf.mxu0
        %v1411 = vadd.f32 %v695, %v1410
        %1412 = vmatmul.bf16.gmra.mxu0 %v818
        %v1413 = vpop.f32.mrf.mxu0
        %v1414 = vadd.f32 %v695, %v1413
        %v1415 = vpop.f32.mrf.mxu0
        %v1416 = vadd.f32 %v695, %v1415
        %1417 = vmatmul.bf16.gmra.mxu0 %v822
        %v1418 = vpop.f32.mrf.mxu0
        %v1419 = vadd.f32 %v695, %v1418
        %v1420 = vpop.f32.mrf.mxu0
        %v1421 = vadd.f32 %v695, %v1420
        %1422 = vdwg.mxu0
        %1423 = vmatpush.bf16.msra.mxu0 %v1081
        %1424 = vmatpush.bf16.msra.mxu0 %v1079
        %1425 = vmatpush.bf16.msra.mxu0 %v1077
        %1426 = vmatpush.bf16.msra.mxu0 %v1075
        %1427 = vmatpush.bf16.msra.mxu0 %v1073
        %1428 = vmatpush.bf16.msra.mxu0 %v1071
        %1429 = vmatpush.bf16.msra.mxu0 %v1069
        %1430 = vmatpush.bf16.msra.mxu0 %v1067
        %1431 = vmatmul.bf16.gmra.mxu0 %v795
        %v1432 = vpop.f32.mrf.mxu0
        %v1433 = vadd.f32 %v1384, %v1432
        %v1434 = vpop.f32.mrf.mxu0
        %v1435 = vadd.f32 %v1386, %v1434
        %1436 = vmatmul.bf16.gmra.mxu0 %v799
        %v1437 = vpop.f32.mrf.mxu0
        %v1438 = vadd.f32 %v1389, %v1437
        %v1439 = vpop.f32.mrf.mxu0
        %v1440 = vadd.f32 %v1391, %v1439
        %1441 = vmatmul.bf16.gmra.mxu0 %v803
        %v1442 = vpop.f32.mrf.mxu0
        %v1443 = vadd.f32 %v1394, %v1442
        %v1444 = vpop.f32.mrf.mxu0
        %v1445 = vadd.f32 %v1396, %v1444
        %1446 = vmatmul.bf16.gmra.mxu0 %v807
        %v1447 = vpop.f32.mrf.mxu0
        %v1448 = vadd.f32 %v1399, %v1447
        %v1449 = vpop.f32.mrf.mxu0
        %v1450 = vadd.f32 %v1401, %v1449
        %1451 = vmatmul.bf16.gmra.mxu0 %v811
        %v1452 = vpop.f32.mrf.mxu0
        %v1453 = vadd.f32 %v1404, %v1452
        %v1454 = vpop.f32.mrf.mxu0
        %v1455 = vadd.f32 %v1406, %v1454
        %1456 = vmatmul.bf16.gmra.mxu0 %v815
        %v1457 = vpop.f32.mrf.mxu0
        %v1458 = vadd.f32 %v1409, %v1457
        %v1459 = vpop.f32.mrf.mxu0
        %v1460 = vadd.f32 %v1411, %v1459
        %1461 = vmatmul.bf16.gmra.mxu0 %v819
        %v1462 = vpop.f32.mrf.mxu0
        %v1463 = vadd.f32 %v1414, %v1462
        %v1464 = vpop.f32.mrf.mxu0
        %v1465 = vadd.f32 %v1416, %v1464
        %1466 = vmatmul.bf16.gmra.mxu0 %v823
        %v1467 = vpop.f32.mrf.mxu0
        %v1468 = vadd.f32 %v1419, %v1467
        %v1469 = vpop.f32.mrf.mxu0
        %v1470 = vadd.f32 %v1421, %v1469
        %1471 = vdwg.mxu0
        %1472 = vmatpush.bf16.msra.mxu0 %v1097
        %1473 = vmatpush.bf16.msra.mxu0 %v1095
        %1474 = vmatpush.bf16.msra.mxu0 %v1093
        %1475 = vmatpush.bf16.msra.mxu0 %v1091
        %1476 = vmatpush.bf16.msra.mxu0 %v1089
        %1477 = vmatpush.bf16.msra.mxu0 %v1087
        %1478 = vmatpush.bf16.msra.mxu0 %v1085
        %1479 = vmatpush.bf16.msra.mxu0 %v1083
        %1480 = vmatmul.bf16.gmra.mxu0 %v796
        %v1481 = vpop.f32.mrf.mxu0
        %v1482 = vadd.f32 %v1433, %v1481
        %v1483 = vpop.f32.mrf.mxu0
        %v1484 = vadd.f32 %v1435, %v1483
        %1485 = vmatmul.bf16.gmra.mxu0 %v800
        %v1486 = vpop.f32.mrf.mxu0
        %v1487 = vadd.f32 %v1438, %v1486
        %v1488 = vpop.f32.mrf.mxu0
        %v1489 = vadd.f32 %v1440, %v1488
        %1490 = vmatmul.bf16.gmra.mxu0 %v804
        %v1491 = vpop.f32.mrf.mxu0
        %v1492 = vadd.f32 %v1443, %v1491
        %v1493 = vpop.f32.mrf.mxu0
        %v1494 = vadd.f32 %v1445, %v1493
        %1495 = vmatmul.bf16.gmra.mxu0 %v808
        %v1496 = vpop.f32.mrf.mxu0
        %v1497 = vadd.f32 %v1448, %v1496
        %v1498 = vpop.f32.mrf.mxu0
        %v1499 = vadd.f32 %v1450, %v1498
        %1500 = vmatmul.bf16.gmra.mxu0 %v812
        %v1501 = vpop.f32.mrf.mxu0
        %v1502 = vadd.f32 %v1453, %v1501
        %v1503 = vpop.f32.mrf.mxu0
        %v1504 = vadd.f32 %v1455, %v1503
        %1505 = vmatmul.bf16.gmra.mxu0 %v816
        %v1506 = vpop.f32.mrf.mxu0
        %v1507 = vadd.f32 %v1458, %v1506
        %v1508 = vpop.f32.mrf.mxu0
        %v1509 = vadd.f32 %v1460, %v1508
        %1510 = vmatmul.bf16.gmra.mxu0 %v820
        %v1511 = vpop.f32.mrf.mxu0
        %v1512 = vadd.f32 %v1463, %v1511
        %v1513 = vpop.f32.mrf.mxu0
        %v1514 = vadd.f32 %v1465, %v1513
        %1515 = vmatmul.bf16.gmra.mxu0 %v824
        %v1516 = vpop.f32.mrf.mxu0
        %v1517 = vadd.f32 %v1468, %v1516
        %v1518 = vpop.f32.mrf.mxu0
        %v1519 = vadd.f32 %v1470, %v1518
        %1520 = vdwg.mxu0
        %1521 = vmatpush.bf16.msra.mxu0 %v1113
        %1522 = vmatpush.bf16.msra.mxu0 %v1111
        %1523 = vmatpush.bf16.msra.mxu0 %v1109
        %1524 = vmatpush.bf16.msra.mxu0 %v1107
        %1525 = vmatpush.bf16.msra.mxu0 %v1105
        %1526 = vmatpush.bf16.msra.mxu0 %v1103
        %1527 = vmatpush.bf16.msra.mxu0 %v1101
        %1528 = vmatpush.bf16.msra.mxu0 %v1099
        %1529 = vmatmul.bf16.gmra.mxu0 %v797
        %v1530 = vpop.f32.mrf.mxu0
        %v1531 = vadd.f32 %v1482, %v1530
        %v1532 = vpop.f32.mrf.mxu0
        %v1533 = vadd.f32 %v1484, %v1532
        %1534 = vmatmul.bf16.gmra.mxu0 %v801
        %v1535 = vpop.f32.mrf.mxu0
        %v1536 = vadd.f32 %v1487, %v1535
        %v1537 = vpop.f32.mrf.mxu0
        %v1538 = vadd.f32 %v1489, %v1537
        %1539 = vmatmul.bf16.gmra.mxu0 %v805
        %v1540 = vpop.f32.mrf.mxu0
        %v1541 = vadd.f32 %v1492, %v1540
        %v1542 = vpop.f32.mrf.mxu0
        %v1543 = vadd.f32 %v1494, %v1542
        %1544 = vmatmul.bf16.gmra.mxu0 %v809
        %v1545 = vpop.f32.mrf.mxu0
        %v1546 = vadd.f32 %v1497, %v1545
        %v1547 = vpop.f32.mrf.mxu0
        %v1548 = vadd.f32 %v1499, %v1547
        %1549 = vmatmul.bf16.gmra.mxu0 %v813
        %v1550 = vpop.f32.mrf.mxu0
        %v1551 = vadd.f32 %v1502, %v1550
        %v1552 = vpop.f32.mrf.mxu0
        %v1553 = vadd.f32 %v1504, %v1552
        %1554 = vmatmul.bf16.gmra.mxu0 %v817
        %v1555 = vpop.f32.mrf.mxu0
        %v1556 = vadd.f32 %v1507, %v1555
        %v1557 = vpop.f32.mrf.mxu0
        %v1558 = vadd.f32 %v1509, %v1557
        %1559 = vmatmul.bf16.gmra.mxu0 %v821
        %v1560 = vpop.f32.mrf.mxu0
        %v1561 = vadd.f32 %v1512, %v1560
        %v1562 = vpop.f32.mrf.mxu0
        %v1563 = vadd.f32 %v1514, %v1562
        %1564 = vmatmul.bf16.gmra.mxu0 %v825
        %v1565 = vpop.f32.mrf.mxu0
        %v1566 = vadd.f32 %v1517, %v1565
        %v1567 = vpop.f32.mrf.mxu0
        %v1568 = vadd.f32 %v1519, %v1567
        %1569 = vdwg.mxu0
        %v1570 = vtanh.pop %v1335
        %v1571 = vtanh.pop %v1531
        %v1572 = vtanh.pop %v1337
        %v1573 = vtanh.pop %v1533
        %v1574 = vtanh.pop %v1340
        %v1575 = vtanh.pop %v1536
        %v1576 = vtanh.pop %v1342
        %v1577 = vtanh.pop %v1538
        %v1578 = vtanh.pop %v1345
        %v1579 = vtanh.pop %v1541
        %v1580 = vtanh.pop %v1347
        %v1581 = vtanh.pop %v1543
        %v1582 = vtanh.pop %v1350
        %v1583 = vtanh.pop %v1546
        %v1584 = vtanh.pop %v1352
        %v1585 = vtanh.pop %v1548
        %v1586 = vtanh.pop %v1355
        %v1587 = vtanh.pop %v1551
        %v1588 = vtanh.pop %v1357
        %v1589 = vtanh.pop %v1553
        %v1590 = vtanh.pop %v1360
        %v1591 = vtanh.pop %v1556
        %v1592 = vtanh.pop %v1362
        %v1593 = vtanh.pop %v1558
        %v1594 = vtanh.pop %v1365
        %v1595 = vtanh.pop %v1561
        %v1596 = vtanh.pop %v1367
        %v1597 = vtanh.pop %v1563
        %v1598 = vtanh.pop %v1370
        %v1599 = vtanh.pop %v1566
        %v1600 = vtanh.pop %v1372
        %v1601 = vtanh.pop %v1568
        %v1602 = vpack.c.bf16 %v1572, %v1570
        %v1603 = vpack.c.bf16 %v1573, %v1571
        %v1604 = vpack.c.bf16 %v1576, %v1574
        %v1605 = vpack.c.bf16 %v1577, %v1575
        %v1606 = vpack.c.bf16 %v1580, %v1578
        %v1607 = vpack.c.bf16 %v1581, %v1579
        %v1608 = vpack.c.bf16 %v1584, %v1582
        %v1609 = vpack.c.bf16 %v1585, %v1583
        %v1610 = vpack.c.bf16 %v1588, %v1586
        %v1611 = vpack.c.bf16 %v1589, %v1587
        %v1612 = vpack.c.bf16 %v1592, %v1590
        %v1613 = vpack.c.bf16 %v1593, %v1591
        %v1614 = vpack.c.bf16 %v1596, %v1594
        %v1615 = vpack.c.bf16 %v1597, %v1595
        %v1616 = vpack.c.bf16 %v1600, %v1598
        %v1617 = vpack.c.bf16 %v1601, %v1599
        %v1618 = vld [vmem:[#allocation8] sm:$0xf]
        %v1619 = vld [vmem:[#allocation8 + $0x4] sm:$0xf]
        %v1620 = vld [vmem:[#allocation8 + $0x8] sm:$0xf]
        %v1621 = vld [vmem:[#allocation8 + $0xc] sm:$0xf]
        %v1622 = vld [vmem:[#allocation8 + $0x10] sm:$0xf]
        %v1623 = vld [vmem:[#allocation8 + $0x14] sm:$0xf]
        %v1624 = vld [vmem:[#allocation8 + $0x18] sm:$0xf]
        %v1625 = vld [vmem:[#allocation8 + $0x1c] sm:$0xf]
        %v1626 = vld [vmem:[#allocation8 + $0x20] sm:$0xf]
        %v1627 = vld [vmem:[#allocation8 + $0x24] sm:$0xf]
        %v1628 = vld [vmem:[#allocation8 + $0x28] sm:$0xf]
        %v1629 = vld [vmem:[#allocation8 + $0x2c] sm:$0xf]
        %v1630 = vld [vmem:[#allocation8 + $0x30] sm:$0xf]
        %v1631 = vld [vmem:[#allocation8 + $0x34] sm:$0xf]
        %v1632 = vld [vmem:[#allocation8 + $0x38] sm:$0xf]
        %v1633 = vld [vmem:[#allocation8 + $0x3c] sm:$0xf]
        %v1634 = vld [vmem:[#allocation8 + $0x40] sm:$0xf]
        %v1635 = vld [vmem:[#allocation8 + $0x44] sm:$0xf]
        %v1636 = vld [vmem:[#allocation8 + $0x48] sm:$0xf]
        %v1637 = vld [vmem:[#allocation8 + $0x4c] sm:$0xf]
        %v1638 = vld [vmem:[#allocation8 + $0x50] sm:$0xf]
        %v1639 = vld [vmem:[#allocation8 + $0x54] sm:$0xf]
        %v1640 = vld [vmem:[#allocation8 + $0x58] sm:$0xf]
        %v1641 = vld [vmem:[#allocation8 + $0x5c] sm:$0xf]
        %v1642 = vld [vmem:[#allocation8 + $0x60] sm:$0xf]
        %v1643 = vld [vmem:[#allocation8 + $0x64] sm:$0xf]
        %v1644 = vld [vmem:[#allocation8 + $0x68] sm:$0xf]
        %v1645 = vld [vmem:[#allocation8 + $0x6c] sm:$0xf]
        %v1646 = vld [vmem:[#allocation8 + $0x70] sm:$0xf]
        %v1647 = vld [vmem:[#allocation8 + $0x74] sm:$0xf]
        %v1648 = vld [vmem:[#allocation8 + $0x78] sm:$0xf]
        %v1649 = vld [vmem:[#allocation8 + $0x7c] sm:$0xf]
        %v1650 = vld [vmem:[%s5] sm:$0x1]
        %v1652 = vperm.slane %v1650, 0
        %v1686 = vunpack.c.l.b16 %v1618
        %v1687 = vunpack.c.l.b16 %v1619
        %v1688 = vunpack.c.l.b16 %v1620
        %v1689 = vunpack.c.l.b16 %v1621
        %v1690 = vunpack.c.l.b16 %v1622
        %v1691 = vunpack.c.l.b16 %v1623
        %v1692 = vunpack.c.l.b16 %v1624
        %v1693 = vunpack.c.l.b16 %v1625
        %v1694 = vunpack.c.l.b16 %v1626
        %v1695 = vunpack.c.l.b16 %v1627
        %v1696 = vunpack.c.l.b16 %v1628
        %v1697 = vunpack.c.l.b16 %v1629
        %v1698 = vunpack.c.l.b16 %v1630
        %v1699 = vunpack.c.l.b16 %v1631
        %v1700 = vunpack.c.l.b16 %v1632
        %v1701 = vunpack.c.l.b16 %v1633
        %v1702 = vunpack.c.l.b16 %v1634
        %v1703 = vunpack.c.l.b16 %v1635
        %v1704 = vunpack.c.l.b16 %v1636
        %v1705 = vunpack.c.l.b16 %v1637
        %v1706 = vunpack.c.l.b16 %v1638
        %v1707 = vunpack.c.l.b16 %v1639
        %v1708 = vunpack.c.l.b16 %v1640
        %v1709 = vunpack.c.l.b16 %v1641
        %v1710 = vunpack.c.l.b16 %v1642
        %v1711 = vunpack.c.l.b16 %v1643
        %v1712 = vunpack.c.l.b16 %v1644
        %v1713 = vunpack.c.l.b16 %v1645
        %v1714 = vunpack.c.l.b16 %v1646
        %v1715 = vunpack.c.l.b16 %v1647
        %v1716 = vunpack.c.l.b16 %v1648
        %v1717 = vunpack.c.l.b16 %v1649
        %v1718 = vpack.c.b16 %v1687, %v1686
        %v1719 = vpack.c.b16 %v1689, %v1688
        %v1720 = vpack.c.b16 %v1691, %v1690
        %v1721 = vpack.c.b16 %v1693, %v1692
        %v1722 = vpack.c.b16 %v1695, %v1694
        %v1723 = vpack.c.b16 %v1697, %v1696
        %v1724 = vpack.c.b16 %v1699, %v1698
        %v1725 = vpack.c.b16 %v1701, %v1700
        %v1726 = vpack.c.b16 %v1703, %v1702
        %v1727 = vpack.c.b16 %v1705, %v1704
        %v1728 = vpack.c.b16 %v1707, %v1706
        %v1729 = vpack.c.b16 %v1709, %v1708
        %v1730 = vpack.c.b16 %v1711, %v1710
        %v1731 = vpack.c.b16 %v1713, %v1712
        %v1732 = vpack.c.b16 %v1715, %v1714
        %v1733 = vpack.c.b16 %v1717, %v1716
        %1750 = vmatpush.bf16.msra.mxu0 %v1725
        %1751 = vmatpush.bf16.msra.mxu0 %v1724
        %1752 = vmatpush.bf16.msra.mxu0 %v1723
        %1753 = vmatpush.bf16.msra.mxu0 %v1722
        %1754 = vmatpush.bf16.msra.mxu0 %v1721
        %1755 = vmatpush.bf16.msra.mxu0 %v1720
        %1756 = vmatpush.bf16.msra.mxu0 %v1719
        %1757 = vmatpush.bf16.msra.mxu0 %v1718
        %1758 = vmatmul.bf16.gmra.mxu0 %v1602
        %v1759 = vpop.f32.mrf.mxu0
        %v1760 = vadd.f32 %v1652, %v1759
        %v1761 = vpop.f32.mrf.mxu0
        %v1762 = vadd.f32 %v1652, %v1761
        %1763 = vmatmul.bf16.gmra.mxu0 %v1604
        %v1764 = vpop.f32.mrf.mxu0
        %v1765 = vadd.f32 %v1652, %v1764
        %v1766 = vpop.f32.mrf.mxu0
        %v1767 = vadd.f32 %v1652, %v1766
        %1768 = vmatmul.bf16.gmra.mxu0 %v1606
        %v1769 = vpop.f32.mrf.mxu0
        %v1770 = vadd.f32 %v1652, %v1769
        %v1771 = vpop.f32.mrf.mxu0
        %v1772 = vadd.f32 %v1652, %v1771
        %1773 = vmatmul.bf16.gmra.mxu0 %v1608
        %v1774 = vpop.f32.mrf.mxu0
        %v1775 = vadd.f32 %v1652, %v1774
        %v1776 = vpop.f32.mrf.mxu0
        %v1777 = vadd.f32 %v1652, %v1776
        %1778 = vmatmul.bf16.gmra.mxu0 %v1610
        %v1779 = vpop.f32.mrf.mxu0
        %v1780 = vadd.f32 %v1652, %v1779
        %v1781 = vpop.f32.mrf.mxu0
        %v1782 = vadd.f32 %v1652, %v1781
        %1783 = vmatmul.bf16.gmra.mxu0 %v1612
        %v1784 = vpop.f32.mrf.mxu0
        %v1785 = vadd.f32 %v1652, %v1784
        %v1786 = vpop.f32.mrf.mxu0
        %v1787 = vadd.f32 %v1652, %v1786
        %1788 = vmatmul.bf16.gmra.mxu0 %v1614
        %v1789 = vpop.f32.mrf.mxu0
        %v1790 = vadd.f32 %v1652, %v1789
        %v1791 = vpop.f32.mrf.mxu0
        %v1792 = vadd.f32 %v1652, %v1791
        %1793 = vmatmul.bf16.gmra.mxu0 %v1616
        %v1794 = vpop.f32.mrf.mxu0
        %v1795 = vadd.f32 %v1652, %v1794
        %v1796 = vpop.f32.mrf.mxu0
        %v1797 = vadd.f32 %v1652, %v1796
        %1798 = vdwg.mxu0
        %1799 = vmatpush.bf16.msra.mxu0 %v1733
        %1800 = vmatpush.bf16.msra.mxu0 %v1732
        %1801 = vmatpush.bf16.msra.mxu0 %v1731
        %1802 = vmatpush.bf16.msra.mxu0 %v1730
        %1803 = vmatpush.bf16.msra.mxu0 %v1729
        %1804 = vmatpush.bf16.msra.mxu0 %v1728
        %1805 = vmatpush.bf16.msra.mxu0 %v1727
        %1806 = vmatpush.bf16.msra.mxu0 %v1726
        %1807 = vmatmul.bf16.gmra.mxu0 %v1603
        %v1808 = vpop.f32.mrf.mxu0
        %v1809 = vadd.f32 %v1760, %v1808
        %v1810 = vpop.f32.mrf.mxu0
        %v1811 = vadd.f32 %v1762, %v1810
        %1812 = vmatmul.bf16.gmra.mxu0 %v1605
        %v1813 = vpop.f32.mrf.mxu0
        %v1814 = vadd.f32 %v1765, %v1813
        %v1815 = vpop.f32.mrf.mxu0
        %v1816 = vadd.f32 %v1767, %v1815
        %1817 = vmatmul.bf16.gmra.mxu0 %v1607
        %v1818 = vpop.f32.mrf.mxu0
        %v1819 = vadd.f32 %v1770, %v1818
        %v1820 = vpop.f32.mrf.mxu0
        %v1821 = vadd.f32 %v1772, %v1820
        %1822 = vmatmul.bf16.gmra.mxu0 %v1609
        %v1823 = vpop.f32.mrf.mxu0
        %v1824 = vadd.f32 %v1775, %v1823
        %v1825 = vpop.f32.mrf.mxu0
        %v1826 = vadd.f32 %v1777, %v1825
        %1827 = vmatmul.bf16.gmra.mxu0 %v1611
        %v1828 = vpop.f32.mrf.mxu0
        %v1829 = vadd.f32 %v1780, %v1828
        %v1830 = vpop.f32.mrf.mxu0
        %v1831 = vadd.f32 %v1782, %v1830
        %1832 = vmatmul.bf16.gmra.mxu0 %v1613
        %v1833 = vpop.f32.mrf.mxu0
        %v1834 = vadd.f32 %v1785, %v1833
        %v1835 = vpop.f32.mrf.mxu0
        %v1836 = vadd.f32 %v1787, %v1835
        %1837 = vmatmul.bf16.gmra.mxu0 %v1615
        %v1838 = vpop.f32.mrf.mxu0
        %v1839 = vadd.f32 %v1790, %v1838
        %v1840 = vpop.f32.mrf.mxu0
        %v1841 = vadd.f32 %v1792, %v1840
        %1842 = vmatmul.bf16.gmra.mxu0 %v1617
        %v1843 = vpop.f32.mrf.mxu0
        %v1844 = vadd.f32 %v1795, %v1843
        %v1845 = vpop.f32.mrf.mxu0
        %v1846 = vadd.f32 %v1797, %v1845
        %1847 = vdwg.mxu0
        %v1848 = vld [vmem:[#allocation10] sm:$0xf]
        %v1849 = vld [vmem:[#allocation10 + $0x4] sm:$0xf]
        %v1850 = vld [vmem:[#allocation10 + $0x8] sm:$0xf]
        %v1851 = vld [vmem:[#allocation10 + $0xc] sm:$0xf]
        %v1852 = vld [vmem:[#allocation10 + $0x10] sm:$0xf]
        %v1853 = vld [vmem:[#allocation10 + $0x14] sm:$0xf]
        %v1854 = vld [vmem:[#allocation10 + $0x18] sm:$0xf]
        %v1855 = vld [vmem:[#allocation10 + $0x1c] sm:$0xf]
        %v1856 = vld [vmem:[#allocation10 + $0x20] sm:$0xf]
        %v1857 = vld [vmem:[#allocation10 + $0x24] sm:$0xf]
        %v1858 = vld [vmem:[#allocation10 + $0x28] sm:$0xf]
        %v1859 = vld [vmem:[#allocation10 + $0x2c] sm:$0xf]
        %v1860 = vld [vmem:[#allocation10 + $0x30] sm:$0xf]
        %v1861 = vld [vmem:[#allocation10 + $0x34] sm:$0xf]
        %v1862 = vld [vmem:[#allocation10 + $0x38] sm:$0xf]
        %v1863 = vld [vmem:[#allocation10 + $0x3c] sm:$0xf]
        %v1864 = vld [vmem:[#allocation10 + $0x40] sm:$0xf]
        %v1865 = vld [vmem:[#allocation10 + $0x44] sm:$0xf]
        %v1866 = vld [vmem:[#allocation10 + $0x48] sm:$0xf]
        %v1867 = vld [vmem:[#allocation10 + $0x4c] sm:$0xf]
        %v1868 = vld [vmem:[#allocation10 + $0x50] sm:$0xf]
        %v1869 = vld [vmem:[#allocation10 + $0x54] sm:$0xf]
        %v1870 = vld [vmem:[#allocation10 + $0x58] sm:$0xf]
        %v1871 = vld [vmem:[#allocation10 + $0x5c] sm:$0xf]
        %v1872 = vld [vmem:[#allocation10 + $0x60] sm:$0xf]
        %v1873 = vld [vmem:[#allocation10 + $0x64] sm:$0xf]
        %v1874 = vld [vmem:[#allocation10 + $0x68] sm:$0xf]
        %v1875 = vld [vmem:[#allocation10 + $0x6c] sm:$0xf]
        %v1876 = vld [vmem:[#allocation10 + $0x70] sm:$0xf]
        %v1877 = vld [vmem:[#allocation10 + $0x74] sm:$0xf]
        %v1878 = vld [vmem:[#allocation10 + $0x78] sm:$0xf]
        %v1879 = vld [vmem:[#allocation10 + $0x7c] sm:$0xf]
        %v1880 = vld [vmem:[#allocation11] sm:$0x1]
        %v1882 = vperm.slane %v1880, 0
        %v1916 = vunpack.c.l.b16 %v1848
        %v1917 = vunpack.c.l.b16 %v1849
        %v1918 = vunpack.c.l.b16 %v1850
        %v1919 = vunpack.c.l.b16 %v1851
        %v1920 = vunpack.c.l.b16 %v1852
        %v1921 = vunpack.c.l.b16 %v1853
        %v1922 = vunpack.c.l.b16 %v1854
        %v1923 = vunpack.c.l.b16 %v1855
        %v1924 = vunpack.c.l.b16 %v1856
        %v1925 = vunpack.c.l.b16 %v1857
        %v1926 = vunpack.c.l.b16 %v1858
        %v1927 = vunpack.c.l.b16 %v1859
        %v1928 = vunpack.c.l.b16 %v1860
        %v1929 = vunpack.c.l.b16 %v1861
        %v1930 = vunpack.c.l.b16 %v1862
        %v1931 = vunpack.c.l.b16 %v1863
        %v1932 = vunpack.c.l.b16 %v1864
        %v1933 = vunpack.c.l.b16 %v1865
        %v1934 = vunpack.c.l.b16 %v1866
        %v1935 = vunpack.c.l.b16 %v1867
        %v1936 = vunpack.c.l.b16 %v1868
        %v1937 = vunpack.c.l.b16 %v1869
        %v1938 = vunpack.c.l.b16 %v1870
        %v1939 = vunpack.c.l.b16 %v1871
        %v1940 = vunpack.c.l.b16 %v1872
        %v1941 = vunpack.c.l.b16 %v1873
        %v1942 = vunpack.c.l.b16 %v1874
        %v1943 = vunpack.c.l.b16 %v1875
        %v1944 = vunpack.c.l.b16 %v1876
        %v1945 = vunpack.c.l.b16 %v1877
        %v1946 = vunpack.c.l.b16 %v1878
        %v1947 = vunpack.c.l.b16 %v1879
        %v1948 = vpack.c.b16 %v1917, %v1916
        %v1949 = vpack.c.b16 %v1919, %v1918
        %v1950 = vpack.c.b16 %v1921, %v1920
        %v1951 = vpack.c.b16 %v1923, %v1922
        %v1952 = vpack.c.b16 %v1925, %v1924
        %v1953 = vpack.c.b16 %v1927, %v1926
        %v1954 = vpack.c.b16 %v1929, %v1928
        %v1955 = vpack.c.b16 %v1931, %v1930
        %v1956 = vpack.c.b16 %v1933, %v1932
        %v1957 = vpack.c.b16 %v1935, %v1934
        %v1958 = vpack.c.b16 %v1937, %v1936
        %v1959 = vpack.c.b16 %v1939, %v1938
        %v1960 = vpack.c.b16 %v1941, %v1940
        %v1961 = vpack.c.b16 %v1943, %v1942
        %v1962 = vpack.c.b16 %v1945, %v1944
        %v1963 = vpack.c.b16 %v1947, %v1946
        %1980 = vmatpush.bf16.msra.mxu0 %v1955
        %1981 = vmatpush.bf16.msra.mxu0 %v1954
        %1982 = vmatpush.bf16.msra.mxu0 %v1953
        %1983 = vmatpush.bf16.msra.mxu0 %v1952
        %1984 = vmatpush.bf16.msra.mxu0 %v1951
        %1985 = vmatpush.bf16.msra.mxu0 %v1950
        %1986 = vmatpush.bf16.msra.mxu0 %v1949
        %1987 = vmatpush.bf16.msra.mxu0 %v1948
        %1988 = vmatmul.bf16.gmra.mxu0 %v1602
        %v1989 = vpop.f32.mrf.mxu0
        %v1990 = vadd.f32 %v1882, %v1989
        %v1991 = vpop.f32.mrf.mxu0
        %v1992 = vadd.f32 %v1882, %v1991
        %1993 = vmatmul.bf16.gmra.mxu0 %v1604
        %v1994 = vpop.f32.mrf.mxu0
        %v1995 = vadd.f32 %v1882, %v1994
        %v1996 = vpop.f32.mrf.mxu0
        %v1997 = vadd.f32 %v1882, %v1996
        %1998 = vmatmul.bf16.gmra.mxu0 %v1606
        %v1999 = vpop.f32.mrf.mxu0
        %v2000 = vadd.f32 %v1882, %v1999
        %v2001 = vpop.f32.mrf.mxu0
        %v2002 = vadd.f32 %v1882, %v2001
        %2003 = vmatmul.bf16.gmra.mxu0 %v1608
        %v2004 = vpop.f32.mrf.mxu0
        %v2005 = vadd.f32 %v1882, %v2004
        %v2006 = vpop.f32.mrf.mxu0
        %v2007 = vadd.f32 %v1882, %v2006
        %2008 = vmatmul.bf16.gmra.mxu0 %v1610
        %v2009 = vpop.f32.mrf.mxu0
        %v2010 = vadd.f32 %v1882, %v2009
        %v2011 = vpop.f32.mrf.mxu0
        %v2012 = vadd.f32 %v1882, %v2011
        %2013 = vmatmul.bf16.gmra.mxu0 %v1612
        %v2014 = vpop.f32.mrf.mxu0
        %v2015 = vadd.f32 %v1882, %v2014
        %v2016 = vpop.f32.mrf.mxu0
        %v2017 = vadd.f32 %v1882, %v2016
        %2018 = vmatmul.bf16.gmra.mxu0 %v1614
        %v2019 = vpop.f32.mrf.mxu0
        %v2020 = vadd.f32 %v1882, %v2019
        %v2021 = vpop.f32.mrf.mxu0
        %v2022 = vadd.f32 %v1882, %v2021
        %2023 = vmatmul.bf16.gmra.mxu0 %v1616
        %v2024 = vpop.f32.mrf.mxu0
        %v2025 = vadd.f32 %v1882, %v2024
        %v2026 = vpop.f32.mrf.mxu0
        %v2027 = vadd.f32 %v1882, %v2026
        %2028 = vdwg.mxu0
        %2029 = vmatpush.bf16.msra.mxu0 %v1963
        %2030 = vmatpush.bf16.msra.mxu0 %v1962
        %2031 = vmatpush.bf16.msra.mxu0 %v1961
        %2032 = vmatpush.bf16.msra.mxu0 %v1960
        %2033 = vmatpush.bf16.msra.mxu0 %v1959
        %2034 = vmatpush.bf16.msra.mxu0 %v1958
        %2035 = vmatpush.bf16.msra.mxu0 %v1957
        %2036 = vmatpush.bf16.msra.mxu0 %v1956
        %2037 = vmatmul.bf16.gmra.mxu0 %v1603
        %v2038 = vpop.f32.mrf.mxu0
        %v2039 = vadd.f32 %v1990, %v2038
        %v2040 = vpop.f32.mrf.mxu0
        %v2041 = vadd.f32 %v1992, %v2040
        %2042 = vmatmul.bf16.gmra.mxu0 %v1605
        %v2043 = vpop.f32.mrf.mxu0
        %v2044 = vadd.f32 %v1995, %v2043
        %v2045 = vpop.f32.mrf.mxu0
        %v2046 = vadd.f32 %v1997, %v2045
        %2047 = vmatmul.bf16.gmra.mxu0 %v1607
        %v2048 = vpop.f32.mrf.mxu0
        %v2049 = vadd.f32 %v2000, %v2048
        %v2050 = vpop.f32.mrf.mxu0
        %v2051 = vadd.f32 %v2002, %v2050
        %2052 = vmatmul.bf16.gmra.mxu0 %v1609
        %v2053 = vpop.f32.mrf.mxu0
        %v2054 = vadd.f32 %v2005, %v2053
        %v2055 = vpop.f32.mrf.mxu0
        %v2056 = vadd.f32 %v2007, %v2055
        %2057 = vmatmul.bf16.gmra.mxu0 %v1611
        %v2058 = vpop.f32.mrf.mxu0
        %v2059 = vadd.f32 %v2010, %v2058
        %v2060 = vpop.f32.mrf.mxu0
        %v2061 = vadd.f32 %v2012, %v2060
        %2062 = vmatmul.bf16.gmra.mxu0 %v1613
        %v2063 = vpop.f32.mrf.mxu0
        %v2064 = vadd.f32 %v2015, %v2063
        %v2065 = vpop.f32.mrf.mxu0
        %v2066 = vadd.f32 %v2017, %v2065
        %2067 = vmatmul.bf16.gmra.mxu0 %v1615
        %v2068 = vpop.f32.mrf.mxu0
        %v2069 = vadd.f32 %v2020, %v2068
        %v2070 = vpop.f32.mrf.mxu0
        %v2071 = vadd.f32 %v2022, %v2070
        %2072 = vmatmul.bf16.gmra.mxu0 %v1617
        %v2073 = vpop.f32.mrf.mxu0
        %v2074 = vadd.f32 %v2025, %v2073
        %v2075 = vpop.f32.mrf.mxu0
        %v2076 = vadd.f32 %v2027, %v2075
        %2077 = vdwg.mxu0
        %2078 = vst [vmem:[%s584] sm:$0xff] %v1809
        %2079 = vst [vmem:[%s584 + $0x8] sm:$0xff] %v1811
        %2080 = vst [vmem:[%s584 + $0x10] sm:$0xff] %v1814
        %2081 = vst [vmem:[%s584 + $0x18] sm:$0xff] %v1816
        %2082 = vst [vmem:[%s584 + $0x20] sm:$0xff] %v1819
        %2083 = vst [vmem:[%s584 + $0x28] sm:$0xff] %v1821
        %2084 = vst [vmem:[%s584 + $0x30] sm:$0xff] %v1824
        %2085 = vst [vmem:[%s584 + $0x38] sm:$0xff] %v1826
        %2086 = vst [vmem:[%s584 + $0x40] sm:$0xff] %v1829
        %2087 = vst [vmem:[%s584 + $0x48] sm:$0xff] %v1831
        %2088 = vst [vmem:[%s584 + $0x50] sm:$0xff] %v1834
        %2089 = vst [vmem:[%s584 + $0x58] sm:$0xff] %v1836
        %2090 = vst [vmem:[%s584 + $0x60] sm:$0xff] %v1839
        %2091 = vst [vmem:[%s584 + $0x68] sm:$0xff] %v1841
        %2092 = vst [vmem:[%s584 + $0x70] sm:$0xff] %v1844
        %2093 = vst [vmem:[%s584 + $0x78] sm:$0xff] %v1846
        %2094 = vst [vmem:[%s591] sm:$0xff] %v2039
        %2095 = vst [vmem:[%s591 + $0x8] sm:$0xff] %v2041
        %2096 = vst [vmem:[%s591 + $0x10] sm:$0xff] %v2044
        %2097 = vst [vmem:[%s591 + $0x18] sm:$0xff] %v2046
        %2098 = vst [vmem:[%s591 + $0x20] sm:$0xff] %v2049
        %2099 = vst [vmem:[%s591 + $0x28] sm:$0xff] %v2051
        %2100 = vst [vmem:[%s591 + $0x30] sm:$0xff] %v2054
        %2101 = vst [vmem:[%s591 + $0x38] sm:$0xff] %v2056
        %2102 = vst [vmem:[%s591 + $0x40] sm:$0xff] %v2059
        %2103 = vst [vmem:[%s591 + $0x48] sm:$0xff] %v2061
        %2104 = vst [vmem:[%s591 + $0x50] sm:$0xff] %v2064
        %2105 = vst [vmem:[%s591 + $0x58] sm:$0xff] %v2066
        %2106 = vst [vmem:[%s591 + $0x60] sm:$0xff] %v2069
        %2107 = vst [vmem:[%s591 + $0x68] sm:$0xff] %v2071
        %2108 = vst [vmem:[%s591 + $0x70] sm:$0xff] %v2074
        %2109 = vst [vmem:[%s591 + $0x78] sm:$0xff] %v2076
        %v2110 = vpack.c.bf16 %v1811, %v1809
        %v2111 = vpack.c.bf16 %v1816, %v1814
        %v2112 = vpack.c.bf16 %v1821, %v1819
        %v2113 = vpack.c.bf16 %v1826, %v1824
        %v2114 = vpack.c.bf16 %v1831, %v1829
        %v2115 = vpack.c.bf16 %v1836, %v1834
        %v2116 = vpack.c.bf16 %v1841, %v1839
        %v2117 = vpack.c.bf16 %v1846, %v1844
        %v2118 = vld [vmem:[#allocation13] sm:$0xff]
        %v2119 = vld [vmem:[#allocation13 + $0x8] sm:$0xff]
        %v2120 = vld [vmem:[#allocation13 + $0x10] sm:$0xff]
        %v2121 = vld [vmem:[#allocation13 + $0x18] sm:$0xff]
        %v2122 = vld [vmem:[#allocation13 + $0x20] sm:$0xff]
        %v2123 = vld [vmem:[#allocation13 + $0x28] sm:$0xff]
        %v2124 = vld [vmem:[#allocation13 + $0x30] sm:$0xff]
        %v2125 = vld [vmem:[#allocation13 + $0x38] sm:$0xff]
        %v2126 = vld [vmem:[#allocation13 + $0x40] sm:$0xff]
        %v2127 = vld [vmem:[#allocation13 + $0x48] sm:$0xff]
        %v2128 = vld [vmem:[#allocation13 + $0x50] sm:$0xff]
        %v2129 = vld [vmem:[#allocation13 + $0x58] sm:$0xff]
        %v2130 = vld [vmem:[#allocation13 + $0x60] sm:$0xff]
        %v2131 = vld [vmem:[#allocation13 + $0x68] sm:$0xff]
        %v2132 = vld [vmem:[#allocation13 + $0x70] sm:$0xff]
        %v2133 = vld [vmem:[#allocation13 + $0x78] sm:$0xff]
        %v2134 = vld [vmem:[%s8] sm:$0x3]
        %v2136 = vperm.slane %v2134, 0
        %v2137 = vperm.slane %v2134, 1
        %v2156 = vunpack.c.l.b16 %v2118
        %v2157 = vunpack.c.h.b16 %v2118
        %v2158 = vunpack.c.l.b16 %v2119
        %v2159 = vunpack.c.h.b16 %v2119
        %v2160 = vunpack.c.l.b16 %v2120
        %v2161 = vunpack.c.h.b16 %v2120
        %v2162 = vunpack.c.l.b16 %v2121
        %v2163 = vunpack.c.h.b16 %v2121
        %v2164 = vunpack.c.l.b16 %v2122
        %v2165 = vunpack.c.h.b16 %v2122
        %v2166 = vunpack.c.l.b16 %v2123
        %v2167 = vunpack.c.h.b16 %v2123
        %v2168 = vunpack.c.l.b16 %v2124
        %v2169 = vunpack.c.h.b16 %v2124
        %v2170 = vunpack.c.l.b16 %v2125
        %v2171 = vunpack.c.h.b16 %v2125
        %v2172 = vunpack.c.l.b16 %v2126
        %v2173 = vunpack.c.h.b16 %v2126
        %v2174 = vunpack.c.l.b16 %v2127
        %v2175 = vunpack.c.h.b16 %v2127
        %v2176 = vunpack.c.l.b16 %v2128
        %v2177 = vunpack.c.h.b16 %v2128
        %v2178 = vunpack.c.l.b16 %v2129
        %v2179 = vunpack.c.h.b16 %v2129
        %v2180 = vunpack.c.l.b16 %v2130
        %v2181 = vunpack.c.h.b16 %v2130
        %v2182 = vunpack.c.l.b16 %v2131
        %v2183 = vunpack.c.h.b16 %v2131
        %v2184 = vunpack.c.l.b16 %v2132
        %v2185 = vunpack.c.h.b16 %v2132
        %v2186 = vunpack.c.l.b16 %v2133
        %v2187 = vunpack.c.h.b16 %v2133
        %v2188 = vpack.c.b16 %v2158, %v2156
        %v2189 = vpack.c.b16 %v2159, %v2157
        %v2190 = vpack.c.b16 %v2162, %v2160
        %v2191 = vpack.c.b16 %v2163, %v2161
        %v2192 = vpack.c.b16 %v2166, %v2164
        %v2193 = vpack.c.b16 %v2167, %v2165
        %v2194 = vpack.c.b16 %v2170, %v2168
        %v2195 = vpack.c.b16 %v2171, %v2169
        %v2196 = vpack.c.b16 %v2174, %v2172
        %v2197 = vpack.c.b16 %v2175, %v2173
        %v2198 = vpack.c.b16 %v2178, %v2176
        %v2199 = vpack.c.b16 %v2179, %v2177
        %v2200 = vpack.c.b16 %v2182, %v2180
        %v2201 = vpack.c.b16 %v2183, %v2181
        %v2202 = vpack.c.b16 %v2186, %v2184
        %v2203 = vpack.c.b16 %v2187, %v2185
        %2220 = vmatpush.bf16.msra.mxu0 %v2202
        %2221 = vmatpush.bf16.msra.mxu0 %v2200
        %2222 = vmatpush.bf16.msra.mxu0 %v2198
        %2223 = vmatpush.bf16.msra.mxu0 %v2196
        %2224 = vmatpush.bf16.msra.mxu0 %v2194
        %2225 = vmatpush.bf16.msra.mxu0 %v2192
        %2226 = vmatpush.bf16.msra.mxu0 %v2190
        %2227 = vmatpush.bf16.msra.mxu0 %v2188
        %2228 = vmatmul.bf16.gmra.mxu0 %v2110
        %v2229 = vpop.f32.mrf.mxu0
        %v2230 = vadd.f32 %v2136, %v2229
        %v2231 = vpop.f32.mrf.mxu0
        %v2232 = vadd.f32 %v2136, %v2231
        %2233 = vmatmul.bf16.gmra.mxu0 %v2111
        %v2234 = vpop.f32.mrf.mxu0
        %v2235 = vadd.f32 %v2136, %v2234
        %v2236 = vpop.f32.mrf.mxu0
        %v2237 = vadd.f32 %v2136, %v2236
        %2238 = vmatmul.bf16.gmra.mxu0 %v2112
        %v2239 = vpop.f32.mrf.mxu0
        %v2240 = vadd.f32 %v2136, %v2239
        %v2241 = vpop.f32.mrf.mxu0
        %v2242 = vadd.f32 %v2136, %v2241
        %2243 = vmatmul.bf16.gmra.mxu0 %v2113
        %v2244 = vpop.f32.mrf.mxu0
        %v2245 = vadd.f32 %v2136, %v2244
        %v2246 = vpop.f32.mrf.mxu0
        %v2247 = vadd.f32 %v2136, %v2246
        %2248 = vmatmul.bf16.gmra.mxu0 %v2114
        %v2249 = vpop.f32.mrf.mxu0
        %v2250 = vadd.f32 %v2136, %v2249
        %v2251 = vpop.f32.mrf.mxu0
        %v2252 = vadd.f32 %v2136, %v2251
        %2253 = vmatmul.bf16.gmra.mxu0 %v2115
        %v2254 = vpop.f32.mrf.mxu0
        %v2255 = vadd.f32 %v2136, %v2254
        %v2256 = vpop.f32.mrf.mxu0
        %v2257 = vadd.f32 %v2136, %v2256
        %2258 = vmatmul.bf16.gmra.mxu0 %v2116
        %v2259 = vpop.f32.mrf.mxu0
        %v2260 = vadd.f32 %v2136, %v2259
        %v2261 = vpop.f32.mrf.mxu0
        %v2262 = vadd.f32 %v2136, %v2261
        %2263 = vmatmul.bf16.gmra.mxu0 %v2117
        %v2264 = vpop.f32.mrf.mxu0
        %v2265 = vadd.f32 %v2136, %v2264
        %v2266 = vpop.f32.mrf.mxu0
        %v2267 = vadd.f32 %v2136, %v2266
        %2268 = vdwg.mxu0
        %2269 = vmatpush.bf16.msra.mxu0 %v2203
        %2270 = vmatpush.bf16.msra.mxu0 %v2201
        %2271 = vmatpush.bf16.msra.mxu0 %v2199
        %2272 = vmatpush.bf16.msra.mxu0 %v2197
        %2273 = vmatpush.bf16.msra.mxu0 %v2195
        %2274 = vmatpush.bf16.msra.mxu0 %v2193
        %2275 = vmatpush.bf16.msra.mxu0 %v2191
        %2276 = vmatpush.bf16.msra.mxu0 %v2189
        %2277 = vmatmul.bf16.gmra.mxu0 %v2110
        %v2278 = vpop.f32.mrf.mxu0
        %v2279 = vadd.f32 %v2137, %v2278
        %v2280 = vpop.f32.mrf.mxu0
        %v2281 = vadd.f32 %v2137, %v2280
        %2282 = vmatmul.bf16.gmra.mxu0 %v2111
        %v2283 = vpop.f32.mrf.mxu0
        %v2284 = vadd.f32 %v2137, %v2283
        %v2285 = vpop.f32.mrf.mxu0
        %v2286 = vadd.f32 %v2137, %v2285
        %2287 = vmatmul.bf16.gmra.mxu0 %v2112
        %v2288 = vpop.f32.mrf.mxu0
        %v2289 = vadd.f32 %v2137, %v2288
        %v2290 = vpop.f32.mrf.mxu0
        %v2291 = vadd.f32 %v2137, %v2290
        %2292 = vmatmul.bf16.gmra.mxu0 %v2113
        %v2293 = vpop.f32.mrf.mxu0
        %v2294 = vadd.f32 %v2137, %v2293
        %v2295 = vpop.f32.mrf.mxu0
        %v2296 = vadd.f32 %v2137, %v2295
        %2297 = vmatmul.bf16.gmra.mxu0 %v2114
        %v2298 = vpop.f32.mrf.mxu0
        %v2299 = vadd.f32 %v2137, %v2298
        %v2300 = vpop.f32.mrf.mxu0
        %v2301 = vadd.f32 %v2137, %v2300
        %2302 = vmatmul.bf16.gmra.mxu0 %v2115
        %v2303 = vpop.f32.mrf.mxu0
        %v2304 = vadd.f32 %v2137, %v2303
        %v2305 = vpop.f32.mrf.mxu0
        %v2306 = vadd.f32 %v2137, %v2305
        %2307 = vmatmul.bf16.gmra.mxu0 %v2116
        %v2308 = vpop.f32.mrf.mxu0
        %v2309 = vadd.f32 %v2137, %v2308
        %v2310 = vpop.f32.mrf.mxu0
        %v2311 = vadd.f32 %v2137, %v2310
        %2312 = vmatmul.bf16.gmra.mxu0 %v2117
        %v2313 = vpop.f32.mrf.mxu0
        %v2314 = vadd.f32 %v2137, %v2313
        %v2315 = vpop.f32.mrf.mxu0
        %v2316 = vadd.f32 %v2137, %v2315
        %2317 = vdwg.mxu0
        %v2318 = vtanh.pop %v2230
        %v2319 = vtanh.pop %v2279
        %v2320 = vtanh.pop %v2232
        %v2321 = vtanh.pop %v2281
        %v2322 = vtanh.pop %v2235
        %v2323 = vtanh.pop %v2284
        %v2324 = vtanh.pop %v2237
        %v2325 = vtanh.pop %v2286
        %v2326 = vtanh.pop %v2240
        %v2327 = vtanh.pop %v2289
        %v2328 = vtanh.pop %v2242
        %v2329 = vtanh.pop %v2291
        %v2330 = vtanh.pop %v2245
        %v2331 = vtanh.pop %v2294
        %v2332 = vtanh.pop %v2247
        %v2333 = vtanh.pop %v2296
        %v2334 = vtanh.pop %v2250
        %v2335 = vtanh.pop %v2299
        %v2336 = vtanh.pop %v2252
        %v2337 = vtanh.pop %v2301
        %v2338 = vtanh.pop %v2255
        %v2339 = vtanh.pop %v2304
        %v2340 = vtanh.pop %v2257
        %v2341 = vtanh.pop %v2306
        %v2342 = vtanh.pop %v2260
        %v2343 = vtanh.pop %v2309
        %v2344 = vtanh.pop %v2262
        %v2345 = vtanh.pop %v2311
        %v2346 = vtanh.pop %v2265
        %v2347 = vtanh.pop %v2314
        %v2348 = vtanh.pop %v2267
        %v2349 = vtanh.pop %v2316
        %v2350 = vpack.c.bf16 %v2320, %v2318
        %v2351 = vpack.c.bf16 %v2321, %v2319
        %v2352 = vpack.c.bf16 %v2324, %v2322
        %v2353 = vpack.c.bf16 %v2325, %v2323
        %v2354 = vpack.c.bf16 %v2328, %v2326
        %v2355 = vpack.c.bf16 %v2329, %v2327
        %v2356 = vpack.c.bf16 %v2332, %v2330
        %v2357 = vpack.c.bf16 %v2333, %v2331
        %v2358 = vpack.c.bf16 %v2336, %v2334
        %v2359 = vpack.c.bf16 %v2337, %v2335
        %v2360 = vpack.c.bf16 %v2340, %v2338
        %v2361 = vpack.c.bf16 %v2341, %v2339
        %v2362 = vpack.c.bf16 %v2344, %v2342
        %v2363 = vpack.c.bf16 %v2345, %v2343
        %v2364 = vpack.c.bf16 %v2348, %v2346
        %v2365 = vpack.c.bf16 %v2349, %v2347
        %v2366 = vld [vmem:[#allocation14] sm:$0xff]
        %v2367 = vld [vmem:[#allocation14 + $0x8] sm:$0xff]
        %v2368 = vld [vmem:[#allocation14 + $0x10] sm:$0xff]
        %v2369 = vld [vmem:[#allocation14 + $0x18] sm:$0xff]
        %v2370 = vld [vmem:[#allocation14 + $0x20] sm:$0xff]
        %v2371 = vld [vmem:[#allocation14 + $0x28] sm:$0xff]
        %v2372 = vld [vmem:[#allocation14 + $0x30] sm:$0xff]
        %v2373 = vld [vmem:[#allocation14 + $0x38] sm:$0xff]
        %v2374 = vld [vmem:[#allocation14 + $0x40] sm:$0xff]
        %v2375 = vld [vmem:[#allocation14 + $0x48] sm:$0xff]
        %v2376 = vld [vmem:[#allocation14 + $0x50] sm:$0xff]
        %v2377 = vld [vmem:[#allocation14 + $0x58] sm:$0xff]
        %v2378 = vld [vmem:[#allocation14 + $0x60] sm:$0xff]
        %v2379 = vld [vmem:[#allocation14 + $0x68] sm:$0xff]
        %v2380 = vld [vmem:[#allocation14 + $0x70] sm:$0xff]
        %v2381 = vld [vmem:[#allocation14 + $0x78] sm:$0xff]
        %v2382 = vld [vmem:[#allocation14 + $0x80] sm:$0xff]
        %v2383 = vld [vmem:[#allocation14 + $0x88] sm:$0xff]
        %v2384 = vld [vmem:[#allocation14 + $0x90] sm:$0xff]
        %v2385 = vld [vmem:[#allocation14 + $0x98] sm:$0xff]
        %v2386 = vld [vmem:[#allocation14 + $0xa0] sm:$0xff]
        %v2387 = vld [vmem:[#allocation14 + $0xa8] sm:$0xff]
        %v2388 = vld [vmem:[#allocation14 + $0xb0] sm:$0xff]
        %v2389 = vld [vmem:[#allocation14 + $0xb8] sm:$0xff]
        %v2390 = vld [vmem:[#allocation14 + $0xc0] sm:$0xff]
        %v2391 = vld [vmem:[#allocation14 + $0xc8] sm:$0xff]
        %v2392 = vld [vmem:[#allocation14 + $0xd0] sm:$0xff]
        %v2393 = vld [vmem:[#allocation14 + $0xd8] sm:$0xff]
        %v2394 = vld [vmem:[#allocation14 + $0xe0] sm:$0xff]
        %v2395 = vld [vmem:[#allocation14 + $0xe8] sm:$0xff]
        %v2396 = vld [vmem:[#allocation14 + $0xf0] sm:$0xff]
        %v2397 = vld [vmem:[#allocation14 + $0xf8] sm:$0xff]
        %v2398 = vld [vmem:[#allocation14 + $0x100] sm:$0xff]
        %v2399 = vld [vmem:[#allocation14 + $0x108] sm:$0xff]
        %v2400 = vld [vmem:[#allocation14 + $0x110] sm:$0xff]
        %v2401 = vld [vmem:[#allocation14 + $0x118] sm:$0xff]
        %v2402 = vld [vmem:[#allocation14 + $0x120] sm:$0xff]
        %v2403 = vld [vmem:[#allocation14 + $0x128] sm:$0xff]
        %v2404 = vld [vmem:[#allocation14 + $0x130] sm:$0xff]
        %v2405 = vld [vmem:[#allocation14 + $0x138] sm:$0xff]
        %v2406 = vld [vmem:[#allocation14 + $0x140] sm:$0xff]
        %v2407 = vld [vmem:[#allocation14 + $0x148] sm:$0xff]
        %v2408 = vld [vmem:[#allocation14 + $0x150] sm:$0xff]
        %v2409 = vld [vmem:[#allocation14 + $0x158] sm:$0xff]
        %v2410 = vld [vmem:[#allocation14 + $0x160] sm:$0xff]
        %v2411 = vld [vmem:[#allocation14 + $0x168] sm:$0xff]
        %v2412 = vld [vmem:[#allocation14 + $0x170] sm:$0xff]
        %v2413 = vld [vmem:[#allocation14 + $0x178] sm:$0xff]
        %v2414 = vld [vmem:[#allocation14 + $0x180] sm:$0xff]
        %v2415 = vld [vmem:[#allocation14 + $0x188] sm:$0xff]
        %v2416 = vld [vmem:[#allocation14 + $0x190] sm:$0xff]
        %v2417 = vld [vmem:[#allocation14 + $0x198] sm:$0xff]
        %v2418 = vld [vmem:[#allocation14 + $0x1a0] sm:$0xff]
        %v2419 = vld [vmem:[#allocation14 + $0x1a8] sm:$0xff]
        %v2420 = vld [vmem:[#allocation14 + $0x1b0] sm:$0xff]
        %v2421 = vld [vmem:[#allocation14 + $0x1b8] sm:$0xff]
        %v2422 = vld [vmem:[#allocation14 + $0x1c0] sm:$0xff]
        %v2423 = vld [vmem:[#allocation14 + $0x1c8] sm:$0xff]
        %v2424 = vld [vmem:[#allocation14 + $0x1d0] sm:$0xff]
        %v2425 = vld [vmem:[#allocation14 + $0x1d8] sm:$0xff]
        %v2426 = vld [vmem:[#allocation14 + $0x1e0] sm:$0xff]
        %v2427 = vld [vmem:[#allocation14 + $0x1e8] sm:$0xff]
        %v2428 = vld [vmem:[#allocation14 + $0x1f0] sm:$0xff]
        %v2429 = vld [vmem:[#allocation14 + $0x1f8] sm:$0xff]
        %v2430 = vld [vmem:[%s10] sm:$0xf]
        %v2432 = vperm.slane %v2430, 0
        %v2433 = vperm.slane %v2430, 1
        %v2434 = vperm.slane %v2430, 2
        %v2435 = vperm.slane %v2430, 3
        %v2504 = vunpack.c.l.b16 %v2366
        %v2505 = vunpack.c.h.b16 %v2366
        %v2506 = vunpack.c.l.b16 %v2367
        %v2507 = vunpack.c.h.b16 %v2367
        %v2508 = vunpack.c.l.b16 %v2368
        %v2509 = vunpack.c.h.b16 %v2368
        %v2510 = vunpack.c.l.b16 %v2369
        %v2511 = vunpack.c.h.b16 %v2369
        %v2512 = vunpack.c.l.b16 %v2370
        %v2513 = vunpack.c.h.b16 %v2370
        %v2514 = vunpack.c.l.b16 %v2371
        %v2515 = vunpack.c.h.b16 %v2371
        %v2516 = vunpack.c.l.b16 %v2372
        %v2517 = vunpack.c.h.b16 %v2372
        %v2518 = vunpack.c.l.b16 %v2373
        %v2519 = vunpack.c.h.b16 %v2373
        %v2520 = vunpack.c.l.b16 %v2374
        %v2521 = vunpack.c.h.b16 %v2374
        %v2522 = vunpack.c.l.b16 %v2375
        %v2523 = vunpack.c.h.b16 %v2375
        %v2524 = vunpack.c.l.b16 %v2376
        %v2525 = vunpack.c.h.b16 %v2376
        %v2526 = vunpack.c.l.b16 %v2377
        %v2527 = vunpack.c.h.b16 %v2377
        %v2528 = vunpack.c.l.b16 %v2378
        %v2529 = vunpack.c.h.b16 %v2378
        %v2530 = vunpack.c.l.b16 %v2379
        %v2531 = vunpack.c.h.b16 %v2379
        %v2532 = vunpack.c.l.b16 %v2380
        %v2533 = vunpack.c.h.b16 %v2380
        %v2534 = vunpack.c.l.b16 %v2381
        %v2535 = vunpack.c.h.b16 %v2381
        %v2536 = vunpack.c.l.b16 %v2382
        %v2537 = vunpack.c.h.b16 %v2382
        %v2538 = vunpack.c.l.b16 %v2383
        %v2539 = vunpack.c.h.b16 %v2383
        %v2540 = vunpack.c.l.b16 %v2384
        %v2541 = vunpack.c.h.b16 %v2384
        %v2542 = vunpack.c.l.b16 %v2385
        %v2543 = vunpack.c.h.b16 %v2385
        %v2544 = vunpack.c.l.b16 %v2386
        %v2545 = vunpack.c.h.b16 %v2386
        %v2546 = vunpack.c.l.b16 %v2387
        %v2547 = vunpack.c.h.b16 %v2387
        %v2548 = vunpack.c.l.b16 %v2388
        %v2549 = vunpack.c.h.b16 %v2388
        %v2550 = vunpack.c.l.b16 %v2389
        %v2551 = vunpack.c.h.b16 %v2389
        %v2552 = vunpack.c.l.b16 %v2390
        %v2553 = vunpack.c.h.b16 %v2390
        %v2554 = vunpack.c.l.b16 %v2391
        %v2555 = vunpack.c.h.b16 %v2391
        %v2556 = vunpack.c.l.b16 %v2392
        %v2557 = vunpack.c.h.b16 %v2392
        %v2558 = vunpack.c.l.b16 %v2393
        %v2559 = vunpack.c.h.b16 %v2393
        %v2560 = vunpack.c.l.b16 %v2394
        %v2561 = vunpack.c.h.b16 %v2394
        %v2562 = vunpack.c.l.b16 %v2395
        %v2563 = vunpack.c.h.b16 %v2395
        %v2564 = vunpack.c.l.b16 %v2396
        %v2565 = vunpack.c.h.b16 %v2396
        %v2566 = vunpack.c.l.b16 %v2397
        %v2567 = vunpack.c.h.b16 %v2397
        %v2568 = vunpack.c.l.b16 %v2398
        %v2569 = vunpack.c.h.b16 %v2398
        %v2570 = vunpack.c.l.b16 %v2399
        %v2571 = vunpack.c.h.b16 %v2399
        %v2572 = vunpack.c.l.b16 %v2400
        %v2573 = vunpack.c.h.b16 %v2400
        %v2574 = vunpack.c.l.b16 %v2401
        %v2575 = vunpack.c.h.b16 %v2401
        %v2576 = vunpack.c.l.b16 %v2402
        %v2577 = vunpack.c.h.b16 %v2402
        %v2578 = vunpack.c.l.b16 %v2403
        %v2579 = vunpack.c.h.b16 %v2403
        %v2580 = vunpack.c.l.b16 %v2404
        %v2581 = vunpack.c.h.b16 %v2404
        %v2582 = vunpack.c.l.b16 %v2405
        %v2583 = vunpack.c.h.b16 %v2405
        %v2584 = vunpack.c.l.b16 %v2406
        %v2585 = vunpack.c.h.b16 %v2406
        %v2586 = vunpack.c.l.b16 %v2407
        %v2587 = vunpack.c.h.b16 %v2407
        %v2588 = vunpack.c.l.b16 %v2408
        %v2589 = vunpack.c.h.b16 %v2408
        %v2590 = vunpack.c.l.b16 %v2409
        %v2591 = vunpack.c.h.b16 %v2409
        %v2592 = vunpack.c.l.b16 %v2410
        %v2593 = vunpack.c.h.b16 %v2410
        %v2594 = vunpack.c.l.b16 %v2411
        %v2595 = vunpack.c.h.b16 %v2411
        %v2596 = vunpack.c.l.b16 %v2412
        %v2597 = vunpack.c.h.b16 %v2412
        %v2598 = vunpack.c.l.b16 %v2413
        %v2599 = vunpack.c.h.b16 %v2413
        %v2600 = vunpack.c.l.b16 %v2414
        %v2601 = vunpack.c.h.b16 %v2414
        %v2602 = vunpack.c.l.b16 %v2415
        %v2603 = vunpack.c.h.b16 %v2415
        %v2604 = vunpack.c.l.b16 %v2416
        %v2605 = vunpack.c.h.b16 %v2416
        %v2606 = vunpack.c.l.b16 %v2417
        %v2607 = vunpack.c.h.b16 %v2417
        %v2608 = vunpack.c.l.b16 %v2418
        %v2609 = vunpack.c.h.b16 %v2418
        %v2610 = vunpack.c.l.b16 %v2419
        %v2611 = vunpack.c.h.b16 %v2419
        %v2612 = vunpack.c.l.b16 %v2420
        %v2613 = vunpack.c.h.b16 %v2420
        %v2614 = vunpack.c.l.b16 %v2421
        %v2615 = vunpack.c.h.b16 %v2421
        %v2616 = vunpack.c.l.b16 %v2422
        %v2617 = vunpack.c.h.b16 %v2422
        %v2618 = vunpack.c.l.b16 %v2423
        %v2619 = vunpack.c.h.b16 %v2423
        %v2620 = vunpack.c.l.b16 %v2424
        %v2621 = vunpack.c.h.b16 %v2424
        %v2622 = vunpack.c.l.b16 %v2425
        %v2623 = vunpack.c.h.b16 %v2425
        %v2624 = vunpack.c.l.b16 %v2426
        %v2625 = vunpack.c.h.b16 %v2426
        %v2626 = vunpack.c.l.b16 %v2427
        %v2627 = vunpack.c.h.b16 %v2427
        %v2628 = vunpack.c.l.b16 %v2428
        %v2629 = vunpack.c.h.b16 %v2428
        %v2630 = vunpack.c.l.b16 %v2429
        %v2631 = vunpack.c.h.b16 %v2429
        %v2632 = vpack.c.b16 %v2508, %v2504
        %v2633 = vpack.c.b16 %v2509, %v2505
        %v2634 = vpack.c.b16 %v2510, %v2506
        %v2635 = vpack.c.b16 %v2511, %v2507
        %v2636 = vpack.c.b16 %v2516, %v2512
        %v2637 = vpack.c.b16 %v2517, %v2513
        %v2638 = vpack.c.b16 %v2518, %v2514
        %v2639 = vpack.c.b16 %v2519, %v2515
        %v2640 = vpack.c.b16 %v2524, %v2520
        %v2641 = vpack.c.b16 %v2525, %v2521
        %v2642 = vpack.c.b16 %v2526, %v2522
        %v2643 = vpack.c.b16 %v2527, %v2523
        %v2644 = vpack.c.b16 %v2532, %v2528
        %v2645 = vpack.c.b16 %v2533, %v2529
        %v2646 = vpack.c.b16 %v2534, %v2530
        %v2647 = vpack.c.b16 %v2535, %v2531
        %v2648 = vpack.c.b16 %v2540, %v2536
        %v2649 = vpack.c.b16 %v2541, %v2537
        %v2650 = vpack.c.b16 %v2542, %v2538
        %v2651 = vpack.c.b16 %v2543, %v2539
        %v2652 = vpack.c.b16 %v2548, %v2544
        %v2653 = vpack.c.b16 %v2549, %v2545
        %v2654 = vpack.c.b16 %v2550, %v2546
        %v2655 = vpack.c.b16 %v2551, %v2547
        %v2656 = vpack.c.b16 %v2556, %v2552
        %v2657 = vpack.c.b16 %v2557, %v2553
        %v2658 = vpack.c.b16 %v2558, %v2554
        %v2659 = vpack.c.b16 %v2559, %v2555
        %v2660 = vpack.c.b16 %v2564, %v2560
        %v2661 = vpack.c.b16 %v2565, %v2561
        %v2662 = vpack.c.b16 %v2566, %v2562
        %v2663 = vpack.c.b16 %v2567, %v2563
        %v2664 = vpack.c.b16 %v2572, %v2568
        %v2665 = vpack.c.b16 %v2573, %v2569
        %v2666 = vpack.c.b16 %v2574, %v2570
        %v2667 = vpack.c.b16 %v2575, %v2571
        %v2668 = vpack.c.b16 %v2580, %v2576
        %v2669 = vpack.c.b16 %v2581, %v2577
        %v2670 = vpack.c.b16 %v2582, %v2578
        %v2671 = vpack.c.b16 %v2583, %v2579
        %v2672 = vpack.c.b16 %v2588, %v2584
        %v2673 = vpack.c.b16 %v2589, %v2585
        %v2674 = vpack.c.b16 %v2590, %v2586
        %v2675 = vpack.c.b16 %v2591, %v2587
        %v2676 = vpack.c.b16 %v2596, %v2592
        %v2677 = vpack.c.b16 %v2597, %v2593
        %v2678 = vpack.c.b16 %v2598, %v2594
        %v2679 = vpack.c.b16 %v2599, %v2595
        %v2680 = vpack.c.b16 %v2604, %v2600
        %v2681 = vpack.c.b16 %v2605, %v2601
        %v2682 = vpack.c.b16 %v2606, %v2602
        %v2683 = vpack.c.b16 %v2607, %v2603
        %v2684 = vpack.c.b16 %v2612, %v2608
        %v2685 = vpack.c.b16 %v2613, %v2609
        %v2686 = vpack.c.b16 %v2614, %v2610
        %v2687 = vpack.c.b16 %v2615, %v2611
        %v2688 = vpack.c.b16 %v2620, %v2616
        %v2689 = vpack.c.b16 %v2621, %v2617
        %v2690 = vpack.c.b16 %v2622, %v2618
        %v2691 = vpack.c.b16 %v2623, %v2619
        %v2692 = vpack.c.b16 %v2628, %v2624
        %v2693 = vpack.c.b16 %v2629, %v2625
        %v2694 = vpack.c.b16 %v2630, %v2626
        %v2695 = vpack.c.b16 %v2631, %v2627
        %2760 = vmatpush.bf16.msra.mxu0 %v2660
        %2761 = vmatpush.bf16.msra.mxu0 %v2656
        %2762 = vmatpush.bf16.msra.mxu0 %v2652
        %2763 = vmatpush.bf16.msra.mxu0 %v2648
        %2764 = vmatpush.bf16.msra.mxu0 %v2644
        %2765 = vmatpush.bf16.msra.mxu0 %v2640
        %2766 = vmatpush.bf16.msra.mxu0 %v2636
        %2767 = vmatpush.bf16.msra.mxu0 %v2632
        %2768 = vmatmul.bf16.gmra.mxu0 %v2350
        %v2769 = vpop.f32.mrf.mxu0
        %v2770 = vadd.f32 %v2432, %v2769
        %v2771 = vpop.f32.mrf.mxu0
        %v2772 = vadd.f32 %v2432, %v2771
        %2773 = vmatmul.bf16.gmra.mxu0 %v2352
        %v2774 = vpop.f32.mrf.mxu0
        %v2775 = vadd.f32 %v2432, %v2774
        %v2776 = vpop.f32.mrf.mxu0
        %v2777 = vadd.f32 %v2432, %v2776
        %2778 = vmatmul.bf16.gmra.mxu0 %v2354
        %v2779 = vpop.f32.mrf.mxu0
        %v2780 = vadd.f32 %v2432, %v2779
        %v2781 = vpop.f32.mrf.mxu0
        %v2782 = vadd.f32 %v2432, %v2781
        %2783 = vmatmul.bf16.gmra.mxu0 %v2356
        %v2784 = vpop.f32.mrf.mxu0
        %v2785 = vadd.f32 %v2432, %v2784
        %v2786 = vpop.f32.mrf.mxu0
        %v2787 = vadd.f32 %v2432, %v2786
        %2788 = vmatmul.bf16.gmra.mxu0 %v2358
        %v2789 = vpop.f32.mrf.mxu0
        %v2790 = vadd.f32 %v2432, %v2789
        %v2791 = vpop.f32.mrf.mxu0
        %v2792 = vadd.f32 %v2432, %v2791
        %2793 = vmatmul.bf16.gmra.mxu0 %v2360
        %v2794 = vpop.f32.mrf.mxu0
        %v2795 = vadd.f32 %v2432, %v2794
        %v2796 = vpop.f32.mrf.mxu0
        %v2797 = vadd.f32 %v2432, %v2796
        %2798 = vmatmul.bf16.gmra.mxu0 %v2362
        %v2799 = vpop.f32.mrf.mxu0
        %v2800 = vadd.f32 %v2432, %v2799
        %v2801 = vpop.f32.mrf.mxu0
        %v2802 = vadd.f32 %v2432, %v2801
        %2803 = vmatmul.bf16.gmra.mxu0 %v2364
        %v2804 = vpop.f32.mrf.mxu0
        %v2805 = vadd.f32 %v2432, %v2804
        %v2806 = vpop.f32.mrf.mxu0
        %v2807 = vadd.f32 %v2432, %v2806
        %2808 = vdwg.mxu0
        %2809 = vmatpush.bf16.msra.mxu0 %v2692
        %2810 = vmatpush.bf16.msra.mxu0 %v2688
        %2811 = vmatpush.bf16.msra.mxu0 %v2684
        %2812 = vmatpush.bf16.msra.mxu0 %v2680
        %2813 = vmatpush.bf16.msra.mxu0 %v2676
        %2814 = vmatpush.bf16.msra.mxu0 %v2672
        %2815 = vmatpush.bf16.msra.mxu0 %v2668
        %2816 = vmatpush.bf16.msra.mxu0 %v2664
        %2817 = vmatmul.bf16.gmra.mxu0 %v2351
        %v2818 = vpop.f32.mrf.mxu0
        %v2819 = vadd.f32 %v2770, %v2818
        %v2820 = vpop.f32.mrf.mxu0
        %v2821 = vadd.f32 %v2772, %v2820
        %2822 = vmatmul.bf16.gmra.mxu0 %v2353
        %v2823 = vpop.f32.mrf.mxu0
        %v2824 = vadd.f32 %v2775, %v2823
        %v2825 = vpop.f32.mrf.mxu0
        %v2826 = vadd.f32 %v2777, %v2825
        %2827 = vmatmul.bf16.gmra.mxu0 %v2355
        %v2828 = vpop.f32.mrf.mxu0
        %v2829 = vadd.f32 %v2780, %v2828
        %v2830 = vpop.f32.mrf.mxu0
        %v2831 = vadd.f32 %v2782, %v2830
        %2832 = vmatmul.bf16.gmra.mxu0 %v2357
        %v2833 = vpop.f32.mrf.mxu0
        %v2834 = vadd.f32 %v2785, %v2833
        %v2835 = vpop.f32.mrf.mxu0
        %v2836 = vadd.f32 %v2787, %v2835
        %2837 = vmatmul.bf16.gmra.mxu0 %v2359
        %v2838 = vpop.f32.mrf.mxu0
        %v2839 = vadd.f32 %v2790, %v2838
        %v2840 = vpop.f32.mrf.mxu0
        %v2841 = vadd.f32 %v2792, %v2840
        %2842 = vmatmul.bf16.gmra.mxu0 %v2361
        %v2843 = vpop.f32.mrf.mxu0
        %v2844 = vadd.f32 %v2795, %v2843
        %v2845 = vpop.f32.mrf.mxu0
        %v2846 = vadd.f32 %v2797, %v2845
        %2847 = vmatmul.bf16.gmra.mxu0 %v2363
        %v2848 = vpop.f32.mrf.mxu0
        %v2849 = vadd.f32 %v2800, %v2848
        %v2850 = vpop.f32.mrf.mxu0
        %v2851 = vadd.f32 %v2802, %v2850
        %2852 = vmatmul.bf16.gmra.mxu0 %v2365
        %v2853 = vpop.f32.mrf.mxu0
        %v2854 = vadd.f32 %v2805, %v2853
        %v2855 = vpop.f32.mrf.mxu0
        %v2856 = vadd.f32 %v2807, %v2855
        %2857 = vdwg.mxu0
        %2858 = vmatpush.bf16.msra.mxu0 %v2661
        %2859 = vmatpush.bf16.msra.mxu0 %v2657
        %2860 = vmatpush.bf16.msra.mxu0 %v2653
        %2861 = vmatpush.bf16.msra.mxu0 %v2649
        %2862 = vmatpush.bf16.msra.mxu0 %v2645
        %2863 = vmatpush.bf16.msra.mxu0 %v2641
        %2864 = vmatpush.bf16.msra.mxu0 %v2637
        %2865 = vmatpush.bf16.msra.mxu0 %v2633
        %2866 = vmatmul.bf16.gmra.mxu0 %v2350
        %v2867 = vpop.f32.mrf.mxu0
        %v2868 = vadd.f32 %v2433, %v2867
        %v2869 = vpop.f32.mrf.mxu0
        %v2870 = vadd.f32 %v2433, %v2869
        %2871 = vmatmul.bf16.gmra.mxu0 %v2352
        %v2872 = vpop.f32.mrf.mxu0
        %v2873 = vadd.f32 %v2433, %v2872
        %v2874 = vpop.f32.mrf.mxu0
        %v2875 = vadd.f32 %v2433, %v2874
        %2876 = vmatmul.bf16.gmra.mxu0 %v2354
        %v2877 = vpop.f32.mrf.mxu0
        %v2878 = vadd.f32 %v2433, %v2877
        %v2879 = vpop.f32.mrf.mxu0
        %v2880 = vadd.f32 %v2433, %v2879
        %2881 = vmatmul.bf16.gmra.mxu0 %v2356
        %v2882 = vpop.f32.mrf.mxu0
        %v2883 = vadd.f32 %v2433, %v2882
        %v2884 = vpop.f32.mrf.mxu0
        %v2885 = vadd.f32 %v2433, %v2884
        %2886 = vmatmul.bf16.gmra.mxu0 %v2358
        %v2887 = vpop.f32.mrf.mxu0
        %v2888 = vadd.f32 %v2433, %v2887
        %v2889 = vpop.f32.mrf.mxu0
        %v2890 = vadd.f32 %v2433, %v2889
        %2891 = vmatmul.bf16.gmra.mxu0 %v2360
        %v2892 = vpop.f32.mrf.mxu0
        %v2893 = vadd.f32 %v2433, %v2892
        %v2894 = vpop.f32.mrf.mxu0
        %v2895 = vadd.f32 %v2433, %v2894
        %2896 = vmatmul.bf16.gmra.mxu0 %v2362
        %v2897 = vpop.f32.mrf.mxu0
        %v2898 = vadd.f32 %v2433, %v2897
        %v2899 = vpop.f32.mrf.mxu0
        %v2900 = vadd.f32 %v2433, %v2899
        %2901 = vmatmul.bf16.gmra.mxu0 %v2364
        %v2902 = vpop.f32.mrf.mxu0
        %v2903 = vadd.f32 %v2433, %v2902
        %v2904 = vpop.f32.mrf.mxu0
        %v2905 = vadd.f32 %v2433, %v2904
        %2906 = vdwg.mxu0
        %2907 = vmatpush.bf16.msra.mxu0 %v2693
        %2908 = vmatpush.bf16.msra.mxu0 %v2689
        %2909 = vmatpush.bf16.msra.mxu0 %v2685
        %2910 = vmatpush.bf16.msra.mxu0 %v2681
        %2911 = vmatpush.bf16.msra.mxu0 %v2677
        %2912 = vmatpush.bf16.msra.mxu0 %v2673
        %2913 = vmatpush.bf16.msra.mxu0 %v2669
        %2914 = vmatpush.bf16.msra.mxu0 %v2665
        %2915 = vmatmul.bf16.gmra.mxu0 %v2351
        %v2916 = vpop.f32.mrf.mxu0
        %v2917 = vadd.f32 %v2868, %v2916
        %v2918 = vpop.f32.mrf.mxu0
        %v2919 = vadd.f32 %v2870, %v2918
        %2920 = vmatmul.bf16.gmra.mxu0 %v2353
        %v2921 = vpop.f32.mrf.mxu0
        %v2922 = vadd.f32 %v2873, %v2921
        %v2923 = vpop.f32.mrf.mxu0
        %v2924 = vadd.f32 %v2875, %v2923
        %2925 = vmatmul.bf16.gmra.mxu0 %v2355
        %v2926 = vpop.f32.mrf.mxu0
        %v2927 = vadd.f32 %v2878, %v2926
        %v2928 = vpop.f32.mrf.mxu0
        %v2929 = vadd.f32 %v2880, %v2928
        %2930 = vmatmul.bf16.gmra.mxu0 %v2357
        %v2931 = vpop.f32.mrf.mxu0
        %v2932 = vadd.f32 %v2883, %v2931
        %v2933 = vpop.f32.mrf.mxu0
        %v2934 = vadd.f32 %v2885, %v2933
        %2935 = vmatmul.bf16.gmra.mxu0 %v2359
        %v2936 = vpop.f32.mrf.mxu0
        %v2937 = vadd.f32 %v2888, %v2936
        %v2938 = vpop.f32.mrf.mxu0
        %v2939 = vadd.f32 %v2890, %v2938
        %2940 = vmatmul.bf16.gmra.mxu0 %v2361
        %v2941 = vpop.f32.mrf.mxu0
        %v2942 = vadd.f32 %v2893, %v2941
        %v2943 = vpop.f32.mrf.mxu0
        %v2944 = vadd.f32 %v2895, %v2943
        %2945 = vmatmul.bf16.gmra.mxu0 %v2363
        %v2946 = vpop.f32.mrf.mxu0
        %v2947 = vadd.f32 %v2898, %v2946
        %v2948 = vpop.f32.mrf.mxu0
        %v2949 = vadd.f32 %v2900, %v2948
        %2950 = vmatmul.bf16.gmra.mxu0 %v2365
        %v2951 = vpop.f32.mrf.mxu0
        %v2952 = vadd.f32 %v2903, %v2951
        %v2953 = vpop.f32.mrf.mxu0
        %v2954 = vadd.f32 %v2905, %v2953
        %2955 = vdwg.mxu0
        %2956 = vmatpush.bf16.msra.mxu0 %v2662
        %2957 = vmatpush.bf16.msra.mxu0 %v2658
        %2958 = vmatpush.bf16.msra.mxu0 %v2654
        %2959 = vmatpush.bf16.msra.mxu0 %v2650
        %2960 = vmatpush.bf16.msra.mxu0 %v2646
        %2961 = vmatpush.bf16.msra.mxu0 %v2642
        %2962 = vmatpush.bf16.msra.mxu0 %v2638
        %2963 = vmatpush.bf16.msra.mxu0 %v2634
        %2964 = vmatmul.bf16.gmra.mxu0 %v2350
        %v2965 = vpop.f32.mrf.mxu0
        %v2966 = vadd.f32 %v2434, %v2965
        %v2967 = vpop.f32.mrf.mxu0
        %v2968 = vadd.f32 %v2434, %v2967
        %2969 = vmatmul.bf16.gmra.mxu0 %v2352
        %v2970 = vpop.f32.mrf.mxu0
        %v2971 = vadd.f32 %v2434, %v2970
        %v2972 = vpop.f32.mrf.mxu0
        %v2973 = vadd.f32 %v2434, %v2972
        %2974 = vmatmul.bf16.gmra.mxu0 %v2354
        %v2975 = vpop.f32.mrf.mxu0
        %v2976 = vadd.f32 %v2434, %v2975
        %v2977 = vpop.f32.mrf.mxu0
        %v2978 = vadd.f32 %v2434, %v2977
        %2979 = vmatmul.bf16.gmra.mxu0 %v2356
        %v2980 = vpop.f32.mrf.mxu0
        %v2981 = vadd.f32 %v2434, %v2980
        %v2982 = vpop.f32.mrf.mxu0
        %v2983 = vadd.f32 %v2434, %v2982
        %2984 = vmatmul.bf16.gmra.mxu0 %v2358
        %v2985 = vpop.f32.mrf.mxu0
        %v2986 = vadd.f32 %v2434, %v2985
        %v2987 = vpop.f32.mrf.mxu0
        %v2988 = vadd.f32 %v2434, %v2987
        %2989 = vmatmul.bf16.gmra.mxu0 %v2360
        %v2990 = vpop.f32.mrf.mxu0
        %v2991 = vadd.f32 %v2434, %v2990
        %v2992 = vpop.f32.mrf.mxu0
        %v2993 = vadd.f32 %v2434, %v2992
        %2994 = vmatmul.bf16.gmra.mxu0 %v2362
        %v2995 = vpop.f32.mrf.mxu0
        %v2996 = vadd.f32 %v2434, %v2995
        %v2997 = vpop.f32.mrf.mxu0
        %v2998 = vadd.f32 %v2434, %v2997
        %2999 = vmatmul.bf16.gmra.mxu0 %v2364
        %v3000 = vpop.f32.mrf.mxu0
        %v3001 = vadd.f32 %v2434, %v3000
        %v3002 = vpop.f32.mrf.mxu0
        %v3003 = vadd.f32 %v2434, %v3002
        %3004 = vdwg.mxu0
        %3005 = vmatpush.bf16.msra.mxu0 %v2694
        %3006 = vmatpush.bf16.msra.mxu0 %v2690
        %3007 = vmatpush.bf16.msra.mxu0 %v2686
        %3008 = vmatpush.bf16.msra.mxu0 %v2682
        %3009 = vmatpush.bf16.msra.mxu0 %v2678
        %3010 = vmatpush.bf16.msra.mxu0 %v2674
        %3011 = vmatpush.bf16.msra.mxu0 %v2670
        %3012 = vmatpush.bf16.msra.mxu0 %v2666
        %3013 = vmatmul.bf16.gmra.mxu0 %v2351
        %v3014 = vpop.f32.mrf.mxu0
        %v3015 = vadd.f32 %v2966, %v3014
        %v3016 = vpop.f32.mrf.mxu0
        %v3017 = vadd.f32 %v2968, %v3016
        %3018 = vmatmul.bf16.gmra.mxu0 %v2353
        %v3019 = vpop.f32.mrf.mxu0
        %v3020 = vadd.f32 %v2971, %v3019
        %v3021 = vpop.f32.mrf.mxu0
        %v3022 = vadd.f32 %v2973, %v3021
        %3023 = vmatmul.bf16.gmra.mxu0 %v2355
        %v3024 = vpop.f32.mrf.mxu0
        %v3025 = vadd.f32 %v2976, %v3024
        %v3026 = vpop.f32.mrf.mxu0
        %v3027 = vadd.f32 %v2978, %v3026
        %3028 = vmatmul.bf16.gmra.mxu0 %v2357
        %v3029 = vpop.f32.mrf.mxu0
        %v3030 = vadd.f32 %v2981, %v3029
        %v3031 = vpop.f32.mrf.mxu0
        %v3032 = vadd.f32 %v2983, %v3031
        %3033 = vmatmul.bf16.gmra.mxu0 %v2359
        %v3034 = vpop.f32.mrf.mxu0
        %v3035 = vadd.f32 %v2986, %v3034
        %v3036 = vpop.f32.mrf.mxu0
        %v3037 = vadd.f32 %v2988, %v3036
        %3038 = vmatmul.bf16.gmra.mxu0 %v2361
        %v3039 = vpop.f32.mrf.mxu0
        %v3040 = vadd.f32 %v2991, %v3039
        %v3041 = vpop.f32.mrf.mxu0
        %v3042 = vadd.f32 %v2993, %v3041
        %3043 = vmatmul.bf16.gmra.mxu0 %v2363
        %v3044 = vpop.f32.mrf.mxu0
        %v3045 = vadd.f32 %v2996, %v3044
        %v3046 = vpop.f32.mrf.mxu0
        %v3047 = vadd.f32 %v2998, %v3046
        %3048 = vmatmul.bf16.gmra.mxu0 %v2365
        %v3049 = vpop.f32.mrf.mxu0
        %v3050 = vadd.f32 %v3001, %v3049
        %v3051 = vpop.f32.mrf.mxu0
        %v3052 = vadd.f32 %v3003, %v3051
        %3053 = vdwg.mxu0
        %3054 = vmatpush.bf16.msra.mxu0 %v2663
        %3055 = vmatpush.bf16.msra.mxu0 %v2659
        %3056 = vmatpush.bf16.msra.mxu0 %v2655
        %3057 = vmatpush.bf16.msra.mxu0 %v2651
        %3058 = vmatpush.bf16.msra.mxu0 %v2647
        %3059 = vmatpush.bf16.msra.mxu0 %v2643
        %3060 = vmatpush.bf16.msra.mxu0 %v2639
        %3061 = vmatpush.bf16.msra.mxu0 %v2635
        %3062 = vmatmul.bf16.gmra.mxu0 %v2350
        %v3063 = vpop.f32.mrf.mxu0
        %v3064 = vadd.f32 %v2435, %v3063
        %v3065 = vpop.f32.mrf.mxu0
        %v3066 = vadd.f32 %v2435, %v3065
        %3067 = vmatmul.bf16.gmra.mxu0 %v2352
        %v3068 = vpop.f32.mrf.mxu0
        %v3069 = vadd.f32 %v2435, %v3068
        %v3070 = vpop.f32.mrf.mxu0
        %v3071 = vadd.f32 %v2435, %v3070
        %3072 = vmatmul.bf16.gmra.mxu0 %v2354
        %v3073 = vpop.f32.mrf.mxu0
        %v3074 = vadd.f32 %v2435, %v3073
        %v3075 = vpop.f32.mrf.mxu0
        %v3076 = vadd.f32 %v2435, %v3075
        %3077 = vmatmul.bf16.gmra.mxu0 %v2356
        %v3078 = vpop.f32.mrf.mxu0
        %v3079 = vadd.f32 %v2435, %v3078
        %v3080 = vpop.f32.mrf.mxu0
        %v3081 = vadd.f32 %v2435, %v3080
        %3082 = vmatmul.bf16.gmra.mxu0 %v2358
        %v3083 = vpop.f32.mrf.mxu0
        %v3084 = vadd.f32 %v2435, %v3083
        %v3085 = vpop.f32.mrf.mxu0
        %v3086 = vadd.f32 %v2435, %v3085
        %3087 = vmatmul.bf16.gmra.mxu0 %v2360
        %v3088 = vpop.f32.mrf.mxu0
        %v3089 = vadd.f32 %v2435, %v3088
        %v3090 = vpop.f32.mrf.mxu0
        %v3091 = vadd.f32 %v2435, %v3090
        %3092 = vmatmul.bf16.gmra.mxu0 %v2362
        %v3093 = vpop.f32.mrf.mxu0
        %v3094 = vadd.f32 %v2435, %v3093
        %v3095 = vpop.f32.mrf.mxu0
        %v3096 = vadd.f32 %v2435, %v3095
        %3097 = vmatmul.bf16.gmra.mxu0 %v2364
        %v3098 = vpop.f32.mrf.mxu0
        %v3099 = vadd.f32 %v2435, %v3098
        %v3100 = vpop.f32.mrf.mxu0
        %v3101 = vadd.f32 %v2435, %v3100
        %3102 = vdwg.mxu0
        %3103 = vmatpush.bf16.msra.mxu0 %v2695
        %3104 = vmatpush.bf16.msra.mxu0 %v2691
        %3105 = vmatpush.bf16.msra.mxu0 %v2687
        %3106 = vmatpush.bf16.msra.mxu0 %v2683
        %3107 = vmatpush.bf16.msra.mxu0 %v2679
        %3108 = vmatpush.bf16.msra.mxu0 %v2675
        %3109 = vmatpush.bf16.msra.mxu0 %v2671
        %3110 = vmatpush.bf16.msra.mxu0 %v2667
        %3111 = vmatmul.bf16.gmra.mxu0 %v2351
        %v3112 = vpop.f32.mrf.mxu0
        %v3113 = vadd.f32 %v3064, %v3112
        %v3114 = vpop.f32.mrf.mxu0
        %v3115 = vadd.f32 %v3066, %v3114
        %3116 = vmatmul.bf16.gmra.mxu0 %v2353
        %v3117 = vpop.f32.mrf.mxu0
        %v3118 = vadd.f32 %v3069, %v3117
        %v3119 = vpop.f32.mrf.mxu0
        %v3120 = vadd.f32 %v3071, %v3119
        %3121 = vmatmul.bf16.gmra.mxu0 %v2355
        %v3122 = vpop.f32.mrf.mxu0
        %v3123 = vadd.f32 %v3074, %v3122
        %v3124 = vpop.f32.mrf.mxu0
        %v3125 = vadd.f32 %v3076, %v3124
        %3126 = vmatmul.bf16.gmra.mxu0 %v2357
        %v3127 = vpop.f32.mrf.mxu0
        %v3128 = vadd.f32 %v3079, %v3127
        %v3129 = vpop.f32.mrf.mxu0
        %v3130 = vadd.f32 %v3081, %v3129
        %3131 = vmatmul.bf16.gmra.mxu0 %v2359
        %v3132 = vpop.f32.mrf.mxu0
        %v3133 = vadd.f32 %v3084, %v3132
        %v3134 = vpop.f32.mrf.mxu0
        %v3135 = vadd.f32 %v3086, %v3134
        %3136 = vmatmul.bf16.gmra.mxu0 %v2361
        %v3137 = vpop.f32.mrf.mxu0
        %v3138 = vadd.f32 %v3089, %v3137
        %v3139 = vpop.f32.mrf.mxu0
        %v3140 = vadd.f32 %v3091, %v3139
        %3141 = vmatmul.bf16.gmra.mxu0 %v2363
        %v3142 = vpop.f32.mrf.mxu0
        %v3143 = vadd.f32 %v3094, %v3142
        %v3144 = vpop.f32.mrf.mxu0
        %v3145 = vadd.f32 %v3096, %v3144
        %3146 = vmatmul.bf16.gmra.mxu0 %v2365
        %v3147 = vpop.f32.mrf.mxu0
        %v3148 = vadd.f32 %v3099, %v3147
        %v3149 = vpop.f32.mrf.mxu0
        %v3150 = vadd.f32 %v3101, %v3149
        %3151 = vdwg.mxu0
        %v3152 = vmax.f32 %v2819, %v2917
        %v3153 = vmax.f32 %v3152, %v3015
        %v3154 = vmax.f32 %v3153, %v3113
        %3155 = vmax.xlane.f32.xlu0 %v3154
        %v3156 = vpop.xlane.xlu0 %3155
        %v3157 = vmax.f32 %v2821, %v2919
        %v3158 = vmax.f32 %v3157, %v3017
        %v3159 = vmax.f32 %v3158, %v3115
        %3160 = vmax.xlane.f32.xlu0 %v3159
        %v3161 = vpop.xlane.xlu0 %3160
        %v3162 = vmax.f32 %v2824, %v2922
        %v3163 = vmax.f32 %v3162, %v3020
        %v3164 = vmax.f32 %v3163, %v3118
        %3165 = vmax.xlane.f32.xlu0 %v3164
        %v3166 = vpop.xlane.xlu0 %3165
        %v3167 = vmax.f32 %v2826, %v2924
        %v3168 = vmax.f32 %v3167, %v3022
        %v3169 = vmax.f32 %v3168, %v3120
        %3170 = vmax.xlane.f32.xlu0 %v3169
        %v3171 = vpop.xlane.xlu0 %3170
        %v3172 = vmax.f32 %v2829, %v2927
        %v3173 = vmax.f32 %v3172, %v3025
        %v3174 = vmax.f32 %v3173, %v3123
        %3175 = vmax.xlane.f32.xlu0 %v3174
        %v3176 = vpop.xlane.xlu0 %3175
        %v3177 = vmax.f32 %v2831, %v2929
        %v3178 = vmax.f32 %v3177, %v3027
        %v3179 = vmax.f32 %v3178, %v3125
        %3180 = vmax.xlane.f32.xlu0 %v3179
        %v3181 = vpop.xlane.xlu0 %3180
        %v3182 = vmax.f32 %v2834, %v2932
        %v3183 = vmax.f32 %v3182, %v3030
        %v3184 = vmax.f32 %v3183, %v3128
        %3185 = vmax.xlane.f32.xlu0 %v3184
        %v3186 = vpop.xlane.xlu0 %3185
        %v3187 = vmax.f32 %v2836, %v2934
        %v3188 = vmax.f32 %v3187, %v3032
        %v3189 = vmax.f32 %v3188, %v3130
        %3190 = vmax.xlane.f32.xlu0 %v3189
        %v3191 = vpop.xlane.xlu0 %3190
        %v3192 = vmax.f32 %v2839, %v2937
        %v3193 = vmax.f32 %v3192, %v3035
        %v3194 = vmax.f32 %v3193, %v3133
        %3195 = vmax.xlane.f32.xlu0 %v3194
        %v3196 = vpop.xlane.xlu0 %3195
        %v3197 = vmax.f32 %v2841, %v2939
        %v3198 = vmax.f32 %v3197, %v3037
        %v3199 = vmax.f32 %v3198, %v3135
        %3200 = vmax.xlane.f32.xlu0 %v3199
        %v3201 = vpop.xlane.xlu0 %3200
        %v3202 = vmax.f32 %v2844, %v2942
        %v3203 = vmax.f32 %v3202, %v3040
        %v3204 = vmax.f32 %v3203, %v3138
        %3205 = vmax.xlane.f32.xlu0 %v3204
        %v3206 = vpop.xlane.xlu0 %3205
        %v3207 = vmax.f32 %v2846, %v2944
        %v3208 = vmax.f32 %v3207, %v3042
        %v3209 = vmax.f32 %v3208, %v3140
        %3210 = vmax.xlane.f32.xlu0 %v3209
        %v3211 = vpop.xlane.xlu0 %3210
        %v3212 = vmax.f32 %v2849, %v2947
        %v3213 = vmax.f32 %v3212, %v3045
        %v3214 = vmax.f32 %v3213, %v3143
        %3215 = vmax.xlane.f32.xlu0 %v3214
        %v3216 = vpop.xlane.xlu0 %3215
        %v3217 = vmax.f32 %v2851, %v2949
        %v3218 = vmax.f32 %v3217, %v3047
        %v3219 = vmax.f32 %v3218, %v3145
        %3220 = vmax.xlane.f32.xlu0 %v3219
        %v3221 = vpop.xlane.xlu0 %3220
        %v3222 = vmax.f32 %v2854, %v2952
        %v3223 = vmax.f32 %v3222, %v3050
        %v3224 = vmax.f32 %v3223, %v3148
        %3225 = vmax.xlane.f32.xlu0 %v3224
        %v3226 = vpop.xlane.xlu0 %3225
        %v3227 = vmax.f32 %v2856, %v2954
        %v3228 = vmax.f32 %v3227, %v3052
        %v3229 = vmax.f32 %v3228, %v3150
        %3230 = vmax.xlane.f32.xlu0 %v3229
        %v3231 = vpop.xlane.xlu0 %3230
        %v3232 = vsub.f32 %v2819, %v3156
        %v3233 = vsub.f32 %v2917, %v3156
        %v3234 = vsub.f32 %v3015, %v3156
        %v3235 = vsub.f32 %v3113, %v3156
        %v3236 = vsub.f32 %v2821, %v3161
        %v3237 = vsub.f32 %v2919, %v3161
        %v3238 = vsub.f32 %v3017, %v3161
        %v3239 = vsub.f32 %v3115, %v3161
        %v3240 = vsub.f32 %v2824, %v3166
        %v3241 = vsub.f32 %v2922, %v3166
        %v3242 = vsub.f32 %v3020, %v3166
        %v3243 = vsub.f32 %v3118, %v3166
        %v3244 = vsub.f32 %v2826, %v3171
        %v3245 = vsub.f32 %v2924, %v3171
        %v3246 = vsub.f32 %v3022, %v3171
        %v3247 = vsub.f32 %v3120, %v3171
        %v3248 = vsub.f32 %v2829, %v3176
        %v3249 = vsub.f32 %v2927, %v3176
        %v3250 = vsub.f32 %v3025, %v3176
        %v3251 = vsub.f32 %v3123, %v3176
        %v3252 = vsub.f32 %v2831, %v3181
        %v3253 = vsub.f32 %v2929, %v3181
        %v3254 = vsub.f32 %v3027, %v3181
        %v3255 = vsub.f32 %v3125, %v3181
        %v3256 = vsub.f32 %v2834, %v3186
        %v3257 = vsub.f32 %v2932, %v3186
        %v3258 = vsub.f32 %v3030, %v3186
        %v3259 = vsub.f32 %v3128, %v3186
        %v3260 = vsub.f32 %v2836, %v3191
        %v3261 = vsub.f32 %v2934, %v3191
        %v3262 = vsub.f32 %v3032, %v3191
        %v3263 = vsub.f32 %v3130, %v3191
        %v3264 = vsub.f32 %v2839, %v3196
        %v3265 = vsub.f32 %v2937, %v3196
        %v3266 = vsub.f32 %v3035, %v3196
        %v3267 = vsub.f32 %v3133, %v3196
        %v3268 = vsub.f32 %v2841, %v3201
        %v3269 = vsub.f32 %v2939, %v3201
        %v3270 = vsub.f32 %v3037, %v3201
        %v3271 = vsub.f32 %v3135, %v3201
        %v3272 = vsub.f32 %v2844, %v3206
        %v3273 = vsub.f32 %v2942, %v3206
        %v3274 = vsub.f32 %v3040, %v3206
        %v3275 = vsub.f32 %v3138, %v3206
        %v3276 = vsub.f32 %v2846, %v3211
        %v3277 = vsub.f32 %v2944, %v3211
        %v3278 = vsub.f32 %v3042, %v3211
        %v3279 = vsub.f32 %v3140, %v3211
        %v3280 = vsub.f32 %v2849, %v3216
        %v3281 = vsub.f32 %v2947, %v3216
        %v3282 = vsub.f32 %v3045, %v3216
        %v3283 = vsub.f32 %v3143, %v3216
        %v3284 = vsub.f32 %v2851, %v3221
        %v3285 = vsub.f32 %v2949, %v3221
        %v3286 = vsub.f32 %v3047, %v3221
        %v3287 = vsub.f32 %v3145, %v3221
        %v3288 = vsub.f32 %v2854, %v3226
        %v3289 = vsub.f32 %v2952, %v3226
        %v3290 = vsub.f32 %v3050, %v3226
        %v3291 = vsub.f32 %v3148, %v3226
        %v3292 = vsub.f32 %v2856, %v3231
        %v3293 = vsub.f32 %v2954, %v3231
        %v3294 = vsub.f32 %v3052, %v3231
        %v3295 = vsub.f32 %v3150, %v3231
        %v3296 = vmul.f32 %v3232, 1.442695
        %v3297 = vpow.pop %v3296
        %v3298 = vmul.f32 %v3233, 1.442695
        %v3299 = vpow.pop %v3298
        %v3300 = vmul.f32 %v3234, 1.442695
        %v3301 = vpow.pop %v3300
        %v3302 = vmul.f32 %v3235, 1.442695
        %v3303 = vpow.pop %v3302
        %v3304 = vmul.f32 %v3236, 1.442695
        %v3305 = vpow.pop %v3304
        %v3306 = vmul.f32 %v3237, 1.442695
        %v3307 = vpow.pop %v3306
        %v3308 = vmul.f32 %v3238, 1.442695
        %v3309 = vpow.pop %v3308
        %v3310 = vmul.f32 %v3239, 1.442695
        %v3311 = vpow.pop %v3310
        %v3312 = vmul.f32 %v3240, 1.442695
        %v3313 = vpow.pop %v3312
        %v3314 = vmul.f32 %v3241, 1.442695
        %v3315 = vpow.pop %v3314
        %v3316 = vmul.f32 %v3242, 1.442695
        %v3317 = vpow.pop %v3316
        %v3318 = vmul.f32 %v3243, 1.442695
        %v3319 = vpow.pop %v3318
        %v3320 = vmul.f32 %v3244, 1.442695
        %v3321 = vpow.pop %v3320
        %v3322 = vmul.f32 %v3245, 1.442695
        %v3323 = vpow.pop %v3322
        %v3324 = vmul.f32 %v3246, 1.442695
        %v3325 = vpow.pop %v3324
        %v3326 = vmul.f32 %v3247, 1.442695
        %v3327 = vpow.pop %v3326
        %v3328 = vmul.f32 %v3248, 1.442695
        %v3329 = vpow.pop %v3328
        %v3330 = vmul.f32 %v3249, 1.442695
        %v3331 = vpow.pop %v3330
        %v3332 = vmul.f32 %v3250, 1.442695
        %v3333 = vpow.pop %v3332
        %v3334 = vmul.f32 %v3251, 1.442695
        %v3335 = vpow.pop %v3334
        %v3336 = vmul.f32 %v3252, 1.442695
        %v3337 = vpow.pop %v3336
        %v3338 = vmul.f32 %v3253, 1.442695
        %v3339 = vpow.pop %v3338
        %v3340 = vmul.f32 %v3254, 1.442695
        %v3341 = vpow.pop %v3340
        %v3342 = vmul.f32 %v3255, 1.442695
        %v3343 = vpow.pop %v3342
        %v3344 = vmul.f32 %v3256, 1.442695
        %v3345 = vpow.pop %v3344
        %v3346 = vmul.f32 %v3257, 1.442695
        %v3347 = vpow.pop %v3346
        %v3348 = vmul.f32 %v3258, 1.442695
        %v3349 = vpow.pop %v3348
        %v3350 = vmul.f32 %v3259, 1.442695
        %v3351 = vpow.pop %v3350
        %v3352 = vmul.f32 %v3260, 1.442695
        %v3353 = vpow.pop %v3352
        %v3354 = vmul.f32 %v3261, 1.442695
        %v3355 = vpow.pop %v3354
        %v3356 = vmul.f32 %v3262, 1.442695
        %v3357 = vpow.pop %v3356
        %v3358 = vmul.f32 %v3263, 1.442695
        %v3359 = vpow.pop %v3358
        %v3360 = vmul.f32 %v3264, 1.442695
        %v3361 = vpow.pop %v3360
        %v3362 = vmul.f32 %v3265, 1.442695
        %v3363 = vpow.pop %v3362
        %v3364 = vmul.f32 %v3266, 1.442695
        %v3365 = vpow.pop %v3364
        %v3366 = vmul.f32 %v3267, 1.442695
        %v3367 = vpow.pop %v3366
        %v3368 = vmul.f32 %v3268, 1.442695
        %v3369 = vpow.pop %v3368
        %v3370 = vmul.f32 %v3269, 1.442695
        %v3371 = vpow.pop %v3370
        %v3372 = vmul.f32 %v3270, 1.442695
        %v3373 = vpow.pop %v3372
        %v3374 = vmul.f32 %v3271, 1.442695
        %v3375 = vpow.pop %v3374
        %v3376 = vmul.f32 %v3272, 1.442695
        %v3377 = vpow.pop %v3376
        %v3378 = vmul.f32 %v3273, 1.442695
        %v3379 = vpow.pop %v3378
        %v3380 = vmul.f32 %v3274, 1.442695
        %v3381 = vpow.pop %v3380
        %v3382 = vmul.f32 %v3275, 1.442695
        %v3383 = vpow.pop %v3382
        %v3384 = vmul.f32 %v3276, 1.442695
        %v3385 = vpow.pop %v3384
        %v3386 = vmul.f32 %v3277, 1.442695
        %v3387 = vpow.pop %v3386
        %v3388 = vmul.f32 %v3278, 1.442695
        %v3389 = vpow.pop %v3388
        %v3390 = vmul.f32 %v3279, 1.442695
        %v3391 = vpow.pop %v3390
        %v3392 = vmul.f32 %v3280, 1.442695
        %v3393 = vpow.pop %v3392
        %v3394 = vmul.f32 %v3281, 1.442695
        %v3395 = vpow.pop %v3394
        %v3396 = vmul.f32 %v3282, 1.442695
        %v3397 = vpow.pop %v3396
        %v3398 = vmul.f32 %v3283, 1.442695
        %v3399 = vpow.pop %v3398
        %v3400 = vmul.f32 %v3284, 1.442695
        %v3401 = vpow.pop %v3400
        %v3402 = vmul.f32 %v3285, 1.442695
        %v3403 = vpow.pop %v3402
        %v3404 = vmul.f32 %v3286, 1.442695
        %v3405 = vpow.pop %v3404
        %v3406 = vmul.f32 %v3287, 1.442695
        %v3407 = vpow.pop %v3406
        %v3408 = vmul.f32 %v3288, 1.442695
        %v3409 = vpow.pop %v3408
        %v3410 = vmul.f32 %v3289, 1.442695
        %v3411 = vpow.pop %v3410
        %v3412 = vmul.f32 %v3290, 1.442695
        %v3413 = vpow.pop %v3412
        %v3414 = vmul.f32 %v3291, 1.442695
        %v3415 = vpow.pop %v3414
        %v3416 = vmul.f32 %v3292, 1.442695
        %v3417 = vpow.pop %v3416
        %v3418 = vmul.f32 %v3293, 1.442695
        %v3419 = vpow.pop %v3418
        %v3420 = vmul.f32 %v3294, 1.442695
        %v3421 = vpow.pop %v3420
        %v3422 = vmul.f32 %v3295, 1.442695
        %v3423 = vpow.pop %v3422
        %v3424 = vadd.f32 %v3297, %v3299
        %v3425 = vadd.f32 %v3424, %v3301
        %v3426 = vadd.f32 %v3425, %v3303
        %3427 = vadd.xlane.f32.xlu0 %v3426
        %v3428 = vpop.xlane.xlu0 %3427
        %v3429 = vadd.f32 %v3305, %v3307
        %v3430 = vadd.f32 %v3429, %v3309
        %v3431 = vadd.f32 %v3430, %v3311
        %3432 = vadd.xlane.f32.xlu0 %v3431
        %v3433 = vpop.xlane.xlu0 %3432
        %v3434 = vadd.f32 %v3313, %v3315
        %v3435 = vadd.f32 %v3434, %v3317
        %v3436 = vadd.f32 %v3435, %v3319
        %3437 = vadd.xlane.f32.xlu0 %v3436
        %v3438 = vpop.xlane.xlu0 %3437
        %v3439 = vadd.f32 %v3321, %v3323
        %v3440 = vadd.f32 %v3439, %v3325
        %v3441 = vadd.f32 %v3440, %v3327
        %3442 = vadd.xlane.f32.xlu0 %v3441
        %v3443 = vpop.xlane.xlu0 %3442
        %v3444 = vadd.f32 %v3329, %v3331
        %v3445 = vadd.f32 %v3444, %v3333
        %v3446 = vadd.f32 %v3445, %v3335
        %3447 = vadd.xlane.f32.xlu0 %v3446
        %v3448 = vpop.xlane.xlu0 %3447
        %v3449 = vadd.f32 %v3337, %v3339
        %v3450 = vadd.f32 %v3449, %v3341
        %v3451 = vadd.f32 %v3450, %v3343
        %3452 = vadd.xlane.f32.xlu0 %v3451
        %v3453 = vpop.xlane.xlu0 %3452
        %v3454 = vadd.f32 %v3345, %v3347
        %v3455 = vadd.f32 %v3454, %v3349
        %v3456 = vadd.f32 %v3455, %v3351
        %3457 = vadd.xlane.f32.xlu0 %v3456
        %v3458 = vpop.xlane.xlu0 %3457
        %v3459 = vadd.f32 %v3353, %v3355
        %v3460 = vadd.f32 %v3459, %v3357
        %v3461 = vadd.f32 %v3460, %v3359
        %3462 = vadd.xlane.f32.xlu0 %v3461
        %v3463 = vpop.xlane.xlu0 %3462
        %v3464 = vadd.f32 %v3361, %v3363
        %v3465 = vadd.f32 %v3464, %v3365
        %v3466 = vadd.f32 %v3465, %v3367
        %3467 = vadd.xlane.f32.xlu0 %v3466
        %v3468 = vpop.xlane.xlu0 %3467
        %v3469 = vadd.f32 %v3369, %v3371
        %v3470 = vadd.f32 %v3469, %v3373
        %v3471 = vadd.f32 %v3470, %v3375
        %3472 = vadd.xlane.f32.xlu0 %v3471
        %v3473 = vpop.xlane.xlu0 %3472
        %v3474 = vadd.f32 %v3377, %v3379
        %v3475 = vadd.f32 %v3474, %v3381
        %v3476 = vadd.f32 %v3475, %v3383
        %3477 = vadd.xlane.f32.xlu0 %v3476
        %v3478 = vpop.xlane.xlu0 %3477
        %v3479 = vadd.f32 %v3385, %v3387
        %v3480 = vadd.f32 %v3479, %v3389
        %v3481 = vadd.f32 %v3480, %v3391
        %3482 = vadd.xlane.f32.xlu0 %v3481
        %v3483 = vpop.xlane.xlu0 %3482
        %v3484 = vadd.f32 %v3393, %v3395
        %v3485 = vadd.f32 %v3484, %v3397
        %v3486 = vadd.f32 %v3485, %v3399
        %3487 = vadd.xlane.f32.xlu0 %v3486
        %v3488 = vpop.xlane.xlu0 %3487
        %v3489 = vadd.f32 %v3401, %v3403
        %v3490 = vadd.f32 %v3489, %v3405
        %v3491 = vadd.f32 %v3490, %v3407
        %3492 = vadd.xlane.f32.xlu0 %v3491
        %v3493 = vpop.xlane.xlu0 %3492
        %v3494 = vadd.f32 %v3409, %v3411
        %v3495 = vadd.f32 %v3494, %v3413
        %v3496 = vadd.f32 %v3495, %v3415
        %3497 = vadd.xlane.f32.xlu0 %v3496
        %v3498 = vpop.xlane.xlu0 %3497
        %v3499 = vadd.f32 %v3417, %v3419
        %v3500 = vadd.f32 %v3499, %v3421
        %v3501 = vadd.f32 %v3500, %v3423
        %3502 = vadd.xlane.f32.xlu0 %v3501
        %v3503 = vpop.xlane.xlu0 %3502
        %v3504 = vlog2.pop %v3428
        %v3505 = vmul.f32 %v3504, 0.6931472
        %v3506 = vlog2.pop %v3433
        %v3507 = vmul.f32 %v3506, 0.6931472
        %v3508 = vlog2.pop %v3438
        %v3509 = vmul.f32 %v3508, 0.6931472
        %v3510 = vlog2.pop %v3443
        %v3511 = vmul.f32 %v3510, 0.6931472
        %v3512 = vlog2.pop %v3448
        %v3513 = vmul.f32 %v3512, 0.6931472
        %v3514 = vlog2.pop %v3453
        %v3515 = vmul.f32 %v3514, 0.6931472
        %v3516 = vlog2.pop %v3458
        %v3517 = vmul.f32 %v3516, 0.6931472
        %v3518 = vlog2.pop %v3463
        %v3519 = vmul.f32 %v3518, 0.6931472
        %v3520 = vlog2.pop %v3468
        %v3521 = vmul.f32 %v3520, 0.6931472
        %v3522 = vlog2.pop %v3473
        %v3523 = vmul.f32 %v3522, 0.6931472
        %v3524 = vlog2.pop %v3478
        %v3525 = vmul.f32 %v3524, 0.6931472
        %v3526 = vlog2.pop %v3483
        %v3527 = vmul.f32 %v3526, 0.6931472
        %v3528 = vlog2.pop %v3488
        %v3529 = vmul.f32 %v3528, 0.6931472
        %v3530 = vlog2.pop %v3493
        %v3531 = vmul.f32 %v3530, 0.6931472
        %v3532 = vlog2.pop %v3498
        %v3533 = vmul.f32 %v3532, 0.6931472
        %v3534 = vlog2.pop %v3503
        %v3535 = vmul.f32 %v3534, 0.6931472
        %v3536 = vsub.f32 %v3232, %v3505
        %v3537 = vsub.f32 %v3233, %v3505
        %v3538 = vsub.f32 %v3234, %v3505
        %v3539 = vsub.f32 %v3235, %v3505
        %v3540 = vsub.f32 %v3236, %v3507
        %v3541 = vsub.f32 %v3237, %v3507
        %v3542 = vsub.f32 %v3238, %v3507
        %v3543 = vsub.f32 %v3239, %v3507
        %v3544 = vsub.f32 %v3240, %v3509
        %v3545 = vsub.f32 %v3241, %v3509
        %v3546 = vsub.f32 %v3242, %v3509
        %v3547 = vsub.f32 %v3243, %v3509
        %v3548 = vsub.f32 %v3244, %v3511
        %v3549 = vsub.f32 %v3245, %v3511
        %v3550 = vsub.f32 %v3246, %v3511
        %v3551 = vsub.f32 %v3247, %v3511
        %v3552 = vsub.f32 %v3248, %v3513
        %v3553 = vsub.f32 %v3249, %v3513
        %v3554 = vsub.f32 %v3250, %v3513
        %v3555 = vsub.f32 %v3251, %v3513
        %v3556 = vsub.f32 %v3252, %v3515
        %v3557 = vsub.f32 %v3253, %v3515
        %v3558 = vsub.f32 %v3254, %v3515
        %v3559 = vsub.f32 %v3255, %v3515
        %v3560 = vsub.f32 %v3256, %v3517
        %v3561 = vsub.f32 %v3257, %v3517
        %v3562 = vsub.f32 %v3258, %v3517
        %v3563 = vsub.f32 %v3259, %v3517
        %v3564 = vsub.f32 %v3260, %v3519
        %v3565 = vsub.f32 %v3261, %v3519
        %v3566 = vsub.f32 %v3262, %v3519
        %v3567 = vsub.f32 %v3263, %v3519
        %v3568 = vsub.f32 %v3264, %v3521
        %v3569 = vsub.f32 %v3265, %v3521
        %v3570 = vsub.f32 %v3266, %v3521
        %v3571 = vsub.f32 %v3267, %v3521
        %v3572 = vsub.f32 %v3268, %v3523
        %v3573 = vsub.f32 %v3269, %v3523
        %v3574 = vsub.f32 %v3270, %v3523
        %v3575 = vsub.f32 %v3271, %v3523
        %v3576 = vsub.f32 %v3272, %v3525
        %v3577 = vsub.f32 %v3273, %v3525
        %v3578 = vsub.f32 %v3274, %v3525
        %v3579 = vsub.f32 %v3275, %v3525
        %v3580 = vsub.f32 %v3276, %v3527
        %v3581 = vsub.f32 %v3277, %v3527
        %v3582 = vsub.f32 %v3278, %v3527
        %v3583 = vsub.f32 %v3279, %v3527
        %v3584 = vsub.f32 %v3280, %v3529
        %v3585 = vsub.f32 %v3281, %v3529
        %v3586 = vsub.f32 %v3282, %v3529
        %v3587 = vsub.f32 %v3283, %v3529
        %v3588 = vsub.f32 %v3284, %v3531
        %v3589 = vsub.f32 %v3285, %v3531
        %v3590 = vsub.f32 %v3286, %v3531
        %v3591 = vsub.f32 %v3287, %v3531
        %v3592 = vsub.f32 %v3288, %v3533
        %v3593 = vsub.f32 %v3289, %v3533
        %v3594 = vsub.f32 %v3290, %v3533
        %v3595 = vsub.f32 %v3291, %v3533
        %v3596 = vsub.f32 %v3292, %v3535
        %v3597 = vsub.f32 %v3293, %v3535
        %v3598 = vsub.f32 %v3294, %v3535
        %v3599 = vsub.f32 %v3295, %v3535
        %3600 = vst [vmem:[%s577] sm:$0xff] %v3536
        %3601 = vst [vmem:[%s577 + $0x8] sm:$0xff] %v3537
        %3602 = vst [vmem:[%s577 + $0x10] sm:$0xff] %v3538
        %3603 = vst [vmem:[%s577 + $0x18] sm:$0xff] %v3539
        %3604 = vst [vmem:[%s577 + $0x20] sm:$0xff] %v3540
        %3605 = vst [vmem:[%s577 + $0x28] sm:$0xff] %v3541
        %3606 = vst [vmem:[%s577 + $0x30] sm:$0xff] %v3542
        %3607 = vst [vmem:[%s577 + $0x38] sm:$0xff] %v3543
        %3608 = vst [vmem:[%s577 + $0x40] sm:$0xff] %v3544
        %3609 = vst [vmem:[%s577 + $0x48] sm:$0xff] %v3545
        %3610 = vst [vmem:[%s577 + $0x50] sm:$0xff] %v3546
        %3611 = vst [vmem:[%s577 + $0x58] sm:$0xff] %v3547
        %3612 = vst [vmem:[%s577 + $0x60] sm:$0xff] %v3548
        %3613 = vst [vmem:[%s577 + $0x68] sm:$0xff] %v3549
        %3614 = vst [vmem:[%s577 + $0x70] sm:$0xff] %v3550
        %3615 = vst [vmem:[%s577 + $0x78] sm:$0xff] %v3551
        %3616 = vst [vmem:[%s577 + $0x80] sm:$0xff] %v3552
        %3617 = vst [vmem:[%s577 + $0x88] sm:$0xff] %v3553
        %3618 = vst [vmem:[%s577 + $0x90] sm:$0xff] %v3554
        %3619 = vst [vmem:[%s577 + $0x98] sm:$0xff] %v3555
        %3620 = vst [vmem:[%s577 + $0xa0] sm:$0xff] %v3556
        %3621 = vst [vmem:[%s577 + $0xa8] sm:$0xff] %v3557
        %3622 = vst [vmem:[%s577 + $0xb0] sm:$0xff] %v3558
        %3623 = vst [vmem:[%s577 + $0xb8] sm:$0xff] %v3559
        %3624 = vst [vmem:[%s577 + $0xc0] sm:$0xff] %v3560
        %3625 = vst [vmem:[%s577 + $0xc8] sm:$0xff] %v3561
        %3626 = vst [vmem:[%s577 + $0xd0] sm:$0xff] %v3562
        %3627 = vst [vmem:[%s577 + $0xd8] sm:$0xff] %v3563
        %3628 = vst [vmem:[%s577 + $0xe0] sm:$0xff] %v3564
        %3629 = vst [vmem:[%s577 + $0xe8] sm:$0xff] %v3565
        %3630 = vst [vmem:[%s577 + $0xf0] sm:$0xff] %v3566
        %3631 = vst [vmem:[%s577 + $0xf8] sm:$0xff] %v3567
        %3632 = vst [vmem:[%s577 + $0x100] sm:$0xff] %v3568
        %3633 = vst [vmem:[%s577 + $0x108] sm:$0xff] %v3569
        %3634 = vst [vmem:[%s577 + $0x110] sm:$0xff] %v3570
        %3635 = vst [vmem:[%s577 + $0x118] sm:$0xff] %v3571
        %3636 = vst [vmem:[%s577 + $0x120] sm:$0xff] %v3572
        %3637 = vst [vmem:[%s577 + $0x128] sm:$0xff] %v3573
        %3638 = vst [vmem:[%s577 + $0x130] sm:$0xff] %v3574
        %3639 = vst [vmem:[%s577 + $0x138] sm:$0xff] %v3575
        %3640 = vst [vmem:[%s577 + $0x140] sm:$0xff] %v3576
        %3641 = vst [vmem:[%s577 + $0x148] sm:$0xff] %v3577
        %3642 = vst [vmem:[%s577 + $0x150] sm:$0xff] %v3578
        %3643 = vst [vmem:[%s577 + $0x158] sm:$0xff] %v3579
        %3644 = vst [vmem:[%s577 + $0x160] sm:$0xff] %v3580
        %3645 = vst [vmem:[%s577 + $0x168] sm:$0xff] %v3581
        %3646 = vst [vmem:[%s577 + $0x170] sm:$0xff] %v3582
        %3647 = vst [vmem:[%s577 + $0x178] sm:$0xff] %v3583
        %3648 = vst [vmem:[%s577 + $0x180] sm:$0xff] %v3584
        %3649 = vst [vmem:[%s577 + $0x188] sm:$0xff] %v3585
        %3650 = vst [vmem:[%s577 + $0x190] sm:$0xff] %v3586
        %3651 = vst [vmem:[%s577 + $0x198] sm:$0xff] %v3587
        %3652 = vst [vmem:[%s577 + $0x1a0] sm:$0xff] %v3588
        %3653 = vst [vmem:[%s577 + $0x1a8] sm:$0xff] %v3589
        %3654 = vst [vmem:[%s577 + $0x1b0] sm:$0xff] %v3590
        %3655 = vst [vmem:[%s577 + $0x1b8] sm:$0xff] %v3591
        %3656 = vst [vmem:[%s577 + $0x1c0] sm:$0xff] %v3592
        %3657 = vst [vmem:[%s577 + $0x1c8] sm:$0xff] %v3593
        %3658 = vst [vmem:[%s577 + $0x1d0] sm:$0xff] %v3594
        %3659 = vst [vmem:[%s577 + $0x1d8] sm:$0xff] %v3595
        %3660 = vst [vmem:[%s577 + $0x1e0] sm:$0xff] %v3596
        %3661 = vst [vmem:[%s577 + $0x1e8] sm:$0xff] %v3597
        %3662 = vst [vmem:[%s577 + $0x1f0] sm:$0xff] %v3598
        %3663 = vst [vmem:[%s577 + $0x1f8] sm:$0xff] %v3599
        %s3664 = sand.u32 %s282, 1
        %s3665 = scalar_lea.sflag [#allocation4], %s3664
        %s3666 = sand.u32 %s282, 1
        %s3667 = smul.addr %s3666, 512
        %s3668 = scalar_lea.vmem [#allocation16], %s3667
        %s3669 = sand.u32 %s38, 1
        %s3670 = scalar_lea.sflag [#allocation18], %s3669
        %s3671 = sand.u32 %s308, 1
        %s3672 = smul.addr %s3671, 128
        %s3673 = scalar_lea.vmem [#allocation17], %s3672
        %s3674 = sand.u32 %s38, 1
        %s3675 = scalar_lea.sflag [#allocation18], %s3674
        %s3676 = sand.u32 %s334, 1
        %s3677 = smul.addr %s3676, 128
        %s3678 = scalar_lea.vmem [#allocation19], %s3677
        // Predicated region
        $region97: #{tpu_custom_call.1} parent=63 // pred_check
          %p3679 = pneg %p292
        $region98: #{tpu_custom_call.1} parent=63 // pred_check_branch
          %3681 = sbr.rel (%p3679) target = $region100
        $region99: #{tpu_custom_call.1} parent=63 // pred_region
          %s3682 = smul.u32 16, %s38
          %3684 = vsyncadd %s3665, 0
          %s3685 = smul.addr %s3682, 4
          %s3686 = smul.addr %s3685, 8
          %s3687 = scalar_lea.hbm %s11, %s3686
          %s3688 = sshll.u32 %s3668, 4
          %s3689 = int_to_ptr.vmem [resolvable:$true] %s3688
          %s3690 = sshll.u32 %s3687, 4
          %s3691 = int_to_ptr.hbm [resolvable:$true] %s3690
          %3696 = dma.vmem_to_hbm [thread:$0]  %s3689, 8192, %s3691, %s3665, 512, 512, 32
        $region100: #{tpu_custom_call.1} parent=63 // pred_fallthru
          _
        // Predicated region
        $region101: #{tpu_custom_call.1} parent=63 // pred_check
          %p3697 = pneg %p318
        $region102: #{tpu_custom_call.1} parent=63 // pred_check_branch
          %3699 = sbr.rel (%p3697) target = $region104
        $region103: #{tpu_custom_call.1} parent=63 // pred_region
          %s3700 = smul.u32 16, %s38
          %3702 = vsyncadd %s3670, 0
          %s3703 = smul.addr %s3700, 8
          %s3704 = scalar_lea.hbm %s12, %s3703
          %s3705 = sshll.u32 %s3673, 4
          %s3706 = int_to_ptr.vmem [resolvable:$true] %s3705
          %s3707 = sshll.u32 %s3704, 4
          %s3708 = int_to_ptr.hbm [resolvable:$true] %s3707
          %3713 = dma.vmem_to_hbm [thread:$0]  %s3706, 2048, %s3708, %s3670, 128, 128, 8
        $region104: #{tpu_custom_call.1} parent=63 // pred_fallthru
          _
        // Predicated region
        $region105: #{tpu_custom_call.1} parent=63 // pred_check
          %p3714 = pneg %p344
        $region106: #{tpu_custom_call.1} parent=63 // pred_check_branch
          %3716 = sbr.rel (%p3714) target = $region108
        $region107: #{tpu_custom_call.1} parent=63 // pred_region
          %s3717 = smul.u32 16, %s38
          %3719 = vsyncadd %s3675, 0
          %s3720 = smul.addr %s3717, 8
          %s3721 = scalar_lea.hbm %s13, %s3720
          %s3722 = sshll.u32 %s3678, 4
          %s3723 = int_to_ptr.vmem [resolvable:$true] %s3722
          %s3724 = sshll.u32 %s3721, 4
          %s3725 = int_to_ptr.hbm [resolvable:$true] %s3724
          %3730 = dma.vmem_to_hbm [thread:$0]  %s3723, 2048, %s3725, %s3675, 128, 128, 8
        $region108: #{tpu_custom_call.1} parent=63 // pred_fallthru
          _
      $region64: #{tpu_custom_call.1} parent=5 // pred_fallthru
        _
      %p3731 = scmp.le.s32.totalorder 2, %s33
      // Predicated region
      $region109: #{tpu_custom_call.1} parent=5 // pred_check
        %p3732 = pneg %p3731
      $region110: #{tpu_custom_call.1} parent=5 // pred_check_branch
        %3734 = sbr.rel (%p3732) target = $region112
      $region111: #{tpu_custom_call.1} parent=5 // pred_region
        %s3735 = ssub.s32 %s33, 2
        // Predicated region
        $region113: #{tpu_custom_call.1} parent=111 // pred_check
          %p3736 = pneg %p298
        $region114: #{tpu_custom_call.1} parent=111 // pred_check_branch
          %3738 = sbr.rel (%p3736) target = $region116
        $region115: #{tpu_custom_call.1} parent=111 // pred_region
          %s3739 = sand.u32 %s283, 1
          %s3740 = scalar_lea.sflag [#allocation4], %s3739
          %s3741 = sand.u32 %s283, 1
          %s3742 = smul.addr %s3741, 512
          %s3743 = scalar_lea.vmem [#allocation16], %s3742
          %3745 = dma.done %s3740, 8192
        $region116: #{tpu_custom_call.1} parent=111 // pred_fallthru
          _
        // Predicated region
        $region117: #{tpu_custom_call.1} parent=111 // pred_check
          %p3746 = pneg %p324
        $region118: #{tpu_custom_call.1} parent=111 // pred_check_branch
          %3748 = sbr.rel (%p3746) target = $region120
        $region119: #{tpu_custom_call.1} parent=111 // pred_region
          %s3749 = sand.u32 %s39, 1
          %s3750 = scalar_lea.sflag [#allocation18], %s3749
          %s3751 = sand.u32 %s309, 1
          %s3752 = smul.addr %s3751, 128
          %s3753 = scalar_lea.vmem [#allocation17], %s3752
          %3755 = dma.done %s3750, 2048
        $region120: #{tpu_custom_call.1} parent=111 // pred_fallthru
          _
        // Predicated region
        $region121: #{tpu_custom_call.1} parent=111 // pred_check
          %p3756 = pneg %p350
        $region122: #{tpu_custom_call.1} parent=111 // pred_check_branch
          %3758 = sbr.rel (%p3756) target = $region124
        $region123: #{tpu_custom_call.1} parent=111 // pred_region
          %s3759 = sand.u32 %s39, 1
          %s3760 = scalar_lea.sflag [#allocation18], %s3759
          %s3761 = sand.u32 %s335, 1
          %s3762 = smul.addr %s3761, 128
          %s3763 = scalar_lea.vmem [#allocation19], %s3762
          %3765 = dma.done %s3760, 2048
        $region124: #{tpu_custom_call.1} parent=111 // pred_fallthru
          _
      $region112: #{tpu_custom_call.1} parent=5 // pred_fallthru
        _
    $region6: #{tpu_custom_call.1} parent=1 // loop_footer
      %s37 = sadd.s32 1, %s33
    $region7: #{tpu_custom_call.1} parent=1 // loop_footer_branch
      %32 = sbr.rel target = $region3
    $region8: #{tpu_custom_call.1} parent=1 // loop_exit
      _
    %3766 = vsyncpa [#allocation3], 1
    %s3767 = scalar_lea.sflag [#allocation3], 1
    %3768 = vsyncpa %s3767, 1
    %3769 = vsyncpa [#allocation6], 1
    %3770 = vsyncpa [#allocation9], 1
    %3771 = vsyncpa [#allocation12], 1
    %3772 = vsyncpa [#allocation15], 1
    %3773 = vsyncpa [#allocation4], 1
    %s3774 = scalar_lea.sflag [#allocation4], 1
    %3775 = vsyncpa %s3774, 1
    %3776 = vsyncpa [#allocation18], 1
    %s3777 = scalar_lea.sflag [#allocation18], 1
    %3778 = vsyncpa %s3777, 1

</llo_original>
